<compile_context>
chip_gen: v6e
topology: v6e:2x2x1
jax: 0.10.0
libtpu: 0.0.40
codegen_flags: <defaults>
</compile_context>

<pallas_src>
import jax
import jax.numpy as jnp
from jax.experimental import pallas as pl
from jax.experimental.pallas import tpu as pltpu

# ----- scaled-down ViT-B/16-style config -----
IMG = 16          # image spatial size
PATCH = 8         # patch size (kernel = stride)
CIN = 3           # input channels
D = 32            # hidden dim
HEADS = 4
DH = D // HEADS   # head dim (= 8, one sublane tile)
MLP = 64          # mlp hidden dim
LAYERS = 2        # encoder depth
CLASSES = 4       # nn.Linear(in_features, num_classes=4)
B = 2             # batch
NP_ = (IMG // PATCH) ** 2     # number of patches
S = NP_ + 1                   # sequence length (cls + patches)
CPP = CIN * PATCH * PATCH     # flattened patch size
EPS = 1e-6                    # torchvision ViT LayerNorm eps


# -------------------- in-kernel helpers --------------------
def _layernorm(x, w, b):
    mu = jnp.mean(x, axis=-1, keepdims=True)
    var = jnp.mean((x - mu) ** 2, axis=-1, keepdims=True)
    return (x - mu) * jax.lax.rsqrt(var + EPS) * w + b


def _gelu_exact(x):
    # nn.GELU(approximate='none'): 0.5 * x * (1 + erf(x / sqrt(2)))
    return 0.5 * x * (1.0 + jax.lax.erf(x * jnp.float32(0.7071067811865476)))


# -------------------- fused per-sample kernel --------------------
def _vit_kernel(patch_ref, conv_ref, wqkv_ref, wo_ref, lnp_ref,
                w1_ref, w2_ref, head_ref, out_ref):
    # ---- patch embedding (row 0 of the patch slab is zero, so the cls row comes
    #      entirely from the additive term; rows 1.. get conv_b + pos folded in) ----
    x = (jnp.dot(patch_ref[0], conv_ref[0:CPP, :],
                 preferred_element_type=jnp.float32)
         + conv_ref[CPP:CPP + S, :])                                    # (S, D)

    # TODO(synk): at real ViT-B scale, stream the per-layer weights over an "arbitrary"
    # grid axis (double-buffered BlockSpecs, raised vmem_limit_bytes) and switch this
    # python unroll to lax.fori_loop over the stacked (LAYERS, ...) slabs.
    for l in range(LAYERS):
        # ---- multi-head self-attention ----
        h = _layernorm(x, lnp_ref[2 * l, 0], lnp_ref[2 * l, 1])
        attn = None
        for hh in range(HEADS):
            def _proj(idx):
                # per-head weight columns: slice happens on the weight ref (static,
                # sublane-aligned), never on the activation's lane axis.
                w = wqkv_ref[l, idx, 0:D, :]            # (D, DH)
                bias = wqkv_ref[l, idx, D:D + 1, :]     # (1, DH)
                return jnp.dot(h, w, preferred_element_type=jnp.float32) + bias

            q = _proj(hh)              # 1/sqrt(DH) pre-folded into q weights & bias
            k = _proj(HEADS + hh)
            v = _proj(2 * HEADS + hh)

            s = jax.lax.dot_general(q, k, (((1,), (1,)), ((), ())),
                                    preferred_element_type=jnp.float32)   # (S, S)
            s = s - jnp.max(s, axis=-1, keepdims=True)
            e = jnp.exp(s)
            p = e * pl.reciprocal(jnp.sum(e, axis=-1, keepdims=True), approx=True)
            o = jnp.dot(p, v, preferred_element_type=jnp.float32)         # (S, DH)

            # head output through its sublane-aligned (DH, D) row-slice of Wo; the
            # lane-axis head concat is replaced by accumulation.
            c = jnp.dot(o, wo_ref[l, hh * DH:(hh + 1) * DH, :],
                        preferred_element_type=jnp.float32)               # (S, D)
            attn = c if attn is None else attn + c
        x = x + attn + wo_ref[l, D:D + 1, :]                              # +bo, residual 1

        # ---- MLP ----
        h2 = _layernorm(x, lnp_ref[2 * l + 1, 0], lnp_ref[2 * l + 1, 1])
        m = _gelu_exact(jnp.dot(h2, w1_ref[l, 0:D, :],
                                preferred_element_type=jnp.float32)
                        + w1_ref[l, D:D + 1, :])
        x = (x + jnp.dot(m, w2_ref[l, 0:MLP, :], preferred_element_type=jnp.float32)
             + w2_ref[l, MLP:MLP + 1, :])                                 # residual 2

    # ---- final LN (per-token, so applying only to the cls row is equivalent) + head ----
    cls_tok = x[0:1, :]
    hf = _layernorm(cls_tok, lnp_ref[2 * LAYERS, 0], lnp_ref[2 * LAYERS, 1])
    out_ref[0] = (jnp.dot(hf, head_ref[0:D, :], preferred_element_type=jnp.float32)
                  + head_ref[D:D + 1, :])


# -------------------- glue (plain JAX) --------------------
def patchify_padded(x):
    # x: (B, CIN, IMG, IMG) NCHW -> (B, S, CPP); row 0 per sample is zeros (cls slot),
    # rows 1.. are patches flattened as (c, kh, kw) like PyTorch Conv2d.
    g = IMG // PATCH
    xp = x.reshape(B, CIN, g, PATCH, g, PATCH).transpose(0, 2, 4, 1, 3, 5)
    patches = xp.reshape(B, NP_, CPP)
    return jnp.concatenate([jnp.zeros((B, 1, CPP), x.dtype), patches], axis=1)


def tiny_vit_forward(packed, x):
    patches = patchify_padded(x)                      # (B, S, CPP)
    out = pl.pallas_call(
        _vit_kernel,
        out_shape=jax.ShapeDtypeStruct((B, 1, CLASSES), jnp.float32),
        grid=(B,),
        in_specs=[
            pl.BlockSpec((1, S, CPP), lambda b: (b, 0, 0)),                       # per-sample patches
            pl.BlockSpec((CPP + S, D), lambda b: (0, 0)),                         # conv_w + additive rows
            pl.BlockSpec((LAYERS, 3 * HEADS, D + 1, DH), lambda b: (0, 0, 0, 0)), # per-head Wqkv (+bias row)
            pl.BlockSpec((LAYERS, D + 1, D), lambda b: (0, 0, 0)),                # Wo (+bias row)
            pl.BlockSpec((2 * LAYERS + 1, 2, 1, D), lambda b: (0, 0, 0, 0)),      # all LN gammas/betas
            pl.BlockSpec((LAYERS, D + 1, MLP), lambda b: (0, 0, 0)),              # W1 (+bias row)
            pl.BlockSpec((LAYERS, MLP + 1, D), lambda b: (0, 0, 0)),              # W2 (+bias row)
            pl.BlockSpec((D + 1, CLASSES), lambda b: (0, 0)),                     # head (+bias row)
        ],
        out_specs=pl.BlockSpec((1, 1, CLASSES), lambda b: (b, 0, 0)),
        compiler_params=pltpu.CompilerParams(dimension_semantics=("parallel",)),
    )(patches, packed["conv"], packed["wqkv"], packed["wo"], packed["lnp"],
      packed["w1"], packed["w2"], packed["head"])
    return out[:, 0, :]


# -------------------- parameter packing (PyTorch layouts -> kernel slabs) --------------------
def pack_params(p):
    # conv slab: rows [0:CPP] conv weight (CPP, D); rows [CPP:CPP+S] the additive term:
    #   row 0 = cls + pos[0];  row i>0 = conv_b + pos[i]
    conv_w = p["conv_w"].reshape(D, CPP).T                                  # (CPP, D)
    add = jnp.concatenate([p["cls"] + p["pos"][0:1],
                           p["conv_b"][None, :] + p["pos"][1:]], axis=0)    # (S, D)
    conv_slab = jnp.concatenate([conv_w, add], axis=0)                      # (CPP+S, D)

    scale = 1.0 / (DH ** 0.5)
    wqkv, wo, w1s, w2s, lnp = [], [], [], [], []
    for lp in p["layers"]:
        ipw, ipb = lp["in_proj_weight"], lp["in_proj_bias"]                 # (3D,D), (3D,)
        heads_wb = []
        for qkv_i in range(3):                       # order: q heads, k heads, v heads
            Wm = ipw[qkv_i * D:(qkv_i + 1) * D, :]
            bm = ipb[qkv_i * D:(qkv_i + 1) * D]
            if qkv_i == 0:                           # fold 1/sqrt(DH) into q
                Wm = Wm * scale
                bm = bm * scale
            for hh in range(HEADS):
                wh = Wm[hh * DH:(hh + 1) * DH, :].T                  # (D, DH)
                bh = bm[hh * DH:(hh + 1) * DH][None, :]              # (1, DH)
                heads_wb.append(jnp.concatenate([wh, bh], axis=0))   # (D+1, DH)
        wqkv.append(jnp.stack(heads_wb, axis=0))                     # (3H, D+1, DH)

        wo.append(jnp.concatenate([lp["out_proj_weight"].T,
                                   lp["out_proj_bias"][None, :]], axis=0))   # (D+1, D)
        w1s.append(jnp.concatenate([lp["mlp_w1"].T, lp["mlp_b1"][None, :]], axis=0))  # (D+1, MLP)
        w2s.append(jnp.concatenate([lp["mlp_w2"].T, lp["mlp_b2"][None, :]], axis=0))  # (MLP+1, D)
        lnp.append(jnp.stack([lp["ln1_w"], lp["ln1_b"]], axis=0)[:, None, :])         # (2,1,D)
        lnp.append(jnp.stack([lp["ln2_w"], lp["ln2_b"]], axis=0)[:, None, :])
    lnp.append(jnp.stack([p["ln_w"], p["ln_b"]], axis=0)[:, None, :])                 # final LN

    head = jnp.concatenate([p["head_w"].T, p["head_b"][None, :]], axis=0)   # (D+1, CLASSES)

    return {
        "conv": conv_slab,
        "wqkv": jnp.stack(wqkv, axis=0),     # (LAYERS, 3H, D+1, DH)
        "wo": jnp.stack(wo, axis=0),         # (LAYERS, D+1, D)
        "lnp": jnp.stack(lnp, axis=0),       # (2L+1, 2, 1, D)
        "w1": jnp.stack(w1s, axis=0),        # (LAYERS, D+1, MLP)
        "w2": jnp.stack(w2s, axis=0),        # (LAYERS, MLP+1, D)
        "head": head,                        # (D+1, CLASSES)
    }


# -------------------- deterministic parameter init (PyTorch layouts) --------------------
def init_params(key):
    ks = iter(jax.random.split(key, 64))

    def nrm(shape, scale=0.02):
        return scale * jax.random.normal(next(ks), shape, jnp.float32)

    params = {
        "conv_w": nrm((D, CIN, PATCH, PATCH)),     # Conv2d weight layout
        "conv_b": nrm((D,)),
        "cls": nrm((1, D)),
        "pos": nrm((S, D)),
        "layers": [],
        "ln_w": jnp.ones((D,), jnp.float32),
        "ln_b": jnp.zeros((D,), jnp.float32),
        "head_w": nrm((CLASSES, D)),               # Linear weight layout
        "head_b": nrm((CLASSES,)),
    }
    for _ in range(LAYERS):
        params["layers"].append({
            "ln1_w": jnp.ones((D,), jnp.float32), "ln1_b": jnp.zeros((D,), jnp.float32),
            "in_proj_weight": nrm((3 * D, D)),     # MHA in_proj (q;k;v rows)
            "in_proj_bias": nrm((3 * D,)),
            "out_proj_weight": nrm((D, D)),
            "out_proj_bias": nrm((D,)),
            "ln2_w": jnp.ones((D,), jnp.float32), "ln2_b": jnp.zeros((D,), jnp.float32),
            "mlp_w1": nrm((MLP, D)), "mlp_b1": nrm((MLP,)),
            "mlp_w2": nrm((D, MLP)), "mlp_b2": nrm((D,)),
        })
    return params


if __name__ == "__main__":
    key = jax.random.PRNGKey(0)
    kx, kp = jax.random.split(key)
    x = jax.random.normal(kx, (B, CIN, IMG, IMG), jnp.float32)   # NCHW like PyTorch
    params = init_params(kp)
    packed = pack_params(params)                                 # packed once, outside jit

    fwd = jax.jit(tiny_vit_forward)
    out = fwd(packed, x)
    jax.block_until_ready(out)
    assert out.shape == (B, CLASSES) and out.dtype == jnp.float32
    print("KERNEL_OK")
</pallas_src>

<mosaic_0001>
module attributes {stable_mosaic.version = 11 : i64} {
  func.func @_vit_kernel(%arg0: i32, %arg1: memref<1x5x192xf32, #tpu.memory_space<vmem>>, %arg2: memref<197x32xf32, #tpu.memory_space<vmem>>, %arg3: memref<2x12x33x8xf32, #tpu.memory_space<vmem>>, %arg4: memref<2x33x32xf32, #tpu.memory_space<vmem>>, %arg5: memref<5x2x1x32xf32, #tpu.memory_space<vmem>>, %arg6: memref<2x33x64xf32, #tpu.memory_space<vmem>>, %arg7: memref<2x65x32xf32, #tpu.memory_space<vmem>>, %arg8: memref<33x4xf32, #tpu.memory_space<vmem>>, %arg9: memref<1x1x4xf32, #tpu.memory_space<vmem>>) attributes {dimension_semantics = [#tpu.dimension_semantics<parallel>], iteration_bounds = array<i64: 2>, scalar_prefetch = 0 : i64, scratch_operands = 0 : i64, tpu.core_type = #tpu.core_type<tc>, window_params = [{transform_indices = @transform_0, window_bounds = array<i64: 1, 5, 192>}, {pipeline_mode = #tpu.pipeline_mode<synchronous>, transform_indices = @transform_1, window_bounds = array<i64: 197, 32>}, {pipeline_mode = #tpu.pipeline_mode<synchronous>, transform_indices = @transform_2, window_bounds = array<i64: 2, 12, 33, 8>}, {pipeline_mode = #tpu.pipeline_mode<synchronous>, transform_indices = @transform_3, window_bounds = array<i64: 2, 33, 32>}, {pipeline_mode = #tpu.pipeline_mode<synchronous>, transform_indices = @transform_4, window_bounds = array<i64: 5, 2, 1, 32>}, {pipeline_mode = #tpu.pipeline_mode<synchronous>, transform_indices = @transform_5, window_bounds = array<i64: 2, 33, 64>}, {pipeline_mode = #tpu.pipeline_mode<synchronous>, transform_indices = @transform_6, window_bounds = array<i64: 2, 65, 32>}, {pipeline_mode = #tpu.pipeline_mode<synchronous>, transform_indices = @transform_7, window_bounds = array<i64: 33, 4>}, {transform_indices = @transform_8, window_bounds = array<i64: 1, 1, 4>}]} {
    %c0 = arith.constant 0 : index
    %c0_0 = arith.constant 0 : index
    %c0_1 = arith.constant 0 : index
    %0 = vector.load %arg1[%c0, %c0_0, %c0_1] : memref<1x5x192xf32, #tpu.memory_space<vmem>>, vector<1x5x192xf32>
    %1 = vector.shape_cast %0 : vector<1x5x192xf32> to vector<5x192xf32>
    %c0_2 = arith.constant 0 : index
    %c0_3 = arith.constant 0 : index
    %2 = vector.load %arg2[%c0_2, %c0_3] : memref<197x32xf32, #tpu.memory_space<vmem>>, vector<192x32xf32>
    %cst = arith.constant dense<0.000000e+00> : vector<5x32xf32>
    %3 = tpu.matmul %1, %2, %cst {dimension_numbers = #tpu.dot_dimension_numbers<[1], [0], [0], [1], [0, 0, 1, 1], [], []>} : vector<5x192xf32>, vector<192x32xf32>, vector<5x32xf32> -> vector<5x32xf32>
    %c192 = arith.constant 192 : index
    %c0_4 = arith.constant 0 : index
    %4 = vector.load %arg2[%c192, %c0_4] : memref<197x32xf32, #tpu.memory_space<vmem>>, vector<5x32xf32>
    %5 = arith.addf %3, %4 : vector<5x32xf32>
    %c0_5 = arith.constant 0 : index
    %c0_6 = arith.constant 0 : index
    %c0_7 = arith.constant 0 : index
    %c0_8 = arith.constant 0 : index
    %6 = vector.load %arg5[%c0_5, %c0_6, %c0_7, %c0_8] : memref<5x2x1x32xf32, #tpu.memory_space<vmem>>, vector<1x1x1x32xf32>
    %7 = vector.shape_cast %6 : vector<1x1x1x32xf32> to vector<1x32xf32>
    %c0_9 = arith.constant 0 : index
    %c1 = arith.constant 1 : index
    %c0_10 = arith.constant 0 : index
    %c0_11 = arith.constant 0 : index
    %8 = vector.load %arg5[%c0_9, %c1, %c0_10, %c0_11] : memref<5x2x1x32xf32, #tpu.memory_space<vmem>>, vector<1x1x1x32xf32>
    %9 = vector.shape_cast %8 : vector<1x1x1x32xf32> to vector<1x32xf32>
    %cst_12 = arith.constant dense<0.000000e+00> : vector<5xf32>
    %10 = vector.multi_reduction <add>, %5, %cst_12 [1] : vector<5x32xf32> to vector<5xf32>
    %11 = vector.shape_cast %10 : vector<5xf32> to vector<5x1xf32>
    %cst_13 = arith.constant 3.200000e+01 : f32
    %12 = vector.broadcast %cst_13 : f32 to vector<5x1xf32>
    %13 = arith.divf %11, %12 : vector<5x1xf32>
    %14 = vector.broadcast %13 : vector<5x1xf32> to vector<5x32xf32>
    %15 = arith.subf %5, %14 : vector<5x32xf32>
    %16 = arith.mulf %15, %15 : vector<5x32xf32>
    %cst_14 = arith.constant dense<0.000000e+00> : vector<5xf32>
    %17 = vector.multi_reduction <add>, %16, %cst_14 [1] : vector<5x32xf32> to vector<5xf32>
    %18 = vector.shape_cast %17 : vector<5xf32> to vector<5x1xf32>
    %cst_15 = arith.constant 3.200000e+01 : f32
    %19 = vector.broadcast %cst_15 : f32 to vector<5x1xf32>
    %20 = arith.divf %18, %19 : vector<5x1xf32>
    %21 = vector.broadcast %13 : vector<5x1xf32> to vector<5x32xf32>
    %22 = arith.subf %5, %21 : vector<5x32xf32>
    %cst_16 = arith.constant 9.99999997E-7 : f32
    %23 = vector.broadcast %cst_16 : f32 to vector<5x1xf32>
    %24 = arith.addf %20, %23 : vector<5x1xf32>
    %25 = math.rsqrt %24 : vector<5x1xf32>
    %26 = vector.broadcast %25 : vector<5x1xf32> to vector<5x32xf32>
    %27 = arith.mulf %22, %26 : vector<5x32xf32>
    %28 = vector.broadcast %7 : vector<1x32xf32> to vector<5x32xf32>
    %29 = arith.mulf %27, %28 : vector<5x32xf32>
    %30 = vector.broadcast %9 : vector<1x32xf32> to vector<5x32xf32>
    %31 = arith.addf %29, %30 : vector<5x32xf32>
    %c0_17 = arith.constant 0 : index
    %c0_18 = arith.constant 0 : index
    %c0_19 = arith.constant 0 : index
    %c0_20 = arith.constant 0 : index
    %32 = vector.load %arg3[%c0_17, %c0_18, %c0_19, %c0_20] : memref<2x12x33x8xf32, #tpu.memory_space<vmem>>, vector<1x1x32x8xf32>
    %33 = vector.shape_cast %32 : vector<1x1x32x8xf32> to vector<32x8xf32>
    %c0_21 = arith.constant 0 : index
    %c0_22 = arith.constant 0 : index
    %c32 = arith.constant 32 : index
    %c0_23 = arith.constant 0 : index
    %34 = vector.load %arg3[%c0_21, %c0_22, %c32, %c0_23] : memref<2x12x33x8xf32, #tpu.memory_space<vmem>>, vector<1x1x1x8xf32>
    %35 = vector.shape_cast %34 : vector<1x1x1x8xf32> to vector<1x8xf32>
    %cst_24 = arith.constant dense<0.000000e+00> : vector<5x8xf32>
    %36 = tpu.matmul %31, %33, %cst_24 {dimension_numbers = #tpu.dot_dimension_numbers<[1], [0], [0], [1], [0, 0, 1, 1], [], []>} : vector<5x32xf32>, vector<32x8xf32>, vector<5x8xf32> -> vector<5x8xf32>
    %37 = vector.broadcast %35 : vector<1x8xf32> to vector<5x8xf32>
    %38 = arith.addf %36, %37 : vector<5x8xf32>
    %c0_25 = arith.constant 0 : index
    %c4 = arith.constant 4 : index
    %c0_26 = arith.constant 0 : index
    %c0_27 = arith.constant 0 : index
    %39 = vector.load %arg3[%c0_25, %c4, %c0_26, %c0_27] : memref<2x12x33x8xf32, #tpu.memory_space<vmem>>, vector<1x1x32x8xf32>
    %40 = vector.shape_cast %39 : vector<1x1x32x8xf32> to vector<32x8xf32>
    %c0_28 = arith.constant 0 : index
    %c4_29 = arith.constant 4 : index
    %c32_30 = arith.constant 32 : index
    %c0_31 = arith.constant 0 : index
    %41 = vector.load %arg3[%c0_28, %c4_29, %c32_30, %c0_31] : memref<2x12x33x8xf32, #tpu.memory_space<vmem>>, vector<1x1x1x8xf32>
    %42 = vector.shape_cast %41 : vector<1x1x1x8xf32> to vector<1x8xf32>
    %cst_32 = arith.constant dense<0.000000e+00> : vector<5x8xf32>
    %43 = tpu.matmul %31, %40, %cst_32 {dimension_numbers = #tpu.dot_dimension_numbers<[1], [0], [0], [1], [0, 0, 1, 1], [], []>} : vector<5x32xf32>, vector<32x8xf32>, vector<5x8xf32> -> vector<5x8xf32>
    %44 = vector.broadcast %42 : vector<1x8xf32> to vector<5x8xf32>
    %45 = arith.addf %43, %44 : vector<5x8xf32>
    %c0_33 = arith.constant 0 : index
    %c8 = arith.constant 8 : index
    %c0_34 = arith.constant 0 : index
    %c0_35 = arith.constant 0 : index
    %46 = vector.load %arg3[%c0_33, %c8, %c0_34, %c0_35] : memref<2x12x33x8xf32, #tpu.memory_space<vmem>>, vector<1x1x32x8xf32>
    %47 = vector.shape_cast %46 : vector<1x1x32x8xf32> to vector<32x8xf32>
    %c0_36 = arith.constant 0 : index
    %c8_37 = arith.constant 8 : index
    %c32_38 = arith.constant 32 : index
    %c0_39 = arith.constant 0 : index
    %48 = vector.load %arg3[%c0_36, %c8_37, %c32_38, %c0_39] : memref<2x12x33x8xf32, #tpu.memory_space<vmem>>, vector<1x1x1x8xf32>
    %49 = vector.shape_cast %48 : vector<1x1x1x8xf32> to vector<1x8xf32>
    %cst_40 = arith.constant dense<0.000000e+00> : vector<5x8xf32>
    %50 = tpu.matmul %31, %47, %cst_40 {dimension_numbers = #tpu.dot_dimension_numbers<[1], [0], [0], [1], [0, 0, 1, 1], [], []>} : vector<5x32xf32>, vector<32x8xf32>, vector<5x8xf32> -> vector<5x8xf32>
    %51 = vector.broadcast %49 : vector<1x8xf32> to vector<5x8xf32>
    %52 = arith.addf %50, %51 : vector<5x8xf32>
    %cst_41 = arith.constant dense<0.000000e+00> : vector<5x5xf32>
    %53 = tpu.matmul %38, %45, %cst_41 {dimension_numbers = #tpu.dot_dimension_numbers<[1], [1], [0], [0], [0, 0, 1, 0], [], []>} : vector<5x8xf32>, vector<5x8xf32>, vector<5x5xf32> -> vector<5x5xf32>
    %cst_42 = arith.constant dense<0xFF800000> : vector<5xf32>
    %54 = vector.multi_reduction <maximumf>, %53, %cst_42 [1] : vector<5x5xf32> to vector<5xf32>
    %55 = vector.shape_cast %54 : vector<5xf32> to vector<5x1xf32>
    %56 = vector.broadcast %55 : vector<5x1xf32> to vector<5x5xf32>
    %57 = arith.subf %53, %56 : vector<5x5xf32>
    %58 = math.exp %57 : vector<5x5xf32>
    %cst_43 = arith.constant dense<0.000000e+00> : vector<5xf32>
    %59 = vector.multi_reduction <add>, %58, %cst_43 [1] : vector<5x5xf32> to vector<5xf32>
    %60 = vector.shape_cast %59 : vector<5xf32> to vector<5x1xf32>
    %61 = tpu.reciprocal %60 {approx = true} : vector<5x1xf32> -> vector<5x1xf32>
    %62 = vector.broadcast %61 : vector<5x1xf32> to vector<5x5xf32>
    %63 = arith.mulf %58, %62 : vector<5x5xf32>
    %cst_44 = arith.constant dense<0.000000e+00> : vector<5x8xf32>
    %64 = tpu.matmul %63, %52, %cst_44 {dimension_numbers = #tpu.dot_dimension_numbers<[1], [0], [0], [1], [0, 0, 1, 1], [], []>} : vector<5x5xf32>, vector<5x8xf32>, vector<5x8xf32> -> vector<5x8xf32>
    %c0_45 = arith.constant 0 : index
    %c0_46 = arith.constant 0 : index
    %c0_47 = arith.constant 0 : index
    %65 = vector.load %arg4[%c0_45, %c0_46, %c0_47] : memref<2x33x32xf32, #tpu.memory_space<vmem>>, vector<1x8x32xf32>
    %66 = vector.shape_cast %65 : vector<1x8x32xf32> to vector<8x32xf32>
    %cst_48 = arith.constant dense<0.000000e+00> : vector<5x32xf32>
    %67 = tpu.matmul %64, %66, %cst_48 {dimension_numbers = #tpu.dot_dimension_numbers<[1], [0], [0], [1], [0, 0, 1, 1], [], []>} : vector<5x8xf32>, vector<8x32xf32>, vector<5x32xf32> -> vector<5x32xf32>
    %c0_49 = arith.constant 0 : index
    %c1_50 = arith.constant 1 : index
    %c0_51 = arith.constant 0 : index
    %c0_52 = arith.constant 0 : index
    %68 = vector.load %arg3[%c0_49, %c1_50, %c0_51, %c0_52] : memref<2x12x33x8xf32, #tpu.memory_space<vmem>>, vector<1x1x32x8xf32>
    %69 = vector.shape_cast %68 : vector<1x1x32x8xf32> to vector<32x8xf32>
    %c0_53 = arith.constant 0 : index
    %c1_54 = arith.constant 1 : index
    %c32_55 = arith.constant 32 : index
    %c0_56 = arith.constant 0 : index
    %70 = vector.load %arg3[%c0_53, %c1_54, %c32_55, %c0_56] : memref<2x12x33x8xf32, #tpu.memory_space<vmem>>, vector<1x1x1x8xf32>
    %71 = vector.shape_cast %70 : vector<1x1x1x8xf32> to vector<1x8xf32>
    %cst_57 = arith.constant dense<0.000000e+00> : vector<5x8xf32>
    %72 = tpu.matmul %31, %69, %cst_57 {dimension_numbers = #tpu.dot_dimension_numbers<[1], [0], [0], [1], [0, 0, 1, 1], [], []>} : vector<5x32xf32>, vector<32x8xf32>, vector<5x8xf32> -> vector<5x8xf32>
    %73 = vector.broadcast %71 : vector<1x8xf32> to vector<5x8xf32>
    %74 = arith.addf %72, %73 : vector<5x8xf32>
    %c0_58 = arith.constant 0 : index
    %c5 = arith.constant 5 : index
    %c0_59 = arith.constant 0 : index
    %c0_60 = arith.constant 0 : index
    %75 = vector.load %arg3[%c0_58, %c5, %c0_59, %c0_60] : memref<2x12x33x8xf32, #tpu.memory_space<vmem>>, vector<1x1x32x8xf32>
    %76 = vector.shape_cast %75 : vector<1x1x32x8xf32> to vector<32x8xf32>
    %c0_61 = arith.constant 0 : index
    %c5_62 = arith.constant 5 : index
    %c32_63 = arith.constant 32 : index
    %c0_64 = arith.constant 0 : index
    %77 = vector.load %arg3[%c0_61, %c5_62, %c32_63, %c0_64] : memref<2x12x33x8xf32, #tpu.memory_space<vmem>>, vector<1x1x1x8xf32>
    %78 = vector.shape_cast %77 : vector<1x1x1x8xf32> to vector<1x8xf32>
    %cst_65 = arith.constant dense<0.000000e+00> : vector<5x8xf32>
    %79 = tpu.matmul %31, %76, %cst_65 {dimension_numbers = #tpu.dot_dimension_numbers<[1], [0], [0], [1], [0, 0, 1, 1], [], []>} : vector<5x32xf32>, vector<32x8xf32>, vector<5x8xf32> -> vector<5x8xf32>
    %80 = vector.broadcast %78 : vector<1x8xf32> to vector<5x8xf32>
    %81 = arith.addf %79, %80 : vector<5x8xf32>
    %c0_66 = arith.constant 0 : index
    %c9 = arith.constant 9 : index
    %c0_67 = arith.constant 0 : index
    %c0_68 = arith.constant 0 : index
    %82 = vector.load %arg3[%c0_66, %c9, %c0_67, %c0_68] : memref<2x12x33x8xf32, #tpu.memory_space<vmem>>, vector<1x1x32x8xf32>
    %83 = vector.shape_cast %82 : vector<1x1x32x8xf32> to vector<32x8xf32>
    %c0_69 = arith.constant 0 : index
    %c9_70 = arith.constant 9 : index
    %c32_71 = arith.constant 32 : index
    %c0_72 = arith.constant 0 : index
    %84 = vector.load %arg3[%c0_69, %c9_70, %c32_71, %c0_72] : memref<2x12x33x8xf32, #tpu.memory_space<vmem>>, vector<1x1x1x8xf32>
    %85 = vector.shape_cast %84 : vector<1x1x1x8xf32> to vector<1x8xf32>
    %cst_73 = arith.constant dense<0.000000e+00> : vector<5x8xf32>
    %86 = tpu.matmul %31, %83, %cst_73 {dimension_numbers = #tpu.dot_dimension_numbers<[1], [0], [0], [1], [0, 0, 1, 1], [], []>} : vector<5x32xf32>, vector<32x8xf32>, vector<5x8xf32> -> vector<5x8xf32>
    %87 = vector.broadcast %85 : vector<1x8xf32> to vector<5x8xf32>
    %88 = arith.addf %86, %87 : vector<5x8xf32>
    %cst_74 = arith.constant dense<0.000000e+00> : vector<5x5xf32>
    %89 = tpu.matmul %74, %81, %cst_74 {dimension_numbers = #tpu.dot_dimension_numbers<[1], [1], [0], [0], [0, 0, 1, 0], [], []>} : vector<5x8xf32>, vector<5x8xf32>, vector<5x5xf32> -> vector<5x5xf32>
    %cst_75 = arith.constant dense<0xFF800000> : vector<5xf32>
    %90 = vector.multi_reduction <maximumf>, %89, %cst_75 [1] : vector<5x5xf32> to vector<5xf32>
    %91 = vector.shape_cast %90 : vector<5xf32> to vector<5x1xf32>
    %92 = vector.broadcast %91 : vector<5x1xf32> to vector<5x5xf32>
    %93 = arith.subf %89, %92 : vector<5x5xf32>
    %94 = math.exp %93 : vector<5x5xf32>
    %cst_76 = arith.constant dense<0.000000e+00> : vector<5xf32>
    %95 = vector.multi_reduction <add>, %94, %cst_76 [1] : vector<5x5xf32> to vector<5xf32>
    %96 = vector.shape_cast %95 : vector<5xf32> to vector<5x1xf32>
    %97 = tpu.reciprocal %96 {approx = true} : vector<5x1xf32> -> vector<5x1xf32>
    %98 = vector.broadcast %97 : vector<5x1xf32> to vector<5x5xf32>
    %99 = arith.mulf %94, %98 : vector<5x5xf32>
    %cst_77 = arith.constant dense<0.000000e+00> : vector<5x8xf32>
    %100 = tpu.matmul %99, %88, %cst_77 {dimension_numbers = #tpu.dot_dimension_numbers<[1], [0], [0], [1], [0, 0, 1, 1], [], []>} : vector<5x5xf32>, vector<5x8xf32>, vector<5x8xf32> -> vector<5x8xf32>
    %c0_78 = arith.constant 0 : index
    %c8_79 = arith.constant 8 : index
    %c0_80 = arith.constant 0 : index
    %101 = vector.load %arg4[%c0_78, %c8_79, %c0_80] : memref<2x33x32xf32, #tpu.memory_space<vmem>>, vector<1x8x32xf32>
    %102 = vector.shape_cast %101 : vector<1x8x32xf32> to vector<8x32xf32>
    %cst_81 = arith.constant dense<0.000000e+00> : vector<5x32xf32>
    %103 = tpu.matmul %100, %102, %cst_81 {dimension_numbers = #tpu.dot_dimension_numbers<[1], [0], [0], [1], [0, 0, 1, 1], [], []>} : vector<5x8xf32>, vector<8x32xf32>, vector<5x32xf32> -> vector<5x32xf32>
    %104 = arith.addf %67, %103 : vector<5x32xf32>
    %c0_82 = arith.constant 0 : index
    %c2 = arith.constant 2 : index
    %c0_83 = arith.constant 0 : index
    %c0_84 = arith.constant 0 : index
    %105 = vector.load %arg3[%c0_82, %c2, %c0_83, %c0_84] : memref<2x12x33x8xf32, #tpu.memory_space<vmem>>, vector<1x1x32x8xf32>
    %106 = vector.shape_cast %105 : vector<1x1x32x8xf32> to vector<32x8xf32>
    %c0_85 = arith.constant 0 : index
    %c2_86 = arith.constant 2 : index
    %c32_87 = arith.constant 32 : index
    %c0_88 = arith.constant 0 : index
    %107 = vector.load %arg3[%c0_85, %c2_86, %c32_87, %c0_88] : memref<2x12x33x8xf32, #tpu.memory_space<vmem>>, vector<1x1x1x8xf32>
    %108 = vector.shape_cast %107 : vector<1x1x1x8xf32> to vector<1x8xf32>
    %cst_89 = arith.constant dense<0.000000e+00> : vector<5x8xf32>
    %109 = tpu.matmul %31, %106, %cst_89 {dimension_numbers = #tpu.dot_dimension_numbers<[1], [0], [0], [1], [0, 0, 1, 1], [], []>} : vector<5x32xf32>, vector<32x8xf32>, vector<5x8xf32> -> vector<5x8xf32>
    %110 = vector.broadcast %108 : vector<1x8xf32> to vector<5x8xf32>
    %111 = arith.addf %109, %110 : vector<5x8xf32>
    %c0_90 = arith.constant 0 : index
    %c6 = arith.constant 6 : index
    %c0_91 = arith.constant 0 : index
    %c0_92 = arith.constant 0 : index
    %112 = vector.load %arg3[%c0_90, %c6, %c0_91, %c0_92] : memref<2x12x33x8xf32, #tpu.memory_space<vmem>>, vector<1x1x32x8xf32>
    %113 = vector.shape_cast %112 : vector<1x1x32x8xf32> to vector<32x8xf32>
    %c0_93 = arith.constant 0 : index
    %c6_94 = arith.constant 6 : index
    %c32_95 = arith.constant 32 : index
    %c0_96 = arith.constant 0 : index
    %114 = vector.load %arg3[%c0_93, %c6_94, %c32_95, %c0_96] : memref<2x12x33x8xf32, #tpu.memory_space<vmem>>, vector<1x1x1x8xf32>
    %115 = vector.shape_cast %114 : vector<1x1x1x8xf32> to vector<1x8xf32>
    %cst_97 = arith.constant dense<0.000000e+00> : vector<5x8xf32>
    %116 = tpu.matmul %31, %113, %cst_97 {dimension_numbers = #tpu.dot_dimension_numbers<[1], [0], [0], [1], [0, 0, 1, 1], [], []>} : vector<5x32xf32>, vector<32x8xf32>, vector<5x8xf32> -> vector<5x8xf32>
    %117 = vector.broadcast %115 : vector<1x8xf32> to vector<5x8xf32>
    %118 = arith.addf %116, %117 : vector<5x8xf32>
    %c0_98 = arith.constant 0 : index
    %c10 = arith.constant 10 : index
    %c0_99 = arith.constant 0 : index
    %c0_100 = arith.constant 0 : index
    %119 = vector.load %arg3[%c0_98, %c10, %c0_99, %c0_100] : memref<2x12x33x8xf32, #tpu.memory_space<vmem>>, vector<1x1x32x8xf32>
    %120 = vector.shape_cast %119 : vector<1x1x32x8xf32> to vector<32x8xf32>
    %c0_101 = arith.constant 0 : index
    %c10_102 = arith.constant 10 : index
    %c32_103 = arith.constant 32 : index
    %c0_104 = arith.constant 0 : index
    %121 = vector.load %arg3[%c0_101, %c10_102, %c32_103, %c0_104] : memref<2x12x33x8xf32, #tpu.memory_space<vmem>>, vector<1x1x1x8xf32>
    %122 = vector.shape_cast %121 : vector<1x1x1x8xf32> to vector<1x8xf32>
    %cst_105 = arith.constant dense<0.000000e+00> : vector<5x8xf32>
    %123 = tpu.matmul %31, %120, %cst_105 {dimension_numbers = #tpu.dot_dimension_numbers<[1], [0], [0], [1], [0, 0, 1, 1], [], []>} : vector<5x32xf32>, vector<32x8xf32>, vector<5x8xf32> -> vector<5x8xf32>
    %124 = vector.broadcast %122 : vector<1x8xf32> to vector<5x8xf32>
    %125 = arith.addf %123, %124 : vector<5x8xf32>
    %cst_106 = arith.constant dense<0.000000e+00> : vector<5x5xf32>
    %126 = tpu.matmul %111, %118, %cst_106 {dimension_numbers = #tpu.dot_dimension_numbers<[1], [1], [0], [0], [0, 0, 1, 0], [], []>} : vector<5x8xf32>, vector<5x8xf32>, vector<5x5xf32> -> vector<5x5xf32>
    %cst_107 = arith.constant dense<0xFF800000> : vector<5xf32>
    %127 = vector.multi_reduction <maximumf>, %126, %cst_107 [1] : vector<5x5xf32> to vector<5xf32>
    %128 = vector.shape_cast %127 : vector<5xf32> to vector<5x1xf32>
    %129 = vector.broadcast %128 : vector<5x1xf32> to vector<5x5xf32>
    %130 = arith.subf %126, %129 : vector<5x5xf32>
    %131 = math.exp %130 : vector<5x5xf32>
    %cst_108 = arith.constant dense<0.000000e+00> : vector<5xf32>
    %132 = vector.multi_reduction <add>, %131, %cst_108 [1] : vector<5x5xf32> to vector<5xf32>
    %133 = vector.shape_cast %132 : vector<5xf32> to vector<5x1xf32>
    %134 = tpu.reciprocal %133 {approx = true} : vector<5x1xf32> -> vector<5x1xf32>
    %135 = vector.broadcast %134 : vector<5x1xf32> to vector<5x5xf32>
    %136 = arith.mulf %131, %135 : vector<5x5xf32>
    %cst_109 = arith.constant dense<0.000000e+00> : vector<5x8xf32>
    %137 = tpu.matmul %136, %125, %cst_109 {dimension_numbers = #tpu.dot_dimension_numbers<[1], [0], [0], [1], [0, 0, 1, 1], [], []>} : vector<5x5xf32>, vector<5x8xf32>, vector<5x8xf32> -> vector<5x8xf32>
    %c0_110 = arith.constant 0 : index
    %c16 = arith.constant 16 : index
    %c0_111 = arith.constant 0 : index
    %138 = vector.load %arg4[%c0_110, %c16, %c0_111] : memref<2x33x32xf32, #tpu.memory_space<vmem>>, vector<1x8x32xf32>
    %139 = vector.shape_cast %138 : vector<1x8x32xf32> to vector<8x32xf32>
    %cst_112 = arith.constant dense<0.000000e+00> : vector<5x32xf32>
    %140 = tpu.matmul %137, %139, %cst_112 {dimension_numbers = #tpu.dot_dimension_numbers<[1], [0], [0], [1], [0, 0, 1, 1], [], []>} : vector<5x8xf32>, vector<8x32xf32>, vector<5x32xf32> -> vector<5x32xf32>
    %141 = arith.addf %104, %140 : vector<5x32xf32>
    %c0_113 = arith.constant 0 : index
    %c3 = arith.constant 3 : index
    %c0_114 = arith.constant 0 : index
    %c0_115 = arith.constant 0 : index
    %142 = vector.load %arg3[%c0_113, %c3, %c0_114, %c0_115] : memref<2x12x33x8xf32, #tpu.memory_space<vmem>>, vector<1x1x32x8xf32>
    %143 = vector.shape_cast %142 : vector<1x1x32x8xf32> to vector<32x8xf32>
    %c0_116 = arith.constant 0 : index
    %c3_117 = arith.constant 3 : index
    %c32_118 = arith.constant 32 : index
    %c0_119 = arith.constant 0 : index
    %144 = vector.load %arg3[%c0_116, %c3_117, %c32_118, %c0_119] : memref<2x12x33x8xf32, #tpu.memory_space<vmem>>, vector<1x1x1x8xf32>
    %145 = vector.shape_cast %144 : vector<1x1x1x8xf32> to vector<1x8xf32>
    %cst_120 = arith.constant dense<0.000000e+00> : vector<5x8xf32>
    %146 = tpu.matmul %31, %143, %cst_120 {dimension_numbers = #tpu.dot_dimension_numbers<[1], [0], [0], [1], [0, 0, 1, 1], [], []>} : vector<5x32xf32>, vector<32x8xf32>, vector<5x8xf32> -> vector<5x8xf32>
    %147 = vector.broadcast %145 : vector<1x8xf32> to vector<5x8xf32>
    %148 = arith.addf %146, %147 : vector<5x8xf32>
    %c0_121 = arith.constant 0 : index
    %c7 = arith.constant 7 : index
    %c0_122 = arith.constant 0 : index
    %c0_123 = arith.constant 0 : index
    %149 = vector.load %arg3[%c0_121, %c7, %c0_122, %c0_123] : memref<2x12x33x8xf32, #tpu.memory_space<vmem>>, vector<1x1x32x8xf32>
    %150 = vector.shape_cast %149 : vector<1x1x32x8xf32> to vector<32x8xf32>
    %c0_124 = arith.constant 0 : index
    %c7_125 = arith.constant 7 : index
    %c32_126 = arith.constant 32 : index
    %c0_127 = arith.constant 0 : index
    %151 = vector.load %arg3[%c0_124, %c7_125, %c32_126, %c0_127] : memref<2x12x33x8xf32, #tpu.memory_space<vmem>>, vector<1x1x1x8xf32>
    %152 = vector.shape_cast %151 : vector<1x1x1x8xf32> to vector<1x8xf32>
    %cst_128 = arith.constant dense<0.000000e+00> : vector<5x8xf32>
    %153 = tpu.matmul %31, %150, %cst_128 {dimension_numbers = #tpu.dot_dimension_numbers<[1], [0], [0], [1], [0, 0, 1, 1], [], []>} : vector<5x32xf32>, vector<32x8xf32>, vector<5x8xf32> -> vector<5x8xf32>
    %154 = vector.broadcast %152 : vector<1x8xf32> to vector<5x8xf32>
    %155 = arith.addf %153, %154 : vector<5x8xf32>
    %c0_129 = arith.constant 0 : index
    %c11 = arith.constant 11 : index
    %c0_130 = arith.constant 0 : index
    %c0_131 = arith.constant 0 : index
    %156 = vector.load %arg3[%c0_129, %c11, %c0_130, %c0_131] : memref<2x12x33x8xf32, #tpu.memory_space<vmem>>, vector<1x1x32x8xf32>
    %157 = vector.shape_cast %156 : vector<1x1x32x8xf32> to vector<32x8xf32>
    %c0_132 = arith.constant 0 : index
    %c11_133 = arith.constant 11 : index
    %c32_134 = arith.constant 32 : index
    %c0_135 = arith.constant 0 : index
    %158 = vector.load %arg3[%c0_132, %c11_133, %c32_134, %c0_135] : memref<2x12x33x8xf32, #tpu.memory_space<vmem>>, vector<1x1x1x8xf32>
    %159 = vector.shape_cast %158 : vector<1x1x1x8xf32> to vector<1x8xf32>
    %cst_136 = arith.constant dense<0.000000e+00> : vector<5x8xf32>
    %160 = tpu.matmul %31, %157, %cst_136 {dimension_numbers = #tpu.dot_dimension_numbers<[1], [0], [0], [1], [0, 0, 1, 1], [], []>} : vector<5x32xf32>, vector<32x8xf32>, vector<5x8xf32> -> vector<5x8xf32>
    %161 = vector.broadcast %159 : vector<1x8xf32> to vector<5x8xf32>
    %162 = arith.addf %160, %161 : vector<5x8xf32>
    %cst_137 = arith.constant dense<0.000000e+00> : vector<5x5xf32>
    %163 = tpu.matmul %148, %155, %cst_137 {dimension_numbers = #tpu.dot_dimension_numbers<[1], [1], [0], [0], [0, 0, 1, 0], [], []>} : vector<5x8xf32>, vector<5x8xf32>, vector<5x5xf32> -> vector<5x5xf32>
    %cst_138 = arith.constant dense<0xFF800000> : vector<5xf32>
    %164 = vector.multi_reduction <maximumf>, %163, %cst_138 [1] : vector<5x5xf32> to vector<5xf32>
    %165 = vector.shape_cast %164 : vector<5xf32> to vector<5x1xf32>
    %166 = vector.broadcast %165 : vector<5x1xf32> to vector<5x5xf32>
    %167 = arith.subf %163, %166 : vector<5x5xf32>
    %168 = math.exp %167 : vector<5x5xf32>
    %cst_139 = arith.constant dense<0.000000e+00> : vector<5xf32>
    %169 = vector.multi_reduction <add>, %168, %cst_139 [1] : vector<5x5xf32> to vector<5xf32>
    %170 = vector.shape_cast %169 : vector<5xf32> to vector<5x1xf32>
    %171 = tpu.reciprocal %170 {approx = true} : vector<5x1xf32> -> vector<5x1xf32>
    %172 = vector.broadcast %171 : vector<5x1xf32> to vector<5x5xf32>
    %173 = arith.mulf %168, %172 : vector<5x5xf32>
    %cst_140 = arith.constant dense<0.000000e+00> : vector<5x8xf32>
    %174 = tpu.matmul %173, %162, %cst_140 {dimension_numbers = #tpu.dot_dimension_numbers<[1], [0], [0], [1], [0, 0, 1, 1], [], []>} : vector<5x5xf32>, vector<5x8xf32>, vector<5x8xf32> -> vector<5x8xf32>
    %c0_141 = arith.constant 0 : index
    %c24 = arith.constant 24 : index
    %c0_142 = arith.constant 0 : index
    %175 = vector.load %arg4[%c0_141, %c24, %c0_142] : memref<2x33x32xf32, #tpu.memory_space<vmem>>, vector<1x8x32xf32>
    %176 = vector.shape_cast %175 : vector<1x8x32xf32> to vector<8x32xf32>
    %cst_143 = arith.constant dense<0.000000e+00> : vector<5x32xf32>
    %177 = tpu.matmul %174, %176, %cst_143 {dimension_numbers = #tpu.dot_dimension_numbers<[1], [0], [0], [1], [0, 0, 1, 1], [], []>} : vector<5x8xf32>, vector<8x32xf32>, vector<5x32xf32> -> vector<5x32xf32>
    %178 = arith.addf %141, %177 : vector<5x32xf32>
    %179 = arith.addf %5, %178 : vector<5x32xf32>
    %c0_144 = arith.constant 0 : index
    %c32_145 = arith.constant 32 : index
    %c0_146 = arith.constant 0 : index
    %180 = vector.load %arg4[%c0_144, %c32_145, %c0_146] : memref<2x33x32xf32, #tpu.memory_space<vmem>>, vector<1x1x32xf32>
    %181 = vector.shape_cast %180 : vector<1x1x32xf32> to vector<1x32xf32>
    %182 = vector.broadcast %181 : vector<1x32xf32> to vector<5x32xf32>
    %183 = arith.addf %179, %182 : vector<5x32xf32>
    %c1_147 = arith.constant 1 : index
    %c0_148 = arith.constant 0 : index
    %c0_149 = arith.constant 0 : index
    %c0_150 = arith.constant 0 : index
    %184 = vector.load %arg5[%c1_147, %c0_148, %c0_149, %c0_150] : memref<5x2x1x32xf32, #tpu.memory_space<vmem>>, vector<1x1x1x32xf32>
    %185 = vector.shape_cast %184 : vector<1x1x1x32xf32> to vector<1x32xf32>
    %c1_151 = arith.constant 1 : index
    %c1_152 = arith.constant 1 : index
    %c0_153 = arith.constant 0 : index
    %c0_154 = arith.constant 0 : index
    %186 = vector.load %arg5[%c1_151, %c1_152, %c0_153, %c0_154] : memref<5x2x1x32xf32, #tpu.memory_space<vmem>>, vector<1x1x1x32xf32>
    %187 = vector.shape_cast %186 : vector<1x1x1x32xf32> to vector<1x32xf32>
    %cst_155 = arith.constant dense<0.000000e+00> : vector<5xf32>
    %188 = vector.multi_reduction <add>, %183, %cst_155 [1] : vector<5x32xf32> to vector<5xf32>
    %189 = vector.shape_cast %188 : vector<5xf32> to vector<5x1xf32>
    %cst_156 = arith.constant 3.200000e+01 : f32
    %190 = vector.broadcast %cst_156 : f32 to vector<5x1xf32>
    %191 = arith.divf %189, %190 : vector<5x1xf32>
    %192 = vector.broadcast %191 : vector<5x1xf32> to vector<5x32xf32>
    %193 = arith.subf %183, %192 : vector<5x32xf32>
    %194 = arith.mulf %193, %193 : vector<5x32xf32>
    %cst_157 = arith.constant dense<0.000000e+00> : vector<5xf32>
    %195 = vector.multi_reduction <add>, %194, %cst_157 [1] : vector<5x32xf32> to vector<5xf32>
    %196 = vector.shape_cast %195 : vector<5xf32> to vector<5x1xf32>
    %cst_158 = arith.constant 3.200000e+01 : f32
    %197 = vector.broadcast %cst_158 : f32 to vector<5x1xf32>
    %198 = arith.divf %196, %197 : vector<5x1xf32>
    %199 = vector.broadcast %191 : vector<5x1xf32> to vector<5x32xf32>
    %200 = arith.subf %183, %199 : vector<5x32xf32>
    %cst_159 = arith.constant 9.99999997E-7 : f32
    %201 = vector.broadcast %cst_159 : f32 to vector<5x1xf32>
    %202 = arith.addf %198, %201 : vector<5x1xf32>
    %203 = math.rsqrt %202 : vector<5x1xf32>
    %204 = vector.broadcast %203 : vector<5x1xf32> to vector<5x32xf32>
    %205 = arith.mulf %200, %204 : vector<5x32xf32>
    %206 = vector.broadcast %185 : vector<1x32xf32> to vector<5x32xf32>
    %207 = arith.mulf %205, %206 : vector<5x32xf32>
    %208 = vector.broadcast %187 : vector<1x32xf32> to vector<5x32xf32>
    %209 = arith.addf %207, %208 : vector<5x32xf32>
    %c0_160 = arith.constant 0 : index
    %c0_161 = arith.constant 0 : index
    %c0_162 = arith.constant 0 : index
    %210 = vector.load %arg6[%c0_160, %c0_161, %c0_162] : memref<2x33x64xf32, #tpu.memory_space<vmem>>, vector<1x32x64xf32>
    %211 = vector.shape_cast %210 : vector<1x32x64xf32> to vector<32x64xf32>
    %cst_163 = arith.constant dense<0.000000e+00> : vector<5x64xf32>
    %212 = tpu.matmul %209, %211, %cst_163 {dimension_numbers = #tpu.dot_dimension_numbers<[1], [0], [0], [1], [0, 0, 1, 1], [], []>} : vector<5x32xf32>, vector<32x64xf32>, vector<5x64xf32> -> vector<5x64xf32>
    %c0_164 = arith.constant 0 : index
    %c32_165 = arith.constant 32 : index
    %c0_166 = arith.constant 0 : index
    %213 = vector.load %arg6[%c0_164, %c32_165, %c0_166] : memref<2x33x64xf32, #tpu.memory_space<vmem>>, vector<1x1x64xf32>
    %214 = vector.shape_cast %213 : vector<1x1x64xf32> to vector<1x64xf32>
    %215 = vector.broadcast %214 : vector<1x64xf32> to vector<5x64xf32>
    %216 = arith.addf %212, %215 : vector<5x64xf32>
    %cst_167 = arith.constant 5.000000e-01 : f32
    %217 = vector.broadcast %cst_167 : f32 to vector<5x64xf32>
    %218 = arith.mulf %217, %216 : vector<5x64xf32>
    %cst_168 = arith.constant 0.707106769 : f32
    %219 = vector.broadcast %cst_168 : f32 to vector<5x64xf32>
    %220 = arith.mulf %216, %219 : vector<5x64xf32>
    %221 = math.erf %220 : vector<5x64xf32>
    %cst_169 = arith.constant 1.000000e+00 : f32
    %222 = vector.broadcast %cst_169 : f32 to vector<5x64xf32>
    %223 = arith.addf %222, %221 : vector<5x64xf32>
    %224 = arith.mulf %218, %223 : vector<5x64xf32>
    %c0_170 = arith.constant 0 : index
    %c0_171 = arith.constant 0 : index
    %c0_172 = arith.constant 0 : index
    %225 = vector.load %arg7[%c0_170, %c0_171, %c0_172] : memref<2x65x32xf32, #tpu.memory_space<vmem>>, vector<1x64x32xf32>
    %226 = vector.shape_cast %225 : vector<1x64x32xf32> to vector<64x32xf32>
    %cst_173 = arith.constant dense<0.000000e+00> : vector<5x32xf32>
    %227 = tpu.matmul %224, %226, %cst_173 {dimension_numbers = #tpu.dot_dimension_numbers<[1], [0], [0], [1], [0, 0, 1, 1], [], []>} : vector<5x64xf32>, vector<64x32xf32>, vector<5x32xf32> -> vector<5x32xf32>
    %228 = arith.addf %183, %227 : vector<5x32xf32>
    %c0_174 = arith.constant 0 : index
    %c64 = arith.constant 64 : index
    %c0_175 = arith.constant 0 : index
    %229 = vector.load %arg7[%c0_174, %c64, %c0_175] : memref<2x65x32xf32, #tpu.memory_space<vmem>>, vector<1x1x32xf32>
    %230 = vector.shape_cast %229 : vector<1x1x32xf32> to vector<1x32xf32>
    %231 = vector.broadcast %230 : vector<1x32xf32> to vector<5x32xf32>
    %232 = arith.addf %228, %231 : vector<5x32xf32>
    %c2_176 = arith.constant 2 : index
    %c0_177 = arith.constant 0 : index
    %c0_178 = arith.constant 0 : index
    %c0_179 = arith.constant 0 : index
    %233 = vector.load %arg5[%c2_176, %c0_177, %c0_178, %c0_179] : memref<5x2x1x32xf32, #tpu.memory_space<vmem>>, vector<1x1x1x32xf32>
    %234 = vector.shape_cast %233 : vector<1x1x1x32xf32> to vector<1x32xf32>
    %c2_180 = arith.constant 2 : index
    %c1_181 = arith.constant 1 : index
    %c0_182 = arith.constant 0 : index
    %c0_183 = arith.constant 0 : index
    %235 = vector.load %arg5[%c2_180, %c1_181, %c0_182, %c0_183] : memref<5x2x1x32xf32, #tpu.memory_space<vmem>>, vector<1x1x1x32xf32>
    %236 = vector.shape_cast %235 : vector<1x1x1x32xf32> to vector<1x32xf32>
    %cst_184 = arith.constant dense<0.000000e+00> : vector<5xf32>
    %237 = vector.multi_reduction <add>, %232, %cst_184 [1] : vector<5x32xf32> to vector<5xf32>
    %238 = vector.shape_cast %237 : vector<5xf32> to vector<5x1xf32>
    %cst_185 = arith.constant 3.200000e+01 : f32
    %239 = vector.broadcast %cst_185 : f32 to vector<5x1xf32>
    %240 = arith.divf %238, %239 : vector<5x1xf32>
    %241 = vector.broadcast %240 : vector<5x1xf32> to vector<5x32xf32>
    %242 = arith.subf %232, %241 : vector<5x32xf32>
    %243 = arith.mulf %242, %242 : vector<5x32xf32>
    %cst_186 = arith.constant dense<0.000000e+00> : vector<5xf32>
    %244 = vector.multi_reduction <add>, %243, %cst_186 [1] : vector<5x32xf32> to vector<5xf32>
    %245 = vector.shape_cast %244 : vector<5xf32> to vector<5x1xf32>
    %cst_187 = arith.constant 3.200000e+01 : f32
    %246 = vector.broadcast %cst_187 : f32 to vector<5x1xf32>
    %247 = arith.divf %245, %246 : vector<5x1xf32>
    %248 = vector.broadcast %240 : vector<5x1xf32> to vector<5x32xf32>
    %249 = arith.subf %232, %248 : vector<5x32xf32>
    %cst_188 = arith.constant 9.99999997E-7 : f32
    %250 = vector.broadcast %cst_188 : f32 to vector<5x1xf32>
    %251 = arith.addf %247, %250 : vector<5x1xf32>
    %252 = math.rsqrt %251 : vector<5x1xf32>
    %253 = vector.broadcast %252 : vector<5x1xf32> to vector<5x32xf32>
    %254 = arith.mulf %249, %253 : vector<5x32xf32>
    %255 = vector.broadcast %234 : vector<1x32xf32> to vector<5x32xf32>
    %256 = arith.mulf %254, %255 : vector<5x32xf32>
    %257 = vector.broadcast %236 : vector<1x32xf32> to vector<5x32xf32>
    %258 = arith.addf %256, %257 : vector<5x32xf32>
    %c1_189 = arith.constant 1 : index
    %c0_190 = arith.constant 0 : index
    %c0_191 = arith.constant 0 : index
    %c0_192 = arith.constant 0 : index
    %259 = vector.load %arg3[%c1_189, %c0_190, %c0_191, %c0_192] : memref<2x12x33x8xf32, #tpu.memory_space<vmem>>, vector<1x1x32x8xf32>
    %260 = vector.shape_cast %259 : vector<1x1x32x8xf32> to vector<32x8xf32>
    %c1_193 = arith.constant 1 : index
    %c0_194 = arith.constant 0 : index
    %c32_195 = arith.constant 32 : index
    %c0_196 = arith.constant 0 : index
    %261 = vector.load %arg3[%c1_193, %c0_194, %c32_195, %c0_196] : memref<2x12x33x8xf32, #tpu.memory_space<vmem>>, vector<1x1x1x8xf32>
    %262 = vector.shape_cast %261 : vector<1x1x1x8xf32> to vector<1x8xf32>
    %cst_197 = arith.constant dense<0.000000e+00> : vector<5x8xf32>
    %263 = tpu.matmul %258, %260, %cst_197 {dimension_numbers = #tpu.dot_dimension_numbers<[1], [0], [0], [1], [0, 0, 1, 1], [], []>} : vector<5x32xf32>, vector<32x8xf32>, vector<5x8xf32> -> vector<5x8xf32>
    %264 = vector.broadcast %262 : vector<1x8xf32> to vector<5x8xf32>
    %265 = arith.addf %263, %264 : vector<5x8xf32>
    %c1_198 = arith.constant 1 : index
    %c4_199 = arith.constant 4 : index
    %c0_200 = arith.constant 0 : index
    %c0_201 = arith.constant 0 : index
    %266 = vector.load %arg3[%c1_198, %c4_199, %c0_200, %c0_201] : memref<2x12x33x8xf32, #tpu.memory_space<vmem>>, vector<1x1x32x8xf32>
    %267 = vector.shape_cast %266 : vector<1x1x32x8xf32> to vector<32x8xf32>
    %c1_202 = arith.constant 1 : index
    %c4_203 = arith.constant 4 : index
    %c32_204 = arith.constant 32 : index
    %c0_205 = arith.constant 0 : index
    %268 = vector.load %arg3[%c1_202, %c4_203, %c32_204, %c0_205] : memref<2x12x33x8xf32, #tpu.memory_space<vmem>>, vector<1x1x1x8xf32>
    %269 = vector.shape_cast %268 : vector<1x1x1x8xf32> to vector<1x8xf32>
    %cst_206 = arith.constant dense<0.000000e+00> : vector<5x8xf32>
    %270 = tpu.matmul %258, %267, %cst_206 {dimension_numbers = #tpu.dot_dimension_numbers<[1], [0], [0], [1], [0, 0, 1, 1], [], []>} : vector<5x32xf32>, vector<32x8xf32>, vector<5x8xf32> -> vector<5x8xf32>
    %271 = vector.broadcast %269 : vector<1x8xf32> to vector<5x8xf32>
    %272 = arith.addf %270, %271 : vector<5x8xf32>
    %c1_207 = arith.constant 1 : index
    %c8_208 = arith.constant 8 : index
    %c0_209 = arith.constant 0 : index
    %c0_210 = arith.constant 0 : index
    %273 = vector.load %arg3[%c1_207, %c8_208, %c0_209, %c0_210] : memref<2x12x33x8xf32, #tpu.memory_space<vmem>>, vector<1x1x32x8xf32>
    %274 = vector.shape_cast %273 : vector<1x1x32x8xf32> to vector<32x8xf32>
    %c1_211 = arith.constant 1 : index
    %c8_212 = arith.constant 8 : index
    %c32_213 = arith.constant 32 : index
    %c0_214 = arith.constant 0 : index
    %275 = vector.load %arg3[%c1_211, %c8_212, %c32_213, %c0_214] : memref<2x12x33x8xf32, #tpu.memory_space<vmem>>, vector<1x1x1x8xf32>
    %276 = vector.shape_cast %275 : vector<1x1x1x8xf32> to vector<1x8xf32>
    %cst_215 = arith.constant dense<0.000000e+00> : vector<5x8xf32>
    %277 = tpu.matmul %258, %274, %cst_215 {dimension_numbers = #tpu.dot_dimension_numbers<[1], [0], [0], [1], [0, 0, 1, 1], [], []>} : vector<5x32xf32>, vector<32x8xf32>, vector<5x8xf32> -> vector<5x8xf32>
    %278 = vector.broadcast %276 : vector<1x8xf32> to vector<5x8xf32>
    %279 = arith.addf %277, %278 : vector<5x8xf32>
    %cst_216 = arith.constant dense<0.000000e+00> : vector<5x5xf32>
    %280 = tpu.matmul %265, %272, %cst_216 {dimension_numbers = #tpu.dot_dimension_numbers<[1], [1], [0], [0], [0, 0, 1, 0], [], []>} : vector<5x8xf32>, vector<5x8xf32>, vector<5x5xf32> -> vector<5x5xf32>
    %cst_217 = arith.constant dense<0xFF800000> : vector<5xf32>
    %281 = vector.multi_reduction <maximumf>, %280, %cst_217 [1] : vector<5x5xf32> to vector<5xf32>
    %282 = vector.shape_cast %281 : vector<5xf32> to vector<5x1xf32>
    %283 = vector.broadcast %282 : vector<5x1xf32> to vector<5x5xf32>
    %284 = arith.subf %280, %283 : vector<5x5xf32>
    %285 = math.exp %284 : vector<5x5xf32>
    %cst_218 = arith.constant dense<0.000000e+00> : vector<5xf32>
    %286 = vector.multi_reduction <add>, %285, %cst_218 [1] : vector<5x5xf32> to vector<5xf32>
    %287 = vector.shape_cast %286 : vector<5xf32> to vector<5x1xf32>
    %288 = tpu.reciprocal %287 {approx = true} : vector<5x1xf32> -> vector<5x1xf32>
    %289 = vector.broadcast %288 : vector<5x1xf32> to vector<5x5xf32>
    %290 = arith.mulf %285, %289 : vector<5x5xf32>
    %cst_219 = arith.constant dense<0.000000e+00> : vector<5x8xf32>
    %291 = tpu.matmul %290, %279, %cst_219 {dimension_numbers = #tpu.dot_dimension_numbers<[1], [0], [0], [1], [0, 0, 1, 1], [], []>} : vector<5x5xf32>, vector<5x8xf32>, vector<5x8xf32> -> vector<5x8xf32>
    %c1_220 = arith.constant 1 : index
    %c0_221 = arith.constant 0 : index
    %c0_222 = arith.constant 0 : index
    %292 = vector.load %arg4[%c1_220, %c0_221, %c0_222] : memref<2x33x32xf32, #tpu.memory_space<vmem>>, vector<1x8x32xf32>
    %293 = vector.shape_cast %292 : vector<1x8x32xf32> to vector<8x32xf32>
    %cst_223 = arith.constant dense<0.000000e+00> : vector<5x32xf32>
    %294 = tpu.matmul %291, %293, %cst_223 {dimension_numbers = #tpu.dot_dimension_numbers<[1], [0], [0], [1], [0, 0, 1, 1], [], []>} : vector<5x8xf32>, vector<8x32xf32>, vector<5x32xf32> -> vector<5x32xf32>
    %c1_224 = arith.constant 1 : index
    %c1_225 = arith.constant 1 : index
    %c0_226 = arith.constant 0 : index
    %c0_227 = arith.constant 0 : index
    %295 = vector.load %arg3[%c1_224, %c1_225, %c0_226, %c0_227] : memref<2x12x33x8xf32, #tpu.memory_space<vmem>>, vector<1x1x32x8xf32>
    %296 = vector.shape_cast %295 : vector<1x1x32x8xf32> to vector<32x8xf32>
    %c1_228 = arith.constant 1 : index
    %c1_229 = arith.constant 1 : index
    %c32_230 = arith.constant 32 : index
    %c0_231 = arith.constant 0 : index
    %297 = vector.load %arg3[%c1_228, %c1_229, %c32_230, %c0_231] : memref<2x12x33x8xf32, #tpu.memory_space<vmem>>, vector<1x1x1x8xf32>
    %298 = vector.shape_cast %297 : vector<1x1x1x8xf32> to vector<1x8xf32>
    %cst_232 = arith.constant dense<0.000000e+00> : vector<5x8xf32>
    %299 = tpu.matmul %258, %296, %cst_232 {dimension_numbers = #tpu.dot_dimension_numbers<[1], [0], [0], [1], [0, 0, 1, 1], [], []>} : vector<5x32xf32>, vector<32x8xf32>, vector<5x8xf32> -> vector<5x8xf32>
    %300 = vector.broadcast %298 : vector<1x8xf32> to vector<5x8xf32>
    %301 = arith.addf %299, %300 : vector<5x8xf32>
    %c1_233 = arith.constant 1 : index
    %c5_234 = arith.constant 5 : index
    %c0_235 = arith.constant 0 : index
    %c0_236 = arith.constant 0 : index
    %302 = vector.load %arg3[%c1_233, %c5_234, %c0_235, %c0_236] : memref<2x12x33x8xf32, #tpu.memory_space<vmem>>, vector<1x1x32x8xf32>
    %303 = vector.shape_cast %302 : vector<1x1x32x8xf32> to vector<32x8xf32>
    %c1_237 = arith.constant 1 : index
    %c5_238 = arith.constant 5 : index
    %c32_239 = arith.constant 32 : index
    %c0_240 = arith.constant 0 : index
    %304 = vector.load %arg3[%c1_237, %c5_238, %c32_239, %c0_240] : memref<2x12x33x8xf32, #tpu.memory_space<vmem>>, vector<1x1x1x8xf32>
    %305 = vector.shape_cast %304 : vector<1x1x1x8xf32> to vector<1x8xf32>
    %cst_241 = arith.constant dense<0.000000e+00> : vector<5x8xf32>
    %306 = tpu.matmul %258, %303, %cst_241 {dimension_numbers = #tpu.dot_dimension_numbers<[1], [0], [0], [1], [0, 0, 1, 1], [], []>} : vector<5x32xf32>, vector<32x8xf32>, vector<5x8xf32> -> vector<5x8xf32>
    %307 = vector.broadcast %305 : vector<1x8xf32> to vector<5x8xf32>
    %308 = arith.addf %306, %307 : vector<5x8xf32>
    %c1_242 = arith.constant 1 : index
    %c9_243 = arith.constant 9 : index
    %c0_244 = arith.constant 0 : index
    %c0_245 = arith.constant 0 : index
    %309 = vector.load %arg3[%c1_242, %c9_243, %c0_244, %c0_245] : memref<2x12x33x8xf32, #tpu.memory_space<vmem>>, vector<1x1x32x8xf32>
    %310 = vector.shape_cast %309 : vector<1x1x32x8xf32> to vector<32x8xf32>
    %c1_246 = arith.constant 1 : index
    %c9_247 = arith.constant 9 : index
    %c32_248 = arith.constant 32 : index
    %c0_249 = arith.constant 0 : index
    %311 = vector.load %arg3[%c1_246, %c9_247, %c32_248, %c0_249] : memref<2x12x33x8xf32, #tpu.memory_space<vmem>>, vector<1x1x1x8xf32>
    %312 = vector.shape_cast %311 : vector<1x1x1x8xf32> to vector<1x8xf32>
    %cst_250 = arith.constant dense<0.000000e+00> : vector<5x8xf32>
    %313 = tpu.matmul %258, %310, %cst_250 {dimension_numbers = #tpu.dot_dimension_numbers<[1], [0], [0], [1], [0, 0, 1, 1], [], []>} : vector<5x32xf32>, vector<32x8xf32>, vector<5x8xf32> -> vector<5x8xf32>
    %314 = vector.broadcast %312 : vector<1x8xf32> to vector<5x8xf32>
    %315 = arith.addf %313, %314 : vector<5x8xf32>
    %cst_251 = arith.constant dense<0.000000e+00> : vector<5x5xf32>
    %316 = tpu.matmul %301, %308, %cst_251 {dimension_numbers = #tpu.dot_dimension_numbers<[1], [1], [0], [0], [0, 0, 1, 0], [], []>} : vector<5x8xf32>, vector<5x8xf32>, vector<5x5xf32> -> vector<5x5xf32>
    %cst_252 = arith.constant dense<0xFF800000> : vector<5xf32>
    %317 = vector.multi_reduction <maximumf>, %316, %cst_252 [1] : vector<5x5xf32> to vector<5xf32>
    %318 = vector.shape_cast %317 : vector<5xf32> to vector<5x1xf32>
    %319 = vector.broadcast %318 : vector<5x1xf32> to vector<5x5xf32>
    %320 = arith.subf %316, %319 : vector<5x5xf32>
    %321 = math.exp %320 : vector<5x5xf32>
    %cst_253 = arith.constant dense<0.000000e+00> : vector<5xf32>
    %322 = vector.multi_reduction <add>, %321, %cst_253 [1] : vector<5x5xf32> to vector<5xf32>
    %323 = vector.shape_cast %322 : vector<5xf32> to vector<5x1xf32>
    %324 = tpu.reciprocal %323 {approx = true} : vector<5x1xf32> -> vector<5x1xf32>
    %325 = vector.broadcast %324 : vector<5x1xf32> to vector<5x5xf32>
    %326 = arith.mulf %321, %325 : vector<5x5xf32>
    %cst_254 = arith.constant dense<0.000000e+00> : vector<5x8xf32>
    %327 = tpu.matmul %326, %315, %cst_254 {dimension_numbers = #tpu.dot_dimension_numbers<[1], [0], [0], [1], [0, 0, 1, 1], [], []>} : vector<5x5xf32>, vector<5x8xf32>, vector<5x8xf32> -> vector<5x8xf32>
    %c1_255 = arith.constant 1 : index
    %c8_256 = arith.constant 8 : index
    %c0_257 = arith.constant 0 : index
    %328 = vector.load %arg4[%c1_255, %c8_256, %c0_257] : memref<2x33x32xf32, #tpu.memory_space<vmem>>, vector<1x8x32xf32>
    %329 = vector.shape_cast %328 : vector<1x8x32xf32> to vector<8x32xf32>
    %cst_258 = arith.constant dense<0.000000e+00> : vector<5x32xf32>
    %330 = tpu.matmul %327, %329, %cst_258 {dimension_numbers = #tpu.dot_dimension_numbers<[1], [0], [0], [1], [0, 0, 1, 1], [], []>} : vector<5x8xf32>, vector<8x32xf32>, vector<5x32xf32> -> vector<5x32xf32>
    %331 = arith.addf %294, %330 : vector<5x32xf32>
    %c1_259 = arith.constant 1 : index
    %c2_260 = arith.constant 2 : index
    %c0_261 = arith.constant 0 : index
    %c0_262 = arith.constant 0 : index
    %332 = vector.load %arg3[%c1_259, %c2_260, %c0_261, %c0_262] : memref<2x12x33x8xf32, #tpu.memory_space<vmem>>, vector<1x1x32x8xf32>
    %333 = vector.shape_cast %332 : vector<1x1x32x8xf32> to vector<32x8xf32>
    %c1_263 = arith.constant 1 : index
    %c2_264 = arith.constant 2 : index
    %c32_265 = arith.constant 32 : index
    %c0_266 = arith.constant 0 : index
    %334 = vector.load %arg3[%c1_263, %c2_264, %c32_265, %c0_266] : memref<2x12x33x8xf32, #tpu.memory_space<vmem>>, vector<1x1x1x8xf32>
    %335 = vector.shape_cast %334 : vector<1x1x1x8xf32> to vector<1x8xf32>
    %cst_267 = arith.constant dense<0.000000e+00> : vector<5x8xf32>
    %336 = tpu.matmul %258, %333, %cst_267 {dimension_numbers = #tpu.dot_dimension_numbers<[1], [0], [0], [1], [0, 0, 1, 1], [], []>} : vector<5x32xf32>, vector<32x8xf32>, vector<5x8xf32> -> vector<5x8xf32>
    %337 = vector.broadcast %335 : vector<1x8xf32> to vector<5x8xf32>
    %338 = arith.addf %336, %337 : vector<5x8xf32>
    %c1_268 = arith.constant 1 : index
    %c6_269 = arith.constant 6 : index
    %c0_270 = arith.constant 0 : index
    %c0_271 = arith.constant 0 : index
    %339 = vector.load %arg3[%c1_268, %c6_269, %c0_270, %c0_271] : memref<2x12x33x8xf32, #tpu.memory_space<vmem>>, vector<1x1x32x8xf32>
    %340 = vector.shape_cast %339 : vector<1x1x32x8xf32> to vector<32x8xf32>
    %c1_272 = arith.constant 1 : index
    %c6_273 = arith.constant 6 : index
    %c32_274 = arith.constant 32 : index
    %c0_275 = arith.constant 0 : index
    %341 = vector.load %arg3[%c1_272, %c6_273, %c32_274, %c0_275] : memref<2x12x33x8xf32, #tpu.memory_space<vmem>>, vector<1x1x1x8xf32>
    %342 = vector.shape_cast %341 : vector<1x1x1x8xf32> to vector<1x8xf32>
    %cst_276 = arith.constant dense<0.000000e+00> : vector<5x8xf32>
    %343 = tpu.matmul %258, %340, %cst_276 {dimension_numbers = #tpu.dot_dimension_numbers<[1], [0], [0], [1], [0, 0, 1, 1], [], []>} : vector<5x32xf32>, vector<32x8xf32>, vector<5x8xf32> -> vector<5x8xf32>
    %344 = vector.broadcast %342 : vector<1x8xf32> to vector<5x8xf32>
    %345 = arith.addf %343, %344 : vector<5x8xf32>
    %c1_277 = arith.constant 1 : index
    %c10_278 = arith.constant 10 : index
    %c0_279 = arith.constant 0 : index
    %c0_280 = arith.constant 0 : index
    %346 = vector.load %arg3[%c1_277, %c10_278, %c0_279, %c0_280] : memref<2x12x33x8xf32, #tpu.memory_space<vmem>>, vector<1x1x32x8xf32>
    %347 = vector.shape_cast %346 : vector<1x1x32x8xf32> to vector<32x8xf32>
    %c1_281 = arith.constant 1 : index
    %c10_282 = arith.constant 10 : index
    %c32_283 = arith.constant 32 : index
    %c0_284 = arith.constant 0 : index
    %348 = vector.load %arg3[%c1_281, %c10_282, %c32_283, %c0_284] : memref<2x12x33x8xf32, #tpu.memory_space<vmem>>, vector<1x1x1x8xf32>
    %349 = vector.shape_cast %348 : vector<1x1x1x8xf32> to vector<1x8xf32>
    %cst_285 = arith.constant dense<0.000000e+00> : vector<5x8xf32>
    %350 = tpu.matmul %258, %347, %cst_285 {dimension_numbers = #tpu.dot_dimension_numbers<[1], [0], [0], [1], [0, 0, 1, 1], [], []>} : vector<5x32xf32>, vector<32x8xf32>, vector<5x8xf32> -> vector<5x8xf32>
    %351 = vector.broadcast %349 : vector<1x8xf32> to vector<5x8xf32>
    %352 = arith.addf %350, %351 : vector<5x8xf32>
    %cst_286 = arith.constant dense<0.000000e+00> : vector<5x5xf32>
    %353 = tpu.matmul %338, %345, %cst_286 {dimension_numbers = #tpu.dot_dimension_numbers<[1], [1], [0], [0], [0, 0, 1, 0], [], []>} : vector<5x8xf32>, vector<5x8xf32>, vector<5x5xf32> -> vector<5x5xf32>
    %cst_287 = arith.constant dense<0xFF800000> : vector<5xf32>
    %354 = vector.multi_reduction <maximumf>, %353, %cst_287 [1] : vector<5x5xf32> to vector<5xf32>
    %355 = vector.shape_cast %354 : vector<5xf32> to vector<5x1xf32>
    %356 = vector.broadcast %355 : vector<5x1xf32> to vector<5x5xf32>
    %357 = arith.subf %353, %356 : vector<5x5xf32>
    %358 = math.exp %357 : vector<5x5xf32>
    %cst_288 = arith.constant dense<0.000000e+00> : vector<5xf32>
    %359 = vector.multi_reduction <add>, %358, %cst_288 [1] : vector<5x5xf32> to vector<5xf32>
    %360 = vector.shape_cast %359 : vector<5xf32> to vector<5x1xf32>
    %361 = tpu.reciprocal %360 {approx = true} : vector<5x1xf32> -> vector<5x1xf32>
    %362 = vector.broadcast %361 : vector<5x1xf32> to vector<5x5xf32>
    %363 = arith.mulf %358, %362 : vector<5x5xf32>
    %cst_289 = arith.constant dense<0.000000e+00> : vector<5x8xf32>
    %364 = tpu.matmul %363, %352, %cst_289 {dimension_numbers = #tpu.dot_dimension_numbers<[1], [0], [0], [1], [0, 0, 1, 1], [], []>} : vector<5x5xf32>, vector<5x8xf32>, vector<5x8xf32> -> vector<5x8xf32>
    %c1_290 = arith.constant 1 : index
    %c16_291 = arith.constant 16 : index
    %c0_292 = arith.constant 0 : index
    %365 = vector.load %arg4[%c1_290, %c16_291, %c0_292] : memref<2x33x32xf32, #tpu.memory_space<vmem>>, vector<1x8x32xf32>
    %366 = vector.shape_cast %365 : vector<1x8x32xf32> to vector<8x32xf32>
    %cst_293 = arith.constant dense<0.000000e+00> : vector<5x32xf32>
    %367 = tpu.matmul %364, %366, %cst_293 {dimension_numbers = #tpu.dot_dimension_numbers<[1], [0], [0], [1], [0, 0, 1, 1], [], []>} : vector<5x8xf32>, vector<8x32xf32>, vector<5x32xf32> -> vector<5x32xf32>
    %368 = arith.addf %331, %367 : vector<5x32xf32>
    %c1_294 = arith.constant 1 : index
    %c3_295 = arith.constant 3 : index
    %c0_296 = arith.constant 0 : index
    %c0_297 = arith.constant 0 : index
    %369 = vector.load %arg3[%c1_294, %c3_295, %c0_296, %c0_297] : memref<2x12x33x8xf32, #tpu.memory_space<vmem>>, vector<1x1x32x8xf32>
    %370 = vector.shape_cast %369 : vector<1x1x32x8xf32> to vector<32x8xf32>
    %c1_298 = arith.constant 1 : index
    %c3_299 = arith.constant 3 : index
    %c32_300 = arith.constant 32 : index
    %c0_301 = arith.constant 0 : index
    %371 = vector.load %arg3[%c1_298, %c3_299, %c32_300, %c0_301] : memref<2x12x33x8xf32, #tpu.memory_space<vmem>>, vector<1x1x1x8xf32>
    %372 = vector.shape_cast %371 : vector<1x1x1x8xf32> to vector<1x8xf32>
    %cst_302 = arith.constant dense<0.000000e+00> : vector<5x8xf32>
    %373 = tpu.matmul %258, %370, %cst_302 {dimension_numbers = #tpu.dot_dimension_numbers<[1], [0], [0], [1], [0, 0, 1, 1], [], []>} : vector<5x32xf32>, vector<32x8xf32>, vector<5x8xf32> -> vector<5x8xf32>
    %374 = vector.broadcast %372 : vector<1x8xf32> to vector<5x8xf32>
    %375 = arith.addf %373, %374 : vector<5x8xf32>
    %c1_303 = arith.constant 1 : index
    %c7_304 = arith.constant 7 : index
    %c0_305 = arith.constant 0 : index
    %c0_306 = arith.constant 0 : index
    %376 = vector.load %arg3[%c1_303, %c7_304, %c0_305, %c0_306] : memref<2x12x33x8xf32, #tpu.memory_space<vmem>>, vector<1x1x32x8xf32>
    %377 = vector.shape_cast %376 : vector<1x1x32x8xf32> to vector<32x8xf32>
    %c1_307 = arith.constant 1 : index
    %c7_308 = arith.constant 7 : index
    %c32_309 = arith.constant 32 : index
    %c0_310 = arith.constant 0 : index
    %378 = vector.load %arg3[%c1_307, %c7_308, %c32_309, %c0_310] : memref<2x12x33x8xf32, #tpu.memory_space<vmem>>, vector<1x1x1x8xf32>
    %379 = vector.shape_cast %378 : vector<1x1x1x8xf32> to vector<1x8xf32>
    %cst_311 = arith.constant dense<0.000000e+00> : vector<5x8xf32>
    %380 = tpu.matmul %258, %377, %cst_311 {dimension_numbers = #tpu.dot_dimension_numbers<[1], [0], [0], [1], [0, 0, 1, 1], [], []>} : vector<5x32xf32>, vector<32x8xf32>, vector<5x8xf32> -> vector<5x8xf32>
    %381 = vector.broadcast %379 : vector<1x8xf32> to vector<5x8xf32>
    %382 = arith.addf %380, %381 : vector<5x8xf32>
    %c1_312 = arith.constant 1 : index
    %c11_313 = arith.constant 11 : index
    %c0_314 = arith.constant 0 : index
    %c0_315 = arith.constant 0 : index
    %383 = vector.load %arg3[%c1_312, %c11_313, %c0_314, %c0_315] : memref<2x12x33x8xf32, #tpu.memory_space<vmem>>, vector<1x1x32x8xf32>
    %384 = vector.shape_cast %383 : vector<1x1x32x8xf32> to vector<32x8xf32>
    %c1_316 = arith.constant 1 : index
    %c11_317 = arith.constant 11 : index
    %c32_318 = arith.constant 32 : index
    %c0_319 = arith.constant 0 : index
    %385 = vector.load %arg3[%c1_316, %c11_317, %c32_318, %c0_319] : memref<2x12x33x8xf32, #tpu.memory_space<vmem>>, vector<1x1x1x8xf32>
    %386 = vector.shape_cast %385 : vector<1x1x1x8xf32> to vector<1x8xf32>
    %cst_320 = arith.constant dense<0.000000e+00> : vector<5x8xf32>
    %387 = tpu.matmul %258, %384, %cst_320 {dimension_numbers = #tpu.dot_dimension_numbers<[1], [0], [0], [1], [0, 0, 1, 1], [], []>} : vector<5x32xf32>, vector<32x8xf32>, vector<5x8xf32> -> vector<5x8xf32>
    %388 = vector.broadcast %386 : vector<1x8xf32> to vector<5x8xf32>
    %389 = arith.addf %387, %388 : vector<5x8xf32>
    %cst_321 = arith.constant dense<0.000000e+00> : vector<5x5xf32>
    %390 = tpu.matmul %375, %382, %cst_321 {dimension_numbers = #tpu.dot_dimension_numbers<[1], [1], [0], [0], [0, 0, 1, 0], [], []>} : vector<5x8xf32>, vector<5x8xf32>, vector<5x5xf32> -> vector<5x5xf32>
    %cst_322 = arith.constant dense<0xFF800000> : vector<5xf32>
    %391 = vector.multi_reduction <maximumf>, %390, %cst_322 [1] : vector<5x5xf32> to vector<5xf32>
    %392 = vector.shape_cast %391 : vector<5xf32> to vector<5x1xf32>
    %393 = vector.broadcast %392 : vector<5x1xf32> to vector<5x5xf32>
    %394 = arith.subf %390, %393 : vector<5x5xf32>
    %395 = math.exp %394 : vector<5x5xf32>
    %cst_323 = arith.constant dense<0.000000e+00> : vector<5xf32>
    %396 = vector.multi_reduction <add>, %395, %cst_323 [1] : vector<5x5xf32> to vector<5xf32>
    %397 = vector.shape_cast %396 : vector<5xf32> to vector<5x1xf32>
    %398 = tpu.reciprocal %397 {approx = true} : vector<5x1xf32> -> vector<5x1xf32>
    %399 = vector.broadcast %398 : vector<5x1xf32> to vector<5x5xf32>
    %400 = arith.mulf %395, %399 : vector<5x5xf32>
    %cst_324 = arith.constant dense<0.000000e+00> : vector<5x8xf32>
    %401 = tpu.matmul %400, %389, %cst_324 {dimension_numbers = #tpu.dot_dimension_numbers<[1], [0], [0], [1], [0, 0, 1, 1], [], []>} : vector<5x5xf32>, vector<5x8xf32>, vector<5x8xf32> -> vector<5x8xf32>
    %c1_325 = arith.constant 1 : index
    %c24_326 = arith.constant 24 : index
    %c0_327 = arith.constant 0 : index
    %402 = vector.load %arg4[%c1_325, %c24_326, %c0_327] : memref<2x33x32xf32, #tpu.memory_space<vmem>>, vector<1x8x32xf32>
    %403 = vector.shape_cast %402 : vector<1x8x32xf32> to vector<8x32xf32>
    %cst_328 = arith.constant dense<0.000000e+00> : vector<5x32xf32>
    %404 = tpu.matmul %401, %403, %cst_328 {dimension_numbers = #tpu.dot_dimension_numbers<[1], [0], [0], [1], [0, 0, 1, 1], [], []>} : vector<5x8xf32>, vector<8x32xf32>, vector<5x32xf32> -> vector<5x32xf32>
    %405 = arith.addf %368, %404 : vector<5x32xf32>
    %406 = arith.addf %232, %405 : vector<5x32xf32>
    %c1_329 = arith.constant 1 : index
    %c32_330 = arith.constant 32 : index
    %c0_331 = arith.constant 0 : index
    %407 = vector.load %arg4[%c1_329, %c32_330, %c0_331] : memref<2x33x32xf32, #tpu.memory_space<vmem>>, vector<1x1x32xf32>
    %408 = vector.shape_cast %407 : vector<1x1x32xf32> to vector<1x32xf32>
    %409 = vector.broadcast %408 : vector<1x32xf32> to vector<5x32xf32>
    %410 = arith.addf %406, %409 : vector<5x32xf32>
    %c3_332 = arith.constant 3 : index
    %c0_333 = arith.constant 0 : index
    %c0_334 = arith.constant 0 : index
    %c0_335 = arith.constant 0 : index
    %411 = vector.load %arg5[%c3_332, %c0_333, %c0_334, %c0_335] : memref<5x2x1x32xf32, #tpu.memory_space<vmem>>, vector<1x1x1x32xf32>
    %412 = vector.shape_cast %411 : vector<1x1x1x32xf32> to vector<1x32xf32>
    %c3_336 = arith.constant 3 : index
    %c1_337 = arith.constant 1 : index
    %c0_338 = arith.constant 0 : index
    %c0_339 = arith.constant 0 : index
    %413 = vector.load %arg5[%c3_336, %c1_337, %c0_338, %c0_339] : memref<5x2x1x32xf32, #tpu.memory_space<vmem>>, vector<1x1x1x32xf32>
    %414 = vector.shape_cast %413 : vector<1x1x1x32xf32> to vector<1x32xf32>
    %cst_340 = arith.constant dense<0.000000e+00> : vector<5xf32>
    %415 = vector.multi_reduction <add>, %410, %cst_340 [1] : vector<5x32xf32> to vector<5xf32>
    %416 = vector.shape_cast %415 : vector<5xf32> to vector<5x1xf32>
    %cst_341 = arith.constant 3.200000e+01 : f32
    %417 = vector.broadcast %cst_341 : f32 to vector<5x1xf32>
    %418 = arith.divf %416, %417 : vector<5x1xf32>
    %419 = vector.broadcast %418 : vector<5x1xf32> to vector<5x32xf32>
    %420 = arith.subf %410, %419 : vector<5x32xf32>
    %421 = arith.mulf %420, %420 : vector<5x32xf32>
    %cst_342 = arith.constant dense<0.000000e+00> : vector<5xf32>
    %422 = vector.multi_reduction <add>, %421, %cst_342 [1] : vector<5x32xf32> to vector<5xf32>
    %423 = vector.shape_cast %422 : vector<5xf32> to vector<5x1xf32>
    %cst_343 = arith.constant 3.200000e+01 : f32
    %424 = vector.broadcast %cst_343 : f32 to vector<5x1xf32>
    %425 = arith.divf %423, %424 : vector<5x1xf32>
    %426 = vector.broadcast %418 : vector<5x1xf32> to vector<5x32xf32>
    %427 = arith.subf %410, %426 : vector<5x32xf32>
    %cst_344 = arith.constant 9.99999997E-7 : f32
    %428 = vector.broadcast %cst_344 : f32 to vector<5x1xf32>
    %429 = arith.addf %425, %428 : vector<5x1xf32>
    %430 = math.rsqrt %429 : vector<5x1xf32>
    %431 = vector.broadcast %430 : vector<5x1xf32> to vector<5x32xf32>
    %432 = arith.mulf %427, %431 : vector<5x32xf32>
    %433 = vector.broadcast %412 : vector<1x32xf32> to vector<5x32xf32>
    %434 = arith.mulf %432, %433 : vector<5x32xf32>
    %435 = vector.broadcast %414 : vector<1x32xf32> to vector<5x32xf32>
    %436 = arith.addf %434, %435 : vector<5x32xf32>
    %c1_345 = arith.constant 1 : index
    %c0_346 = arith.constant 0 : index
    %c0_347 = arith.constant 0 : index
    %437 = vector.load %arg6[%c1_345, %c0_346, %c0_347] : memref<2x33x64xf32, #tpu.memory_space<vmem>>, vector<1x32x64xf32>
    %438 = vector.shape_cast %437 : vector<1x32x64xf32> to vector<32x64xf32>
    %cst_348 = arith.constant dense<0.000000e+00> : vector<5x64xf32>
    %439 = tpu.matmul %436, %438, %cst_348 {dimension_numbers = #tpu.dot_dimension_numbers<[1], [0], [0], [1], [0, 0, 1, 1], [], []>} : vector<5x32xf32>, vector<32x64xf32>, vector<5x64xf32> -> vector<5x64xf32>
    %c1_349 = arith.constant 1 : index
    %c32_350 = arith.constant 32 : index
    %c0_351 = arith.constant 0 : index
    %440 = vector.load %arg6[%c1_349, %c32_350, %c0_351] : memref<2x33x64xf32, #tpu.memory_space<vmem>>, vector<1x1x64xf32>
    %441 = vector.shape_cast %440 : vector<1x1x64xf32> to vector<1x64xf32>
    %442 = vector.broadcast %441 : vector<1x64xf32> to vector<5x64xf32>
    %443 = arith.addf %439, %442 : vector<5x64xf32>
    %cst_352 = arith.constant 5.000000e-01 : f32
    %444 = vector.broadcast %cst_352 : f32 to vector<5x64xf32>
    %445 = arith.mulf %444, %443 : vector<5x64xf32>
    %cst_353 = arith.constant 0.707106769 : f32
    %446 = vector.broadcast %cst_353 : f32 to vector<5x64xf32>
    %447 = arith.mulf %443, %446 : vector<5x64xf32>
    %448 = math.erf %447 : vector<5x64xf32>
    %cst_354 = arith.constant 1.000000e+00 : f32
    %449 = vector.broadcast %cst_354 : f32 to vector<5x64xf32>
    %450 = arith.addf %449, %448 : vector<5x64xf32>
    %451 = arith.mulf %445, %450 : vector<5x64xf32>
    %c1_355 = arith.constant 1 : index
    %c0_356 = arith.constant 0 : index
    %c0_357 = arith.constant 0 : index
    %452 = vector.load %arg7[%c1_355, %c0_356, %c0_357] : memref<2x65x32xf32, #tpu.memory_space<vmem>>, vector<1x64x32xf32>
    %453 = vector.shape_cast %452 : vector<1x64x32xf32> to vector<64x32xf32>
    %cst_358 = arith.constant dense<0.000000e+00> : vector<5x32xf32>
    %454 = tpu.matmul %451, %453, %cst_358 {dimension_numbers = #tpu.dot_dimension_numbers<[1], [0], [0], [1], [0, 0, 1, 1], [], []>} : vector<5x64xf32>, vector<64x32xf32>, vector<5x32xf32> -> vector<5x32xf32>
    %455 = arith.addf %410, %454 : vector<5x32xf32>
    %c1_359 = arith.constant 1 : index
    %c64_360 = arith.constant 64 : index
    %c0_361 = arith.constant 0 : index
    %456 = vector.load %arg7[%c1_359, %c64_360, %c0_361] : memref<2x65x32xf32, #tpu.memory_space<vmem>>, vector<1x1x32xf32>
    %457 = vector.shape_cast %456 : vector<1x1x32xf32> to vector<1x32xf32>
    %458 = vector.broadcast %457 : vector<1x32xf32> to vector<5x32xf32>
    %459 = arith.addf %455, %458 : vector<5x32xf32>
    %460 = vector.extract_strided_slice %459 {offsets = [0, 0], sizes = [1, 32], strides = [1, 1]} : vector<5x32xf32> to vector<1x32xf32>
    %c4_362 = arith.constant 4 : index
    %c0_363 = arith.constant 0 : index
    %c0_364 = arith.constant 0 : index
    %c0_365 = arith.constant 0 : index
    %461 = vector.load %arg5[%c4_362, %c0_363, %c0_364, %c0_365] : memref<5x2x1x32xf32, #tpu.memory_space<vmem>>, vector<1x1x1x32xf32>
    %462 = vector.shape_cast %461 : vector<1x1x1x32xf32> to vector<1x32xf32>
    %c4_366 = arith.constant 4 : index
    %c1_367 = arith.constant 1 : index
    %c0_368 = arith.constant 0 : index
    %c0_369 = arith.constant 0 : index
    %463 = vector.load %arg5[%c4_366, %c1_367, %c0_368, %c0_369] : memref<5x2x1x32xf32, #tpu.memory_space<vmem>>, vector<1x1x1x32xf32>
    %464 = vector.shape_cast %463 : vector<1x1x1x32xf32> to vector<1x32xf32>
    %cst_370 = arith.constant dense<0.000000e+00> : vector<1xf32>
    %465 = vector.multi_reduction <add>, %460, %cst_370 [1] : vector<1x32xf32> to vector<1xf32>
    %466 = vector.shape_cast %465 : vector<1xf32> to vector<1x1xf32>
    %cst_371 = arith.constant 3.200000e+01 : f32
    %467 = vector.broadcast %cst_371 : f32 to vector<1x1xf32>
    %468 = arith.divf %466, %467 : vector<1x1xf32>
    %469 = vector.broadcast %468 : vector<1x1xf32> to vector<1x32xf32>
    %470 = arith.subf %460, %469 : vector<1x32xf32>
    %471 = arith.mulf %470, %470 : vector<1x32xf32>
    %cst_372 = arith.constant dense<0.000000e+00> : vector<1xf32>
    %472 = vector.multi_reduction <add>, %471, %cst_372 [1] : vector<1x32xf32> to vector<1xf32>
    %473 = vector.shape_cast %472 : vector<1xf32> to vector<1x1xf32>
    %cst_373 = arith.constant 3.200000e+01 : f32
    %474 = vector.broadcast %cst_373 : f32 to vector<1x1xf32>
    %475 = arith.divf %473, %474 : vector<1x1xf32>
    %476 = vector.broadcast %468 : vector<1x1xf32> to vector<1x32xf32>
    %477 = arith.subf %460, %476 : vector<1x32xf32>
    %cst_374 = arith.constant 9.99999997E-7 : f32
    %478 = vector.broadcast %cst_374 : f32 to vector<1x1xf32>
    %479 = arith.addf %475, %478 : vector<1x1xf32>
    %480 = math.rsqrt %479 : vector<1x1xf32>
    %481 = vector.broadcast %480 : vector<1x1xf32> to vector<1x32xf32>
    %482 = arith.mulf %477, %481 : vector<1x32xf32>
    %483 = arith.mulf %482, %462 : vector<1x32xf32>
    %484 = arith.addf %483, %464 : vector<1x32xf32>
    %c0_375 = arith.constant 0 : index
    %c0_376 = arith.constant 0 : index
    %485 = vector.load %arg8[%c0_375, %c0_376] : memref<33x4xf32, #tpu.memory_space<vmem>>, vector<32x4xf32>
    %cst_377 = arith.constant dense<0.000000e+00> : vector<1x4xf32>
    %486 = tpu.matmul %484, %485, %cst_377 {dimension_numbers = #tpu.dot_dimension_numbers<[1], [0], [0], [1], [0, 0, 1, 1], [], []>} : vector<1x32xf32>, vector<32x4xf32>, vector<1x4xf32> -> vector<1x4xf32>
    %c32_378 = arith.constant 32 : index
    %c0_379 = arith.constant 0 : index
    %487 = vector.load %arg8[%c32_378, %c0_379] : memref<33x4xf32, #tpu.memory_space<vmem>>, vector<1x4xf32>
    %488 = arith.addf %486, %487 : vector<1x4xf32>
    %c0_380 = arith.constant 0 : index
    %c0_381 = arith.constant 0 : index
    %c0_382 = arith.constant 0 : index
    %489 = vector.load %arg9[%c0_380, %c0_381, %c0_382] : memref<1x1x4xf32, #tpu.memory_space<vmem>>, vector<1x1x4xf32>
    %490 = vector.shape_cast %489 : vector<1x1x4xf32> to vector<1x4xf32>
    %491 = vector.shape_cast %488 : vector<1x4xf32> to vector<1x1x4xf32>
    tpu.vector_store %arg9[%c0_380, %c0_381, %c0_382], %491 {strides = array<i32>} : memref<1x1x4xf32, #tpu.memory_space<vmem>>, vector<1x1x4xf32>,
    return
  }
  func.func @transform_0(%arg0: i32) -> (i32, i32, i32) {
    %c0_i32 = arith.constant 0 : i32
    %c0_i32_0 = arith.constant 0 : i32
    %c0_i32_1 = arith.constant 0 : i32
    return %arg0, %c0_i32, %c0_i32_0 : i32, i32, i32
  }
  func.func @transform_1(%arg0: i32) -> (i32, i32) {
    %c0_i32 = arith.constant 0 : i32
    %c0_i32_0 = arith.constant 0 : i32
    %c0_i32_1 = arith.constant 0 : i32
    return %c0_i32, %c0_i32_0 : i32, i32
  }
  func.func @transform_2(%arg0: i32) -> (i32, i32, i32, i32) {
    %c0_i32 = arith.constant 0 : i32
    %c0_i32_0 = arith.constant 0 : i32
    %c0_i32_1 = arith.constant 0 : i32
    %c0_i32_2 = arith.constant 0 : i32
    %c0_i32_3 = arith.constant 0 : i32
    return %c0_i32, %c0_i32_0, %c0_i32_1, %c0_i32_2 : i32, i32, i32, i32
  }
  func.func @transform_3(%arg0: i32) -> (i32, i32, i32) {
    %c0_i32 = arith.constant 0 : i32
    %c0_i32_0 = arith.constant 0 : i32
    %c0_i32_1 = arith.constant 0 : i32
    %c0_i32_2 = arith.constant 0 : i32
    return %c0_i32, %c0_i32_0, %c0_i32_1 : i32, i32, i32
  }
  func.func @transform_4(%arg0: i32) -> (i32, i32, i32, i32) {
    %c0_i32 = arith.constant 0 : i32
    %c0_i32_0 = arith.constant 0 : i32
    %c0_i32_1 = arith.constant 0 : i32
    %c0_i32_2 = arith.constant 0 : i32
    %c0_i32_3 = arith.constant 0 : i32
    return %c0_i32, %c0_i32_0, %c0_i32_1, %c0_i32_2 : i32, i32, i32, i32
  }
  func.func @transform_5(%arg0: i32) -> (i32, i32, i32) {
    %c0_i32 = arith.constant 0 : i32
    %c0_i32_0 = arith.constant 0 : i32
    %c0_i32_1 = arith.constant 0 : i32
    %c0_i32_2 = arith.constant 0 : i32
    return %c0_i32, %c0_i32_0, %c0_i32_1 : i32, i32, i32
  }
  func.func @transform_6(%arg0: i32) -> (i32, i32, i32) {
    %c0_i32 = arith.constant 0 : i32
    %c0_i32_0 = arith.constant 0 : i32
    %c0_i32_1 = arith.constant 0 : i32
    %c0_i32_2 = arith.constant 0 : i32
    return %c0_i32, %c0_i32_0, %c0_i32_1 : i32, i32, i32
  }
  func.func @transform_7(%arg0: i32) -> (i32, i32) {
    %c0_i32 = arith.constant 0 : i32
    %c0_i32_0 = arith.constant 0 : i32
    %c0_i32_1 = arith.constant 0 : i32
    return %c0_i32, %c0_i32_0 : i32, i32
  }
  func.func @transform_8(%arg0: i32) -> (i32, i32, i32) {
    %c0_i32 = arith.constant 0 : i32
    %c0_i32_0 = arith.constant 0 : i32
    %c0_i32_1 = arith.constant 0 : i32
    return %arg0, %c0_i32, %c0_i32_0 : i32, i32, i32
  }
}

</mosaic_0001>

<llo_original>
// kernel: tiny_vit_forward.1
$region0: #{tiny_vit_forward.1}
  #allocation0 [shape = 'u32[]', space=smem, size = 0x4, offset = 0x4, fixed_abs, tag = 'smem constant byte address 0x4 - core index']
  #allocation1 [shape = 'u32[144,128]{1,0:T(1,128)}', space=vmem, size = 0x12000, scoped, tag = 'internal scratch']
  %s0 = inlined_call_operand.vmem [shape: f32[2,5,192], index: 0, kind: input, shape index: {}]
  %s1 = inlined_call_operand.vmem [shape: f32[197,32], index: 1, kind: input, shape index: {}]
  %s2 = inlined_call_operand.vmem [shape: f32[2,12,33,8], index: 2, kind: input, shape index: {}]
  %s3 = inlined_call_operand.vmem [shape: f32[2,33,32], index: 3, kind: input, shape index: {}]
  %s4 = inlined_call_operand.vmem [shape: f32[5,2,1,32], index: 4, kind: input, shape index: {}]
  %s5 = inlined_call_operand.vmem [shape: f32[2,33,64], index: 5, kind: input, shape index: {}]
  %s6 = inlined_call_operand.vmem [shape: f32[2,65,32], index: 6, kind: input, shape index: {}]
  %s7 = inlined_call_operand.vmem [shape: f32[33,4], index: 7, kind: input, shape index: {}]
  %s8 = inlined_call_operand.hbm [shape: f32[2,1,4], index: 8, kind: output, shape index: {}]
  %s9 = sld [smem:[#allocation0]]
  $region65: #{tiny_vit_forward.1} parent=0
    _
  %s11 = ssub.s32 1, %s9
  %s12 = scalar_select 0, %s11, %s9
  $region1: #{tiny_vit_forward.1} parent=0
    #allocation2 [shape = 'u8[1024]{0}', space=vmem, size = 0x400, scoped, tag = 'output window, operand 0']
    #allocation3 [shape = 's32[2]{0}', space=sflag, size = 0x8, scoped, tag = 'scoped memory for tiny_vit_forward.1']
    %13 = vsyncpa [#allocation3], 0
    %s14 = scalar_lea.sflag [#allocation3], 1
    %15 = vsyncpa %s14, 0
    loop: start=0, step=1, limit=4
    $region2: #{tiny_vit_forward.1} parent=1 // loop_pre_header
      _
    $region3: #{tiny_vit_forward.1} parent=1 // loop_header
      %s17 = sphi 0, %s21
      %p18 = scmp.ge.s32.totalorder %s17, 4
      %s27 = sphi 0, %s29
      %s30 = sphi 0, %s27
      %s31 = sphi 0, %s30
      %s47 = sphi 0, %s31
      %s51 = sphi 0, %s51
      %s53 = sphi 0, %s51
      %s54 = sphi 0, %s53
      %s68 = sphi 0, %s54
      %s72 = sphi 0, %s72
      %s74 = sphi 0, %s72
      %s75 = sphi 0, %s74
      %s89 = sphi 0, %s75
      %s93 = sphi 0, %s93
      %s95 = sphi 0, %s93
      %s96 = sphi 0, %s95
      %s110 = sphi 0, %s96
      %s114 = sphi 0, %s114
      %s116 = sphi 0, %s114
      %s117 = sphi 0, %s116
      %s131 = sphi 0, %s117
      %s135 = sphi 0, %s135
      %s137 = sphi 0, %s135
      %s138 = sphi 0, %s137
      %s152 = sphi 0, %s138
      %s156 = sphi 0, %s156
      %s158 = sphi 0, %s156
      %s159 = sphi 0, %s158
      %s173 = sphi 0, %s159
      %s177 = sphi 0, %s177
      %s179 = sphi 0, %s177
      %s180 = sphi 0, %s179
      %s194 = sphi 0, %s180
      %s200 = sphi 0, %s202
      %s203 = sphi 0, %s200
      %s204 = sphi 0, %s203
      %s220 = sphi 0, %s204
    $region4: #{tiny_vit_forward.1} parent=1 // loop_header_branch
      %20 = sbr.rel (%p18) target = $region8
    $region5: #{tiny_vit_forward.1} parent=1 // loop_body
      %s22 = ssub.s32 %s17, 1
      %s23 = ssub.s32 %s17, 2
      %s24 = sadd.s32 %s17, 1
      %s25 = ssub.s32 %s17, %s24
      %p26 = scmp.eq.s32.totalorder %s25, 0
      %s28 = sadd.s32 %s27, 1
      %s29 = scalar_select %p26, %s27, %s28
      %p32 = pneg %p26
      %p33 = scmp.eq.s32.totalorder %s17, 1
      %p34 = por %p32, %p33
      %p35 = scmp.ne.s32.totalorder %s27, %s30
      %p36 = scmp.eq.s32.totalorder %s17, 0
      %p37 = por %p35, %p36
      %p38 = scmp.ne.s32.totalorder %s27, %s30
      %p39 = scmp.eq.s32.totalorder %s22, 1
      %p40 = por %p38, %p39
      %p41 = scmp.ne.s32.totalorder %s30, %s31
      %p42 = scmp.eq.s32.totalorder %s22, 0
      %p43 = por %p41, %p42
      %p44 = scmp.ne.s32.totalorder %s30, %s31
      %p45 = scmp.eq.s32.totalorder %s23, 1
      %p46 = por %p44, %p45
      %p48 = scmp.ne.s32.totalorder %s31, %s47
      %p49 = scmp.eq.s32.totalorder %s23, 0
      %p50 = por %p48, %p49
      %s52 = sadd.s32 %s51, 1
      %p55 = scmp.eq.s32.totalorder %s17, 1
      %p56 = scmp.ne.s32.totalorder %s51, %s53
      %p57 = scmp.eq.s32.totalorder %s17, 0
      %p58 = por %p56, %p57
      %p59 = scmp.ne.s32.totalorder %s51, %s53
      %p60 = scmp.eq.s32.totalorder %s22, 1
      %p61 = por %p59, %p60
      %p62 = scmp.ne.s32.totalorder %s53, %s54
      %p63 = scmp.eq.s32.totalorder %s22, 0
      %p64 = por %p62, %p63
      %p65 = scmp.ne.s32.totalorder %s53, %s54
      %p66 = scmp.eq.s32.totalorder %s23, 1
      %p67 = por %p65, %p66
      %p69 = scmp.ne.s32.totalorder %s54, %s68
      %p70 = scmp.eq.s32.totalorder %s23, 0
      %p71 = por %p69, %p70
      %s73 = sadd.s32 %s72, 1
      %p76 = scmp.eq.s32.totalorder %s17, 1
      %p77 = scmp.ne.s32.totalorder %s72, %s74
      %p78 = scmp.eq.s32.totalorder %s17, 0
      %p79 = por %p77, %p78
      %p80 = scmp.ne.s32.totalorder %s72, %s74
      %p81 = scmp.eq.s32.totalorder %s22, 1
      %p82 = por %p80, %p81
      %p83 = scmp.ne.s32.totalorder %s74, %s75
      %p84 = scmp.eq.s32.totalorder %s22, 0
      %p85 = por %p83, %p84
      %p86 = scmp.ne.s32.totalorder %s74, %s75
      %p87 = scmp.eq.s32.totalorder %s23, 1
      %p88 = por %p86, %p87
      %p90 = scmp.ne.s32.totalorder %s75, %s89
      %p91 = scmp.eq.s32.totalorder %s23, 0
      %p92 = por %p90, %p91
      %s94 = sadd.s32 %s93, 1
      %p97 = scmp.eq.s32.totalorder %s17, 1
      %p98 = scmp.ne.s32.totalorder %s93, %s95
      %p99 = scmp.eq.s32.totalorder %s17, 0
      %p100 = por %p98, %p99
      %p101 = scmp.ne.s32.totalorder %s93, %s95
      %p102 = scmp.eq.s32.totalorder %s22, 1
      %p103 = por %p101, %p102
      %p104 = scmp.ne.s32.totalorder %s95, %s96
      %p105 = scmp.eq.s32.totalorder %s22, 0
      %p106 = por %p104, %p105
      %p107 = scmp.ne.s32.totalorder %s95, %s96
      %p108 = scmp.eq.s32.totalorder %s23, 1
      %p109 = por %p107, %p108
      %p111 = scmp.ne.s32.totalorder %s96, %s110
      %p112 = scmp.eq.s32.totalorder %s23, 0
      %p113 = por %p111, %p112
      %s115 = sadd.s32 %s114, 1
      %p118 = scmp.eq.s32.totalorder %s17, 1
      %p119 = scmp.ne.s32.totalorder %s114, %s116
      %p120 = scmp.eq.s32.totalorder %s17, 0
      %p121 = por %p119, %p120
      %p122 = scmp.ne.s32.totalorder %s114, %s116
      %p123 = scmp.eq.s32.totalorder %s22, 1
      %p124 = por %p122, %p123
      %p125 = scmp.ne.s32.totalorder %s116, %s117
      %p126 = scmp.eq.s32.totalorder %s22, 0
      %p127 = por %p125, %p126
      %p128 = scmp.ne.s32.totalorder %s116, %s117
      %p129 = scmp.eq.s32.totalorder %s23, 1
      %p130 = por %p128, %p129
      %p132 = scmp.ne.s32.totalorder %s117, %s131
      %p133 = scmp.eq.s32.totalorder %s23, 0
      %p134 = por %p132, %p133
      %s136 = sadd.s32 %s135, 1
      %p139 = scmp.eq.s32.totalorder %s17, 1
      %p140 = scmp.ne.s32.totalorder %s135, %s137
      %p141 = scmp.eq.s32.totalorder %s17, 0
      %p142 = por %p140, %p141
      %p143 = scmp.ne.s32.totalorder %s135, %s137
      %p144 = scmp.eq.s32.totalorder %s22, 1
      %p145 = por %p143, %p144
      %p146 = scmp.ne.s32.totalorder %s137, %s138
      %p147 = scmp.eq.s32.totalorder %s22, 0
      %p148 = por %p146, %p147
      %p149 = scmp.ne.s32.totalorder %s137, %s138
      %p150 = scmp.eq.s32.totalorder %s23, 1
      %p151 = por %p149, %p150
      %p153 = scmp.ne.s32.totalorder %s138, %s152
      %p154 = scmp.eq.s32.totalorder %s23, 0
      %p155 = por %p153, %p154
      %s157 = sadd.s32 %s156, 1
      %p160 = scmp.eq.s32.totalorder %s17, 1
      %p161 = scmp.ne.s32.totalorder %s156, %s158
      %p162 = scmp.eq.s32.totalorder %s17, 0
      %p163 = por %p161, %p162
      %p164 = scmp.ne.s32.totalorder %s156, %s158
      %p165 = scmp.eq.s32.totalorder %s22, 1
      %p166 = por %p164, %p165
      %p167 = scmp.ne.s32.totalorder %s158, %s159
      %p168 = scmp.eq.s32.totalorder %s22, 0
      %p169 = por %p167, %p168
      %p170 = scmp.ne.s32.totalorder %s158, %s159
      %p171 = scmp.eq.s32.totalorder %s23, 1
      %p172 = por %p170, %p171
      %p174 = scmp.ne.s32.totalorder %s159, %s173
      %p175 = scmp.eq.s32.totalorder %s23, 0
      %p176 = por %p174, %p175
      %s178 = sadd.s32 %s177, 1
      %p181 = scmp.eq.s32.totalorder %s17, 1
      %p182 = scmp.ne.s32.totalorder %s177, %s179
      %p183 = scmp.eq.s32.totalorder %s17, 0
      %p184 = por %p182, %p183
      %p185 = scmp.ne.s32.totalorder %s177, %s179
      %p186 = scmp.eq.s32.totalorder %s22, 1
      %p187 = por %p185, %p186
      %p188 = scmp.ne.s32.totalorder %s179, %s180
      %p189 = scmp.eq.s32.totalorder %s22, 0
      %p190 = por %p188, %p189
      %p191 = scmp.ne.s32.totalorder %s179, %s180
      %p192 = scmp.eq.s32.totalorder %s23, 1
      %p193 = por %p191, %p192
      %p195 = scmp.ne.s32.totalorder %s180, %s194
      %p196 = scmp.eq.s32.totalorder %s23, 0
      %p197 = por %p195, %p196
      %s198 = ssub.s32 %s17, %s24
      %p199 = scmp.eq.s32.totalorder %s198, 0
      %s201 = sadd.s32 %s200, 1
      %s202 = scalar_select %p199, %s200, %s201
      %p205 = pneg %p199
      %p206 = scmp.eq.s32.totalorder %s17, 1
      %p207 = por %p205, %p206
      %p208 = scmp.ne.s32.totalorder %s200, %s203
      %p209 = scmp.eq.s32.totalorder %s17, 0
      %p210 = por %p208, %p209
      %p211 = scmp.ne.s32.totalorder %s200, %s203
      %p212 = scmp.eq.s32.totalorder %s22, 1
      %p213 = por %p211, %p212
      %p214 = scmp.ne.s32.totalorder %s203, %s204
      %p215 = scmp.eq.s32.totalorder %s22, 0
      %p216 = por %p214, %p215
      %p217 = scmp.ne.s32.totalorder %s203, %s204
      %p218 = scmp.eq.s32.totalorder %s23, 1
      %p219 = por %p217, %p218
      %p221 = scmp.ne.s32.totalorder %s204, %s220
      %p222 = scmp.eq.s32.totalorder %s23, 0
      %p223 = por %p221, %p222
      %p224 = scmp.le.s32.totalorder 1, %s17
      %p225 = scmp.lt.s32.totalorder %s17, 3
      %p226 = pnand %p224, %p225
      %p227 = pneg %p226
      // Predicated region
      $region9: #{tiny_vit_forward.1} parent=5 // pred_check
        _
      $region10: #{tiny_vit_forward.1} parent=5 // pred_check_branch
        %229 = sbr.rel (%p226) target = $region12
      $region11: #{tiny_vit_forward.1} parent=5 // pred_region
        %s230 = ssub.s32 %s17, 1
        // Predicated region
        $region13: #{tiny_vit_forward.1} parent=11 // pred_check
          %p231 = pneg %p64
        $region14: #{tiny_vit_forward.1} parent=11 // pred_check_branch
          %233 = sbr.rel (%p231) target = $region16
        $region15: #{tiny_vit_forward.1} parent=11 // pred_region
          _
        $region16: #{tiny_vit_forward.1} parent=11 // pred_fallthru
          _
        // Predicated region
        $region17: #{tiny_vit_forward.1} parent=11 // pred_check
          %p234 = pneg %p85
        $region18: #{tiny_vit_forward.1} parent=11 // pred_check_branch
          %236 = sbr.rel (%p234) target = $region20
        $region19: #{tiny_vit_forward.1} parent=11 // pred_region
          _
        $region20: #{tiny_vit_forward.1} parent=11 // pred_fallthru
          _
        // Predicated region
        $region21: #{tiny_vit_forward.1} parent=11 // pred_check
          %p237 = pneg %p106
        $region22: #{tiny_vit_forward.1} parent=11 // pred_check_branch
          %239 = sbr.rel (%p237) target = $region24
        $region23: #{tiny_vit_forward.1} parent=11 // pred_region
          _
        $region24: #{tiny_vit_forward.1} parent=11 // pred_fallthru
          _
        // Predicated region
        $region25: #{tiny_vit_forward.1} parent=11 // pred_check
          %p240 = pneg %p127
        $region26: #{tiny_vit_forward.1} parent=11 // pred_check_branch
          %242 = sbr.rel (%p240) target = $region28
        $region27: #{tiny_vit_forward.1} parent=11 // pred_region
          _
        $region28: #{tiny_vit_forward.1} parent=11 // pred_fallthru
          _
        // Predicated region
        $region29: #{tiny_vit_forward.1} parent=11 // pred_check
          %p243 = pneg %p148
        $region30: #{tiny_vit_forward.1} parent=11 // pred_check_branch
          %245 = sbr.rel (%p243) target = $region32
        $region31: #{tiny_vit_forward.1} parent=11 // pred_region
          _
        $region32: #{tiny_vit_forward.1} parent=11 // pred_fallthru
          _
        // Predicated region
        $region33: #{tiny_vit_forward.1} parent=11 // pred_check
          %p246 = pneg %p169
        $region34: #{tiny_vit_forward.1} parent=11 // pred_check_branch
          %248 = sbr.rel (%p246) target = $region36
        $region35: #{tiny_vit_forward.1} parent=11 // pred_region
          _
        $region36: #{tiny_vit_forward.1} parent=11 // pred_fallthru
          _
        // Predicated region
        $region37: #{tiny_vit_forward.1} parent=11 // pred_check
          %p249 = pneg %p190
        $region38: #{tiny_vit_forward.1} parent=11 // pred_check_branch
          %251 = sbr.rel (%p249) target = $region40
        $region39: #{tiny_vit_forward.1} parent=11 // pred_region
          _
        $region40: #{tiny_vit_forward.1} parent=11 // pred_fallthru
          _
      $region12: #{tiny_vit_forward.1} parent=5 // pred_fallthru
        _
      %p252 = scmp.lt.s32.totalorder %s17, 2
      // Predicated region
      $region41: #{tiny_vit_forward.1} parent=5 // pred_check
        %p253 = pneg %p252
      $region42: #{tiny_vit_forward.1} parent=5 // pred_check_branch
        %255 = sbr.rel (%p253) target = $region44
      $region43: #{tiny_vit_forward.1} parent=5 // pred_region
        // Predicated region
        $region45: #{tiny_vit_forward.1} parent=43 // pred_check
          %p256 = pneg %p37
        $region46: #{tiny_vit_forward.1} parent=43 // pred_check_branch
          %258 = sbr.rel (%p256) target = $region48
        $region47: #{tiny_vit_forward.1} parent=43 // pred_region
          %p259 = scmp.lt.s32.totalorder %s17, 1
          %s260 = scalar_select %p259, %s17, 1
          %s261 = smul.addr %s260, 2
          %s262 = smul.addr %s261, 8
          %s263 = scalar_lea.vmem %s0, %s262
        $region48: #{tiny_vit_forward.1} parent=43 // pred_fallthru
          _
      $region44: #{tiny_vit_forward.1} parent=5 // pred_fallthru
        _
      %p264 = scmp.le.s32.totalorder 1, %s17
      %p265 = scmp.lt.s32.totalorder %s17, 3
      %p266 = pnand %p264, %p265
      %p267 = pneg %p266
      // Predicated region
      $region49: #{tiny_vit_forward.1} parent=5 // pred_check
        _
      $region50: #{tiny_vit_forward.1} parent=5 // pred_check_branch
        %269 = sbr.rel (%p266) target = $region52
      $region51: #{tiny_vit_forward.1} parent=5 // pred_region
        %s270 = ssub.s32 %s17, 1
        %p271 = scmp.lt.s32.totalorder %s22, 1
        %s272 = scalar_select %p271, %s22, 1
        %s273 = smul.addr %s272, 2
        %s274 = smul.addr %s273, 8
        %s275 = scalar_lea.vmem %s0, %s274
        %p276 = pneg %p43
        %p277 = pneg %p40
        %p278 = pneg %p64
        %p279 = pneg %p61
        %p280 = pneg %p85
        %p281 = pneg %p82
        %p282 = pneg %p106
        %p283 = pneg %p103
        %p284 = pneg %p127
        %p285 = pneg %p124
        %p286 = pneg %p148
        %p287 = pneg %p145
        %p288 = pneg %p169
        %p289 = pneg %p166
        %p290 = pneg %p190
        %p291 = pneg %p187
        %p292 = pneg %p216
        %p293 = pneg %p213
        %s294 = sand.u32 %s203, 1
        %s295 = scalar_lea.sflag [#allocation3], %s294
        %s296 = sand.u32 %s203, 1
        %s297 = scalar_lea.vmem [#allocation2], %s296
        %p298 = scmp.lt.s32.totalorder %s22, 1
        %s299 = scalar_select %p298, %s22, 1
        %s300 = smul.addr %s299, 2
        %s301 = smul.addr %s300, 8
        %s302 = scalar_lea.vmem %s0, %s301
        %v303 = vld [vmem:[%s302] sm:$0x1f]
        %v304 = vld [vmem:[%s302 + $0x8] sm:$0x1f]
        %v305 = vld [vmem:[%s1] sm:$0xff]
        %v306 = vld [vmem:[%s1 + $0x8] sm:$0xff]
        %v307 = vld [vmem:[%s1 + $0x10] sm:$0xff]
        %v308 = vld [vmem:[%s1 + $0x18] sm:$0xff]
        %v309 = vld [vmem:[%s1 + $0x20] sm:$0xff]
        %v310 = vld [vmem:[%s1 + $0x28] sm:$0xff]
        %v311 = vld [vmem:[%s1 + $0x30] sm:$0xff]
        %v312 = vld [vmem:[%s1 + $0x38] sm:$0xff]
        %v313 = vld [vmem:[%s1 + $0x40] sm:$0xff]
        %v314 = vld [vmem:[%s1 + $0x48] sm:$0xff]
        %v315 = vld [vmem:[%s1 + $0x50] sm:$0xff]
        %v316 = vld [vmem:[%s1 + $0x58] sm:$0xff]
        %v317 = vld [vmem:[%s1 + $0x60] sm:$0xff]
        %v318 = vld [vmem:[%s1 + $0x68] sm:$0xff]
        %v319 = vld [vmem:[%s1 + $0x70] sm:$0xff]
        %v320 = vld [vmem:[%s1 + $0x78] sm:$0xff]
        %v321 = vld [vmem:[%s1 + $0x80] sm:$0xff]
        %v322 = vld [vmem:[%s1 + $0x88] sm:$0xff]
        %v323 = vld [vmem:[%s1 + $0x90] sm:$0xff]
        %v324 = vld [vmem:[%s1 + $0x98] sm:$0xff]
        %v325 = vld [vmem:[%s1 + $0xa0] sm:$0xff]
        %v326 = vld [vmem:[%s1 + $0xa8] sm:$0xff]
        %v327 = vld [vmem:[%s1 + $0xb0] sm:$0xff]
        %v328 = vld [vmem:[%s1 + $0xb8] sm:$0xff]
        %v329 = vld [vmem:[%s1 + $0xc0] sm:$0x1f]
        %vm330 = vcmask 523264
        %v332 = vsel %vm330, %v304, 0
        %334 = vmatprep.subr.mxu0 0.0
        %335 = vmatpush1.msra.mxu0 %v320
        %336 = vmatprep.subr.mxu0 0.0
        %337 = vmatpush1.msra.mxu0 %v319
        %338 = vmatprep.subr.mxu0 0.0
        %339 = vmatpush1.msra.mxu0 %v318
        %340 = vmatprep.subr.mxu0 0.0
        %341 = vmatpush1.msra.mxu0 %v317
        %342 = vmatprep.subr.mxu0 0.0
        %343 = vmatpush1.msra.mxu0 %v316
        %344 = vmatprep.subr.mxu0 0.0
        %345 = vmatpush1.msra.mxu0 %v315
        %346 = vmatprep.subr.mxu0 0.0
        %347 = vmatpush1.msra.mxu0 %v314
        %348 = vmatprep.subr.mxu0 0.0
        %349 = vmatpush1.msra.mxu0 %v313
        %350 = vmatprep.subr.mxu0 0.0
        %351 = vmatpush1.msra.mxu0 %v312
        %352 = vmatprep.subr.mxu0 0.0
        %353 = vmatpush1.msra.mxu0 %v311
        %354 = vmatprep.subr.mxu0 0.0
        %355 = vmatpush1.msra.mxu0 %v310
        %356 = vmatprep.subr.mxu0 0.0
        %357 = vmatpush1.msra.mxu0 %v309
        %358 = vmatprep.subr.mxu0 0.0
        %359 = vmatpush1.msra.mxu0 %v308
        %360 = vmatprep.subr.mxu0 0.0
        %361 = vmatpush1.msra.mxu0 %v307
        %362 = vmatprep.subr.mxu0 0.0
        %363 = vmatpush1.msra.mxu0 %v306
        %364 = vmatprep.subr.mxu0 0.0
        %365 = vmatpush1.msra.mxu0 %v305
        %366 = vmatprep.subr.mxu0 0.0
        %367 = vmatpush2.msra.mxu0 0.0
        %368 = vmatprep.subr.mxu0 0.0
        %369 = vmatpush2.msra.mxu0 0.0
        %370 = vmatprep.subr.mxu0 0.0
        %371 = vmatpush2.msra.mxu0 0.0
        %372 = vmatprep.subr.mxu0 0.0
        %373 = vmatpush2.msra.mxu0 0.0
        %374 = vmatprep.subr.mxu0 0.0
        %375 = vmatpush2.msra.mxu0 0.0
        %376 = vmatprep.subr.mxu0 0.0
        %377 = vmatpush2.msra.mxu0 0.0
        %378 = vmatprep.subr.mxu0 0.0
        %379 = vmatpush2.msra.mxu0 0.0
        %380 = vmatprep.subr.mxu0 0.0
        %381 = vmatpush2.msra.mxu0 0.0
        %382 = vmatprep.subr.mxu0 0.0
        %383 = vmatpush2.msra.mxu0 %v328
        %384 = vmatprep.subr.mxu0 0.0
        %385 = vmatpush2.msra.mxu0 %v327
        %386 = vmatprep.subr.mxu0 0.0
        %387 = vmatpush2.msra.mxu0 %v326
        %388 = vmatprep.subr.mxu0 0.0
        %389 = vmatpush2.msra.mxu0 %v325
        %390 = vmatprep.subr.mxu0 0.0
        %391 = vmatpush2.msra.mxu0 %v324
        %392 = vmatprep.subr.mxu0 0.0
        %393 = vmatpush2.msra.mxu0 %v323
        %394 = vmatprep.subr.mxu0 0.0
        %395 = vmatpush2.msra.mxu0 %v322
        %396 = vmatprep.subr.mxu0 0.0
        %397 = vmatpush2.msra.mxu0 %v321
        %398 = vmatprep.mubr.f32.mxu0 %v332
        %399 = vmatmul.mubr.f32.gmra.mxu0 %v303
        %v400 = vpop.f32.mrf.mxu0
        %v401 = vadd.f32 %v329, %v400
        %v402 = vpop.f32.mrf.mxu0
        %403 = vdwg.mxu0
        %v404 = vld [vmem:[%s4] sm:$0x1]
        %s405 = scalar_lea.vmem %s4, 1
        %v406 = vld [vmem:[%s405] sm:$0x1]
        %vm407 = vcmask 258048
        %v408 = vsel %vm407, %v401, 0.0
        %409 = vadd.xlane.f32.xlu0 %v408
        %v410 = vpop.xlane.xlu0 %409
        %v411 = vrcp.pop 32.0
        %v412 = vmul.f32 %v410, %v411
        %v413 = vsub.f32 %v401, %v412
        %v414 = vmul.f32 %v413, %v413
        %v415 = vsel %vm407, %v414, 0.0
        %416 = vadd.xlane.f32.xlu0 %v415
        %v417 = vpop.xlane.xlu0 %416
        %v418 = vmul.f32 %v417, %v411
        %v419 = vadd.f32 %v418, 1e-06
        %v420 = vrsqrt.pop %v419
        %v421 = vmul.f32 %v413, %v420
        %v423 = vlaneseq
        %v424 = vshrl.u32 %v423, 7
        %v425 = vsub.s32 0, %v424
        %v426 = vrot.slane %v404, %v425
        %v428 = vmul.f32 %v421, %v426
        %v430 = vlaneseq
        %v431 = vshrl.u32 %v430, 7
        %v432 = vsub.s32 0, %v431
        %v433 = vrot.slane %v406, %v432
        %v435 = vadd.f32 %v428, %v433
        %v436 = vld [vmem:[%s2] sm:$0xff]
        %v437 = vld [vmem:[%s2 + $0x8] sm:$0xff]
        %v438 = vld [vmem:[%s2 + $0x10] sm:$0xff]
        %v439 = vld [vmem:[%s2 + $0x18] sm:$0xff]
        %v440 = vld [vmem:[%s2 + $0x20] sm:$0x1]
        %v441 = vlaneseq
        %v442 = vshrl.u32 %v441, 7
        %v443 = vsub.s32 0, %v442
        %v444 = vrot.slane %v440, %v443
        %vm445 = vcmask 261120
        %v447 = vsel %vm445, %v435, 0
        %449 = vmatprep.subr.mxu0 0.0
        %450 = vmatpush1.msra.mxu0 0.0
        %451 = vmatprep.subr.mxu0 0.0
        %452 = vmatpush1.msra.mxu0 0.0
        %453 = vmatprep.subr.mxu0 0.0
        %454 = vmatpush1.msra.mxu0 0.0
        %455 = vmatprep.subr.mxu0 0.0
        %456 = vmatpush1.msra.mxu0 0.0
        %457 = vmatprep.subr.mxu0 0.0
        %458 = vmatpush1.msra.mxu0 0.0
        %459 = vmatprep.subr.mxu0 0.0
        %460 = vmatpush1.msra.mxu0 0.0
        %461 = vmatprep.subr.mxu0 0.0
        %462 = vmatpush1.msra.mxu0 0.0
        %463 = vmatprep.subr.mxu0 0.0
        %464 = vmatpush1.msra.mxu0 0.0
        %465 = vmatprep.subr.mxu0 0.0
        %466 = vmatpush1.msra.mxu0 0.0
        %467 = vmatprep.subr.mxu0 0.0
        %468 = vmatpush1.msra.mxu0 0.0
        %469 = vmatprep.subr.mxu0 0.0
        %470 = vmatpush1.msra.mxu0 0.0
        %471 = vmatprep.subr.mxu0 0.0
        %472 = vmatpush1.msra.mxu0 0.0
        %473 = vmatprep.subr.mxu0 0.0
        %474 = vmatpush1.msra.mxu0 %v439
        %475 = vmatprep.subr.mxu0 0.0
        %476 = vmatpush1.msra.mxu0 %v438
        %477 = vmatprep.subr.mxu0 0.0
        %478 = vmatpush1.msra.mxu0 %v437
        %479 = vmatprep.subr.mxu0 0.0
        %480 = vmatpush1.msra.mxu0 %v436
        %481 = vmatprep.subr.mxu0 0.0
        %482 = vmatpush2.msra.mxu0 0.0
        %483 = vmatprep.subr.mxu0 0.0
        %484 = vmatpush2.msra.mxu0 0.0
        %485 = vmatprep.subr.mxu0 0.0
        %486 = vmatpush2.msra.mxu0 0.0
        %487 = vmatprep.subr.mxu0 0.0
        %488 = vmatpush2.msra.mxu0 0.0
        %489 = vmatprep.subr.mxu0 0.0
        %490 = vmatpush2.msra.mxu0 0.0
        %491 = vmatprep.subr.mxu0 0.0
        %492 = vmatpush2.msra.mxu0 0.0
        %493 = vmatprep.subr.mxu0 0.0
        %494 = vmatpush2.msra.mxu0 0.0
        %495 = vmatprep.subr.mxu0 0.0
        %496 = vmatpush2.msra.mxu0 0.0
        %497 = vmatprep.subr.mxu0 0.0
        %498 = vmatpush2.msra.mxu0 0.0
        %499 = vmatprep.subr.mxu0 0.0
        %500 = vmatpush2.msra.mxu0 0.0
        %501 = vmatprep.subr.mxu0 0.0
        %502 = vmatpush2.msra.mxu0 0.0
        %503 = vmatprep.subr.mxu0 0.0
        %504 = vmatpush2.msra.mxu0 0.0
        %505 = vmatprep.subr.mxu0 0.0
        %506 = vmatpush2.msra.mxu0 0.0
        %507 = vmatprep.subr.mxu0 0.0
        %508 = vmatpush2.msra.mxu0 0.0
        %509 = vmatprep.subr.mxu0 0.0
        %510 = vmatpush2.msra.mxu0 0.0
        %511 = vmatprep.subr.mxu0 0.0
        %512 = vmatpush2.msra.mxu0 0.0
        %513 = vmatprep.mubr.f32.mxu0 0.0
        %514 = vmatmul.mubr.f32.gmra.mxu0 %v447
        %v515 = vpop.f32.mrf.mxu0
        %v516 = vadd.f32 %v444, %v515
        %v517 = vpop.f32.mrf.mxu0
        %518 = vdwg.mxu0
        %s519 = scalar_lea.vmem %s2, 160
        %v520 = vld [vmem:[%s519] sm:$0xff]
        %v521 = vld [vmem:[%s519 + $0x8] sm:$0xff]
        %v522 = vld [vmem:[%s519 + $0x10] sm:$0xff]
        %v523 = vld [vmem:[%s519 + $0x18] sm:$0xff]
        %v524 = vld [vmem:[%s519 + $0x20] sm:$0x1]
        %v525 = vlaneseq
        %v526 = vshrl.u32 %v525, 7
        %v527 = vsub.s32 0, %v526
        %v528 = vrot.slane %v524, %v527
        %529 = vmatprep.subr.mxu0 0.0
        %530 = vmatpush1.msra.mxu0 0.0
        %531 = vmatprep.subr.mxu0 0.0
        %532 = vmatpush1.msra.mxu0 0.0
        %533 = vmatprep.subr.mxu0 0.0
        %534 = vmatpush1.msra.mxu0 0.0
        %535 = vmatprep.subr.mxu0 0.0
        %536 = vmatpush1.msra.mxu0 0.0
        %537 = vmatprep.subr.mxu0 0.0
        %538 = vmatpush1.msra.mxu0 0.0
        %539 = vmatprep.subr.mxu0 0.0
        %540 = vmatpush1.msra.mxu0 0.0
        %541 = vmatprep.subr.mxu0 0.0
        %542 = vmatpush1.msra.mxu0 0.0
        %543 = vmatprep.subr.mxu0 0.0
        %544 = vmatpush1.msra.mxu0 0.0
        %545 = vmatprep.subr.mxu0 0.0
        %546 = vmatpush1.msra.mxu0 0.0
        %547 = vmatprep.subr.mxu0 0.0
        %548 = vmatpush1.msra.mxu0 0.0
        %549 = vmatprep.subr.mxu0 0.0
        %550 = vmatpush1.msra.mxu0 0.0
        %551 = vmatprep.subr.mxu0 0.0
        %552 = vmatpush1.msra.mxu0 0.0
        %553 = vmatprep.subr.mxu0 0.0
        %554 = vmatpush1.msra.mxu0 %v523
        %555 = vmatprep.subr.mxu0 0.0
        %556 = vmatpush1.msra.mxu0 %v522
        %557 = vmatprep.subr.mxu0 0.0
        %558 = vmatpush1.msra.mxu0 %v521
        %559 = vmatprep.subr.mxu0 0.0
        %560 = vmatpush1.msra.mxu0 %v520
        %561 = vmatprep.subr.mxu0 0.0
        %562 = vmatpush2.msra.mxu0 0.0
        %563 = vmatprep.subr.mxu0 0.0
        %564 = vmatpush2.msra.mxu0 0.0
        %565 = vmatprep.subr.mxu0 0.0
        %566 = vmatpush2.msra.mxu0 0.0
        %567 = vmatprep.subr.mxu0 0.0
        %568 = vmatpush2.msra.mxu0 0.0
        %569 = vmatprep.subr.mxu0 0.0
        %570 = vmatpush2.msra.mxu0 0.0
        %571 = vmatprep.subr.mxu0 0.0
        %572 = vmatpush2.msra.mxu0 0.0
        %573 = vmatprep.subr.mxu0 0.0
        %574 = vmatpush2.msra.mxu0 0.0
        %575 = vmatprep.subr.mxu0 0.0
        %576 = vmatpush2.msra.mxu0 0.0
        %577 = vmatprep.subr.mxu0 0.0
        %578 = vmatpush2.msra.mxu0 0.0
        %579 = vmatprep.subr.mxu0 0.0
        %580 = vmatpush2.msra.mxu0 0.0
        %581 = vmatprep.subr.mxu0 0.0
        %582 = vmatpush2.msra.mxu0 0.0
        %583 = vmatprep.subr.mxu0 0.0
        %584 = vmatpush2.msra.mxu0 0.0
        %585 = vmatprep.subr.mxu0 0.0
        %586 = vmatpush2.msra.mxu0 0.0
        %587 = vmatprep.subr.mxu0 0.0
        %588 = vmatpush2.msra.mxu0 0.0
        %589 = vmatprep.subr.mxu0 0.0
        %590 = vmatpush2.msra.mxu0 0.0
        %591 = vmatprep.subr.mxu0 0.0
        %592 = vmatpush2.msra.mxu0 0.0
        %593 = vmatprep.mubr.f32.mxu0 0.0
        %594 = vmatmul.mubr.f32.gmra.mxu0 %v447
        %v595 = vpop.f32.mrf.mxu0
        %v596 = vadd.f32 %v528, %v595
        %v597 = vpop.f32.mrf.mxu0
        %598 = vdwg.mxu0
        %s599 = scalar_lea.vmem %s2, 320
        %v600 = vld [vmem:[%s599] sm:$0xff]
        %v601 = vld [vmem:[%s599 + $0x8] sm:$0xff]
        %v602 = vld [vmem:[%s599 + $0x10] sm:$0xff]
        %v603 = vld [vmem:[%s599 + $0x18] sm:$0xff]
        %v604 = vld [vmem:[%s599 + $0x20] sm:$0x1]
        %v605 = vlaneseq
        %v606 = vshrl.u32 %v605, 7
        %v607 = vsub.s32 0, %v606
        %v608 = vrot.slane %v604, %v607
        %609 = vmatprep.subr.mxu0 0.0
        %610 = vmatpush1.msra.mxu0 0.0
        %611 = vmatprep.subr.mxu0 0.0
        %612 = vmatpush1.msra.mxu0 0.0
        %613 = vmatprep.subr.mxu0 0.0
        %614 = vmatpush1.msra.mxu0 0.0
        %615 = vmatprep.subr.mxu0 0.0
        %616 = vmatpush1.msra.mxu0 0.0
        %617 = vmatprep.subr.mxu0 0.0
        %618 = vmatpush1.msra.mxu0 0.0
        %619 = vmatprep.subr.mxu0 0.0
        %620 = vmatpush1.msra.mxu0 0.0
        %621 = vmatprep.subr.mxu0 0.0
        %622 = vmatpush1.msra.mxu0 0.0
        %623 = vmatprep.subr.mxu0 0.0
        %624 = vmatpush1.msra.mxu0 0.0
        %625 = vmatprep.subr.mxu0 0.0
        %626 = vmatpush1.msra.mxu0 0.0
        %627 = vmatprep.subr.mxu0 0.0
        %628 = vmatpush1.msra.mxu0 0.0
        %629 = vmatprep.subr.mxu0 0.0
        %630 = vmatpush1.msra.mxu0 0.0
        %631 = vmatprep.subr.mxu0 0.0
        %632 = vmatpush1.msra.mxu0 0.0
        %633 = vmatprep.subr.mxu0 0.0
        %634 = vmatpush1.msra.mxu0 %v603
        %635 = vmatprep.subr.mxu0 0.0
        %636 = vmatpush1.msra.mxu0 %v602
        %637 = vmatprep.subr.mxu0 0.0
        %638 = vmatpush1.msra.mxu0 %v601
        %639 = vmatprep.subr.mxu0 0.0
        %640 = vmatpush1.msra.mxu0 %v600
        %641 = vmatprep.subr.mxu0 0.0
        %642 = vmatpush2.msra.mxu0 0.0
        %643 = vmatprep.subr.mxu0 0.0
        %644 = vmatpush2.msra.mxu0 0.0
        %645 = vmatprep.subr.mxu0 0.0
        %646 = vmatpush2.msra.mxu0 0.0
        %647 = vmatprep.subr.mxu0 0.0
        %648 = vmatpush2.msra.mxu0 0.0
        %649 = vmatprep.subr.mxu0 0.0
        %650 = vmatpush2.msra.mxu0 0.0
        %651 = vmatprep.subr.mxu0 0.0
        %652 = vmatpush2.msra.mxu0 0.0
        %653 = vmatprep.subr.mxu0 0.0
        %654 = vmatpush2.msra.mxu0 0.0
        %655 = vmatprep.subr.mxu0 0.0
        %656 = vmatpush2.msra.mxu0 0.0
        %657 = vmatprep.subr.mxu0 0.0
        %658 = vmatpush2.msra.mxu0 0.0
        %659 = vmatprep.subr.mxu0 0.0
        %660 = vmatpush2.msra.mxu0 0.0
        %661 = vmatprep.subr.mxu0 0.0
        %662 = vmatpush2.msra.mxu0 0.0
        %663 = vmatprep.subr.mxu0 0.0
        %664 = vmatpush2.msra.mxu0 0.0
        %665 = vmatprep.subr.mxu0 0.0
        %666 = vmatpush2.msra.mxu0 0.0
        %667 = vmatprep.subr.mxu0 0.0
        %668 = vmatpush2.msra.mxu0 0.0
        %669 = vmatprep.subr.mxu0 0.0
        %670 = vmatpush2.msra.mxu0 0.0
        %671 = vmatprep.subr.mxu0 0.0
        %672 = vmatpush2.msra.mxu0 0.0
        %673 = vmatprep.mubr.f32.mxu0 0.0
        %674 = vmatmul.mubr.f32.gmra.mxu0 %v447
        %v675 = vpop.f32.mrf.mxu0
        %v676 = vadd.f32 %v608, %v675
        %v677 = vpop.f32.mrf.mxu0
        %678 = vdwg.mxu0
        %vm679 = vcmask 64512
        %v681 = vsel %vm679, %v516, 0
        %v684 = vsel %vm679, %v596, 0
        %686 = vmatprep.subr.mxu0 0.0
        %687 = vmatpush1.xpose.msra.mxu0 0.0
        %688 = vmatprep.subr.mxu0 0.0
        %689 = vmatpush1.xpose.msra.mxu0 0.0
        %690 = vmatprep.subr.mxu0 0.0
        %691 = vmatpush1.xpose.msra.mxu0 0.0
        %692 = vmatprep.subr.mxu0 0.0
        %693 = vmatpush1.xpose.msra.mxu0 0.0
        %694 = vmatprep.subr.mxu0 0.0
        %695 = vmatpush1.xpose.msra.mxu0 0.0
        %696 = vmatprep.subr.mxu0 0.0
        %697 = vmatpush1.xpose.msra.mxu0 0.0
        %698 = vmatprep.subr.mxu0 0.0
        %699 = vmatpush1.xpose.msra.mxu0 0.0
        %700 = vmatprep.subr.mxu0 0.0
        %701 = vmatpush1.xpose.msra.mxu0 0.0
        %702 = vmatprep.subr.mxu0 0.0
        %703 = vmatpush1.xpose.msra.mxu0 0.0
        %704 = vmatprep.subr.mxu0 0.0
        %705 = vmatpush1.xpose.msra.mxu0 0.0
        %706 = vmatprep.subr.mxu0 0.0
        %707 = vmatpush1.xpose.msra.mxu0 0.0
        %708 = vmatprep.subr.mxu0 0.0
        %709 = vmatpush1.xpose.msra.mxu0 0.0
        %710 = vmatprep.subr.mxu0 0.0
        %711 = vmatpush1.xpose.msra.mxu0 0.0
        %712 = vmatprep.subr.mxu0 0.0
        %713 = vmatpush1.xpose.msra.mxu0 0.0
        %714 = vmatprep.subr.mxu0 0.0
        %715 = vmatpush1.xpose.msra.mxu0 0.0
        %716 = vmatprep.subr.mxu0 0.0
        %717 = vmatpush1.xpose.msra.mxu0 %v684
        %718 = vmatprep.subr.mxu0 0.0
        %719 = vmatpush2.xpose.msra.mxu0 0.0
        %720 = vmatprep.subr.mxu0 0.0
        %721 = vmatpush2.xpose.msra.mxu0 0.0
        %722 = vmatprep.subr.mxu0 0.0
        %723 = vmatpush2.xpose.msra.mxu0 0.0
        %724 = vmatprep.subr.mxu0 0.0
        %725 = vmatpush2.xpose.msra.mxu0 0.0
        %726 = vmatprep.subr.mxu0 0.0
        %727 = vmatpush2.xpose.msra.mxu0 0.0
        %728 = vmatprep.subr.mxu0 0.0
        %729 = vmatpush2.xpose.msra.mxu0 0.0
        %730 = vmatprep.subr.mxu0 0.0
        %731 = vmatpush2.xpose.msra.mxu0 0.0
        %732 = vmatprep.subr.mxu0 0.0
        %733 = vmatpush2.xpose.msra.mxu0 0.0
        %734 = vmatprep.subr.mxu0 0.0
        %735 = vmatpush2.xpose.msra.mxu0 0.0
        %736 = vmatprep.subr.mxu0 0.0
        %737 = vmatpush2.xpose.msra.mxu0 0.0
        %738 = vmatprep.subr.mxu0 0.0
        %739 = vmatpush2.xpose.msra.mxu0 0.0
        %740 = vmatprep.subr.mxu0 0.0
        %741 = vmatpush2.xpose.msra.mxu0 0.0
        %742 = vmatprep.subr.mxu0 0.0
        %743 = vmatpush2.xpose.msra.mxu0 0.0
        %744 = vmatprep.subr.mxu0 0.0
        %745 = vmatpush2.xpose.msra.mxu0 0.0
        %746 = vmatprep.subr.mxu0 0.0
        %747 = vmatpush2.xpose.msra.mxu0 0.0
        %748 = vmatprep.subr.mxu0 0.0
        %749 = vmatpush2.xpose.msra.mxu0 0.0
        %750 = vmatprep.mubr.f32.mxu0 0.0
        %751 = vmatmul.mubr.f32.gmra.mxu0 %v681
        %v752 = vpop.f32.mrf.mxu0
        %v753 = vadd.f32 0.0, %v752
        %v754 = vpop.f32.mrf.mxu0
        %755 = vdwg.mxu0
        %vm756 = vcmask 36864
        %v757 = vsel %vm756, %v753, -inf
        %758 = vmax.xlane.f32.xlu0 %v757
        %v759 = vpop.xlane.xlu0 %758
        %v760 = vsub.f32 %v753, %v759
        %v761 = vmul.f32 %v760, 1.442695
        %v762 = vpow.pop %v761
        %v763 = vsel %vm756, %v762, 0.0
        %764 = vadd.xlane.f32.xlu0 %v763
        %v765 = vpop.xlane.xlu0 %764
        %v766 = vrcp.pop %v765
        %v767 = vmul.f32 %v762, %v766
        %vm768 = vcmask 39936
        %v770 = vsel %vm768, %v767, 0
        %vm772 = vcmask 1044480
        %v774 = vsel %vm772, %v676, 0
        %776 = vmatprep.subr.mxu0 0.0
        %777 = vmatpush1.msra.mxu0 0.0
        %778 = vmatprep.subr.mxu0 0.0
        %779 = vmatpush1.msra.mxu0 0.0
        %780 = vmatprep.subr.mxu0 0.0
        %781 = vmatpush1.msra.mxu0 0.0
        %782 = vmatprep.subr.mxu0 0.0
        %783 = vmatpush1.msra.mxu0 0.0
        %784 = vmatprep.subr.mxu0 0.0
        %785 = vmatpush1.msra.mxu0 0.0
        %786 = vmatprep.subr.mxu0 0.0
        %787 = vmatpush1.msra.mxu0 0.0
        %788 = vmatprep.subr.mxu0 0.0
        %789 = vmatpush1.msra.mxu0 0.0
        %790 = vmatprep.subr.mxu0 0.0
        %791 = vmatpush1.msra.mxu0 0.0
        %792 = vmatprep.subr.mxu0 0.0
        %793 = vmatpush1.msra.mxu0 0.0
        %794 = vmatprep.subr.mxu0 0.0
        %795 = vmatpush1.msra.mxu0 0.0
        %796 = vmatprep.subr.mxu0 0.0
        %797 = vmatpush1.msra.mxu0 0.0
        %798 = vmatprep.subr.mxu0 0.0
        %799 = vmatpush1.msra.mxu0 0.0
        %800 = vmatprep.subr.mxu0 0.0
        %801 = vmatpush1.msra.mxu0 0.0
        %802 = vmatprep.subr.mxu0 0.0
        %803 = vmatpush1.msra.mxu0 0.0
        %804 = vmatprep.subr.mxu0 0.0
        %805 = vmatpush1.msra.mxu0 0.0
        %806 = vmatprep.subr.mxu0 0.0
        %807 = vmatpush1.msra.mxu0 %v774
        %808 = vmatprep.subr.mxu0 0.0
        %809 = vmatpush2.msra.mxu0 0.0
        %810 = vmatprep.subr.mxu0 0.0
        %811 = vmatpush2.msra.mxu0 0.0
        %812 = vmatprep.subr.mxu0 0.0
        %813 = vmatpush2.msra.mxu0 0.0
        %814 = vmatprep.subr.mxu0 0.0
        %815 = vmatpush2.msra.mxu0 0.0
        %816 = vmatprep.subr.mxu0 0.0
        %817 = vmatpush2.msra.mxu0 0.0
        %818 = vmatprep.subr.mxu0 0.0
        %819 = vmatpush2.msra.mxu0 0.0
        %820 = vmatprep.subr.mxu0 0.0
        %821 = vmatpush2.msra.mxu0 0.0
        %822 = vmatprep.subr.mxu0 0.0
        %823 = vmatpush2.msra.mxu0 0.0
        %824 = vmatprep.subr.mxu0 0.0
        %825 = vmatpush2.msra.mxu0 0.0
        %826 = vmatprep.subr.mxu0 0.0
        %827 = vmatpush2.msra.mxu0 0.0
        %828 = vmatprep.subr.mxu0 0.0
        %829 = vmatpush2.msra.mxu0 0.0
        %830 = vmatprep.subr.mxu0 0.0
        %831 = vmatpush2.msra.mxu0 0.0
        %832 = vmatprep.subr.mxu0 0.0
        %833 = vmatpush2.msra.mxu0 0.0
        %834 = vmatprep.subr.mxu0 0.0
        %835 = vmatpush2.msra.mxu0 0.0
        %836 = vmatprep.subr.mxu0 0.0
        %837 = vmatpush2.msra.mxu0 0.0
        %838 = vmatprep.subr.mxu0 0.0
        %839 = vmatpush2.msra.mxu0 0.0
        %840 = vmatprep.mubr.f32.mxu0 0.0
        %841 = vmatmul.mubr.f32.gmra.mxu0 %v770
        %v842 = vpop.f32.mrf.mxu0
        %v843 = vadd.f32 0.0, %v842
        %v844 = vpop.f32.mrf.mxu0
        %845 = vdwg.mxu0
        %v846 = vld [vmem:[%s3] sm:$0xff]
        %s847 = scalar_lea.vmem %s2, 40
        %v848 = vld [vmem:[%s847] sm:$0xff]
        %v849 = vld [vmem:[%s847 + $0x8] sm:$0xff]
        %v850 = vld [vmem:[%s847 + $0x10] sm:$0xff]
        %v851 = vld [vmem:[%s847 + $0x18] sm:$0xff]
        %v852 = vld [vmem:[%s847 + $0x20] sm:$0x1]
        %v853 = vlaneseq
        %v854 = vshrl.u32 %v853, 7
        %v855 = vsub.s32 0, %v854
        %v856 = vrot.slane %v852, %v855
        %857 = vmatprep.subr.mxu0 0.0
        %858 = vmatpush1.msra.mxu0 0.0
        %859 = vmatprep.subr.mxu0 0.0
        %860 = vmatpush1.msra.mxu0 0.0
        %861 = vmatprep.subr.mxu0 0.0
        %862 = vmatpush1.msra.mxu0 0.0
        %863 = vmatprep.subr.mxu0 0.0
        %864 = vmatpush1.msra.mxu0 0.0
        %865 = vmatprep.subr.mxu0 0.0
        %866 = vmatpush1.msra.mxu0 0.0
        %867 = vmatprep.subr.mxu0 0.0
        %868 = vmatpush1.msra.mxu0 0.0
        %869 = vmatprep.subr.mxu0 0.0
        %870 = vmatpush1.msra.mxu0 0.0
        %871 = vmatprep.subr.mxu0 0.0
        %872 = vmatpush1.msra.mxu0 0.0
        %873 = vmatprep.subr.mxu0 0.0
        %874 = vmatpush1.msra.mxu0 0.0
        %875 = vmatprep.subr.mxu0 0.0
        %876 = vmatpush1.msra.mxu0 0.0
        %877 = vmatprep.subr.mxu0 0.0
        %878 = vmatpush1.msra.mxu0 0.0
        %879 = vmatprep.subr.mxu0 0.0
        %880 = vmatpush1.msra.mxu0 0.0
        %881 = vmatprep.subr.mxu0 0.0
        %882 = vmatpush1.msra.mxu0 %v851
        %883 = vmatprep.subr.mxu0 0.0
        %884 = vmatpush1.msra.mxu0 %v850
        %885 = vmatprep.subr.mxu0 0.0
        %886 = vmatpush1.msra.mxu0 %v849
        %887 = vmatprep.subr.mxu0 0.0
        %888 = vmatpush1.msra.mxu0 %v848
        %889 = vmatprep.subr.mxu0 0.0
        %890 = vmatpush2.msra.mxu0 0.0
        %891 = vmatprep.subr.mxu0 0.0
        %892 = vmatpush2.msra.mxu0 0.0
        %893 = vmatprep.subr.mxu0 0.0
        %894 = vmatpush2.msra.mxu0 0.0
        %895 = vmatprep.subr.mxu0 0.0
        %896 = vmatpush2.msra.mxu0 0.0
        %897 = vmatprep.subr.mxu0 0.0
        %898 = vmatpush2.msra.mxu0 0.0
        %899 = vmatprep.subr.mxu0 0.0
        %900 = vmatpush2.msra.mxu0 0.0
        %901 = vmatprep.subr.mxu0 0.0
        %902 = vmatpush2.msra.mxu0 0.0
        %903 = vmatprep.subr.mxu0 0.0
        %904 = vmatpush2.msra.mxu0 0.0
        %905 = vmatprep.subr.mxu0 0.0
        %906 = vmatpush2.msra.mxu0 0.0
        %907 = vmatprep.subr.mxu0 0.0
        %908 = vmatpush2.msra.mxu0 0.0
        %909 = vmatprep.subr.mxu0 0.0
        %910 = vmatpush2.msra.mxu0 0.0
        %911 = vmatprep.subr.mxu0 0.0
        %912 = vmatpush2.msra.mxu0 0.0
        %913 = vmatprep.subr.mxu0 0.0
        %914 = vmatpush2.msra.mxu0 0.0
        %915 = vmatprep.subr.mxu0 0.0
        %916 = vmatpush2.msra.mxu0 0.0
        %917 = vmatprep.subr.mxu0 0.0
        %918 = vmatpush2.msra.mxu0 0.0
        %919 = vmatprep.subr.mxu0 0.0
        %920 = vmatpush2.msra.mxu0 0.0
        %921 = vmatprep.mubr.f32.mxu0 0.0
        %922 = vmatmul.mubr.f32.gmra.mxu0 %v447
        %v923 = vpop.f32.mrf.mxu0
        %v924 = vadd.f32 %v856, %v923
        %v925 = vpop.f32.mrf.mxu0
        %926 = vdwg.mxu0
        %s927 = scalar_lea.vmem %s2, 200
        %v928 = vld [vmem:[%s927] sm:$0xff]
        %v929 = vld [vmem:[%s927 + $0x8] sm:$0xff]
        %v930 = vld [vmem:[%s927 + $0x10] sm:$0xff]
        %v931 = vld [vmem:[%s927 + $0x18] sm:$0xff]
        %v932 = vld [vmem:[%s927 + $0x20] sm:$0x1]
        %v933 = vlaneseq
        %v934 = vshrl.u32 %v933, 7
        %v935 = vsub.s32 0, %v934
        %v936 = vrot.slane %v932, %v935
        %937 = vmatprep.subr.mxu0 0.0
        %938 = vmatpush1.msra.mxu0 0.0
        %939 = vmatprep.subr.mxu0 0.0
        %940 = vmatpush1.msra.mxu0 0.0
        %941 = vmatprep.subr.mxu0 0.0
        %942 = vmatpush1.msra.mxu0 0.0
        %943 = vmatprep.subr.mxu0 0.0
        %944 = vmatpush1.msra.mxu0 0.0
        %945 = vmatprep.subr.mxu0 0.0
        %946 = vmatpush1.msra.mxu0 0.0
        %947 = vmatprep.subr.mxu0 0.0
        %948 = vmatpush1.msra.mxu0 0.0
        %949 = vmatprep.subr.mxu0 0.0
        %950 = vmatpush1.msra.mxu0 0.0
        %951 = vmatprep.subr.mxu0 0.0
        %952 = vmatpush1.msra.mxu0 0.0
        %953 = vmatprep.subr.mxu0 0.0
        %954 = vmatpush1.msra.mxu0 0.0
        %955 = vmatprep.subr.mxu0 0.0
        %956 = vmatpush1.msra.mxu0 0.0
        %957 = vmatprep.subr.mxu0 0.0
        %958 = vmatpush1.msra.mxu0 0.0
        %959 = vmatprep.subr.mxu0 0.0
        %960 = vmatpush1.msra.mxu0 0.0
        %961 = vmatprep.subr.mxu0 0.0
        %962 = vmatpush1.msra.mxu0 %v931
        %963 = vmatprep.subr.mxu0 0.0
        %964 = vmatpush1.msra.mxu0 %v930
        %965 = vmatprep.subr.mxu0 0.0
        %966 = vmatpush1.msra.mxu0 %v929
        %967 = vmatprep.subr.mxu0 0.0
        %968 = vmatpush1.msra.mxu0 %v928
        %969 = vmatprep.subr.mxu0 0.0
        %970 = vmatpush2.msra.mxu0 0.0
        %971 = vmatprep.subr.mxu0 0.0
        %972 = vmatpush2.msra.mxu0 0.0
        %973 = vmatprep.subr.mxu0 0.0
        %974 = vmatpush2.msra.mxu0 0.0
        %975 = vmatprep.subr.mxu0 0.0
        %976 = vmatpush2.msra.mxu0 0.0
        %977 = vmatprep.subr.mxu0 0.0
        %978 = vmatpush2.msra.mxu0 0.0
        %979 = vmatprep.subr.mxu0 0.0
        %980 = vmatpush2.msra.mxu0 0.0
        %981 = vmatprep.subr.mxu0 0.0
        %982 = vmatpush2.msra.mxu0 0.0
        %983 = vmatprep.subr.mxu0 0.0
        %984 = vmatpush2.msra.mxu0 0.0
        %985 = vmatprep.subr.mxu0 0.0
        %986 = vmatpush2.msra.mxu0 0.0
        %987 = vmatprep.subr.mxu0 0.0
        %988 = vmatpush2.msra.mxu0 0.0
        %989 = vmatprep.subr.mxu0 0.0
        %990 = vmatpush2.msra.mxu0 0.0
        %991 = vmatprep.subr.mxu0 0.0
        %992 = vmatpush2.msra.mxu0 0.0
        %993 = vmatprep.subr.mxu0 0.0
        %994 = vmatpush2.msra.mxu0 0.0
        %995 = vmatprep.subr.mxu0 0.0
        %996 = vmatpush2.msra.mxu0 0.0
        %997 = vmatprep.subr.mxu0 0.0
        %998 = vmatpush2.msra.mxu0 0.0
        %999 = vmatprep.subr.mxu0 0.0
        %1000 = vmatpush2.msra.mxu0 0.0
        %1001 = vmatprep.mubr.f32.mxu0 0.0
        %1002 = vmatmul.mubr.f32.gmra.mxu0 %v447
        %v1003 = vpop.f32.mrf.mxu0
        %v1004 = vadd.f32 %v936, %v1003
        %v1005 = vpop.f32.mrf.mxu0
        %1006 = vdwg.mxu0
        %s1007 = scalar_lea.vmem %s2, 360
        %v1008 = vld [vmem:[%s1007] sm:$0xff]
        %v1009 = vld [vmem:[%s1007 + $0x8] sm:$0xff]
        %v1010 = vld [vmem:[%s1007 + $0x10] sm:$0xff]
        %v1011 = vld [vmem:[%s1007 + $0x18] sm:$0xff]
        %v1012 = vld [vmem:[%s1007 + $0x20] sm:$0x1]
        %v1013 = vlaneseq
        %v1014 = vshrl.u32 %v1013, 7
        %v1015 = vsub.s32 0, %v1014
        %v1016 = vrot.slane %v1012, %v1015
        %1017 = vmatprep.subr.mxu0 0.0
        %1018 = vmatpush1.msra.mxu0 0.0
        %1019 = vmatprep.subr.mxu0 0.0
        %1020 = vmatpush1.msra.mxu0 0.0
        %1021 = vmatprep.subr.mxu0 0.0
        %1022 = vmatpush1.msra.mxu0 0.0
        %1023 = vmatprep.subr.mxu0 0.0
        %1024 = vmatpush1.msra.mxu0 0.0
        %1025 = vmatprep.subr.mxu0 0.0
        %1026 = vmatpush1.msra.mxu0 0.0
        %1027 = vmatprep.subr.mxu0 0.0
        %1028 = vmatpush1.msra.mxu0 0.0
        %1029 = vmatprep.subr.mxu0 0.0
        %1030 = vmatpush1.msra.mxu0 0.0
        %1031 = vmatprep.subr.mxu0 0.0
        %1032 = vmatpush1.msra.mxu0 0.0
        %1033 = vmatprep.subr.mxu0 0.0
        %1034 = vmatpush1.msra.mxu0 0.0
        %1035 = vmatprep.subr.mxu0 0.0
        %1036 = vmatpush1.msra.mxu0 0.0
        %1037 = vmatprep.subr.mxu0 0.0
        %1038 = vmatpush1.msra.mxu0 0.0
        %1039 = vmatprep.subr.mxu0 0.0
        %1040 = vmatpush1.msra.mxu0 0.0
        %1041 = vmatprep.subr.mxu0 0.0
        %1042 = vmatpush1.msra.mxu0 %v1011
        %1043 = vmatprep.subr.mxu0 0.0
        %1044 = vmatpush1.msra.mxu0 %v1010
        %1045 = vmatprep.subr.mxu0 0.0
        %1046 = vmatpush1.msra.mxu0 %v1009
        %1047 = vmatprep.subr.mxu0 0.0
        %1048 = vmatpush1.msra.mxu0 %v1008
        %1049 = vmatprep.subr.mxu0 0.0
        %1050 = vmatpush2.msra.mxu0 0.0
        %1051 = vmatprep.subr.mxu0 0.0
        %1052 = vmatpush2.msra.mxu0 0.0
        %1053 = vmatprep.subr.mxu0 0.0
        %1054 = vmatpush2.msra.mxu0 0.0
        %1055 = vmatprep.subr.mxu0 0.0
        %1056 = vmatpush2.msra.mxu0 0.0
        %1057 = vmatprep.subr.mxu0 0.0
        %1058 = vmatpush2.msra.mxu0 0.0
        %1059 = vmatprep.subr.mxu0 0.0
        %1060 = vmatpush2.msra.mxu0 0.0
        %1061 = vmatprep.subr.mxu0 0.0
        %1062 = vmatpush2.msra.mxu0 0.0
        %1063 = vmatprep.subr.mxu0 0.0
        %1064 = vmatpush2.msra.mxu0 0.0
        %1065 = vmatprep.subr.mxu0 0.0
        %1066 = vmatpush2.msra.mxu0 0.0
        %1067 = vmatprep.subr.mxu0 0.0
        %1068 = vmatpush2.msra.mxu0 0.0
        %1069 = vmatprep.subr.mxu0 0.0
        %1070 = vmatpush2.msra.mxu0 0.0
        %1071 = vmatprep.subr.mxu0 0.0
        %1072 = vmatpush2.msra.mxu0 0.0
        %1073 = vmatprep.subr.mxu0 0.0
        %1074 = vmatpush2.msra.mxu0 0.0
        %1075 = vmatprep.subr.mxu0 0.0
        %1076 = vmatpush2.msra.mxu0 0.0
        %1077 = vmatprep.subr.mxu0 0.0
        %1078 = vmatpush2.msra.mxu0 0.0
        %1079 = vmatprep.subr.mxu0 0.0
        %1080 = vmatpush2.msra.mxu0 0.0
        %1081 = vmatprep.mubr.f32.mxu0 0.0
        %1082 = vmatmul.mubr.f32.gmra.mxu0 %v447
        %v1083 = vpop.f32.mrf.mxu0
        %v1084 = vadd.f32 %v1016, %v1083
        %v1085 = vpop.f32.mrf.mxu0
        %1086 = vdwg.mxu0
        %v1088 = vsel %vm679, %v924, 0
        %v1091 = vsel %vm679, %v1004, 0
        %1093 = vmatprep.subr.mxu0 0.0
        %1094 = vmatpush1.xpose.msra.mxu0 0.0
        %1095 = vmatprep.subr.mxu0 0.0
        %1096 = vmatpush1.xpose.msra.mxu0 0.0
        %1097 = vmatprep.subr.mxu0 0.0
        %1098 = vmatpush1.xpose.msra.mxu0 0.0
        %1099 = vmatprep.subr.mxu0 0.0
        %1100 = vmatpush1.xpose.msra.mxu0 0.0
        %1101 = vmatprep.subr.mxu0 0.0
        %1102 = vmatpush1.xpose.msra.mxu0 0.0
        %1103 = vmatprep.subr.mxu0 0.0
        %1104 = vmatpush1.xpose.msra.mxu0 0.0
        %1105 = vmatprep.subr.mxu0 0.0
        %1106 = vmatpush1.xpose.msra.mxu0 0.0
        %1107 = vmatprep.subr.mxu0 0.0
        %1108 = vmatpush1.xpose.msra.mxu0 0.0
        %1109 = vmatprep.subr.mxu0 0.0
        %1110 = vmatpush1.xpose.msra.mxu0 0.0
        %1111 = vmatprep.subr.mxu0 0.0
        %1112 = vmatpush1.xpose.msra.mxu0 0.0
        %1113 = vmatprep.subr.mxu0 0.0
        %1114 = vmatpush1.xpose.msra.mxu0 0.0
        %1115 = vmatprep.subr.mxu0 0.0
        %1116 = vmatpush1.xpose.msra.mxu0 0.0
        %1117 = vmatprep.subr.mxu0 0.0
        %1118 = vmatpush1.xpose.msra.mxu0 0.0
        %1119 = vmatprep.subr.mxu0 0.0
        %1120 = vmatpush1.xpose.msra.mxu0 0.0
        %1121 = vmatprep.subr.mxu0 0.0
        %1122 = vmatpush1.xpose.msra.mxu0 0.0
        %1123 = vmatprep.subr.mxu0 0.0
        %1124 = vmatpush1.xpose.msra.mxu0 %v1091
        %1125 = vmatprep.subr.mxu0 0.0
        %1126 = vmatpush2.xpose.msra.mxu0 0.0
        %1127 = vmatprep.subr.mxu0 0.0
        %1128 = vmatpush2.xpose.msra.mxu0 0.0
        %1129 = vmatprep.subr.mxu0 0.0
        %1130 = vmatpush2.xpose.msra.mxu0 0.0
        %1131 = vmatprep.subr.mxu0 0.0
        %1132 = vmatpush2.xpose.msra.mxu0 0.0
        %1133 = vmatprep.subr.mxu0 0.0
        %1134 = vmatpush2.xpose.msra.mxu0 0.0
        %1135 = vmatprep.subr.mxu0 0.0
        %1136 = vmatpush2.xpose.msra.mxu0 0.0
        %1137 = vmatprep.subr.mxu0 0.0
        %1138 = vmatpush2.xpose.msra.mxu0 0.0
        %1139 = vmatprep.subr.mxu0 0.0
        %1140 = vmatpush2.xpose.msra.mxu0 0.0
        %1141 = vmatprep.subr.mxu0 0.0
        %1142 = vmatpush2.xpose.msra.mxu0 0.0
        %1143 = vmatprep.subr.mxu0 0.0
        %1144 = vmatpush2.xpose.msra.mxu0 0.0
        %1145 = vmatprep.subr.mxu0 0.0
        %1146 = vmatpush2.xpose.msra.mxu0 0.0
        %1147 = vmatprep.subr.mxu0 0.0
        %1148 = vmatpush2.xpose.msra.mxu0 0.0
        %1149 = vmatprep.subr.mxu0 0.0
        %1150 = vmatpush2.xpose.msra.mxu0 0.0
        %1151 = vmatprep.subr.mxu0 0.0
        %1152 = vmatpush2.xpose.msra.mxu0 0.0
        %1153 = vmatprep.subr.mxu0 0.0
        %1154 = vmatpush2.xpose.msra.mxu0 0.0
        %1155 = vmatprep.subr.mxu0 0.0
        %1156 = vmatpush2.xpose.msra.mxu0 0.0
        %1157 = vmatprep.mubr.f32.mxu0 0.0
        %1158 = vmatmul.mubr.f32.gmra.mxu0 %v1088
        %v1159 = vpop.f32.mrf.mxu0
        %v1160 = vadd.f32 0.0, %v1159
        %v1161 = vpop.f32.mrf.mxu0
        %1162 = vdwg.mxu0
        %v1163 = vsel %vm756, %v1160, -inf
        %1164 = vmax.xlane.f32.xlu0 %v1163
        %v1165 = vpop.xlane.xlu0 %1164
        %v1166 = vsub.f32 %v1160, %v1165
        %v1167 = vmul.f32 %v1166, 1.442695
        %v1168 = vpow.pop %v1167
        %v1169 = vsel %vm756, %v1168, 0.0
        %1170 = vadd.xlane.f32.xlu0 %v1169
        %v1171 = vpop.xlane.xlu0 %1170
        %v1172 = vrcp.pop %v1171
        %v1173 = vmul.f32 %v1168, %v1172
        %v1175 = vsel %vm768, %v1173, 0
        %v1178 = vsel %vm772, %v1084, 0
        %1180 = vmatprep.subr.mxu0 0.0
        %1181 = vmatpush1.msra.mxu0 0.0
        %1182 = vmatprep.subr.mxu0 0.0
        %1183 = vmatpush1.msra.mxu0 0.0
        %1184 = vmatprep.subr.mxu0 0.0
        %1185 = vmatpush1.msra.mxu0 0.0
        %1186 = vmatprep.subr.mxu0 0.0
        %1187 = vmatpush1.msra.mxu0 0.0
        %1188 = vmatprep.subr.mxu0 0.0
        %1189 = vmatpush1.msra.mxu0 0.0
        %1190 = vmatprep.subr.mxu0 0.0
        %1191 = vmatpush1.msra.mxu0 0.0
        %1192 = vmatprep.subr.mxu0 0.0
        %1193 = vmatpush1.msra.mxu0 0.0
        %1194 = vmatprep.subr.mxu0 0.0
        %1195 = vmatpush1.msra.mxu0 0.0
        %1196 = vmatprep.subr.mxu0 0.0
        %1197 = vmatpush1.msra.mxu0 0.0
        %1198 = vmatprep.subr.mxu0 0.0
        %1199 = vmatpush1.msra.mxu0 0.0
        %1200 = vmatprep.subr.mxu0 0.0
        %1201 = vmatpush1.msra.mxu0 0.0
        %1202 = vmatprep.subr.mxu0 0.0
        %1203 = vmatpush1.msra.mxu0 0.0
        %1204 = vmatprep.subr.mxu0 0.0
        %1205 = vmatpush1.msra.mxu0 0.0
        %1206 = vmatprep.subr.mxu0 0.0
        %1207 = vmatpush1.msra.mxu0 0.0
        %1208 = vmatprep.subr.mxu0 0.0
        %1209 = vmatpush1.msra.mxu0 0.0
        %1210 = vmatprep.subr.mxu0 0.0
        %1211 = vmatpush1.msra.mxu0 %v1178
        %1212 = vmatprep.subr.mxu0 0.0
        %1213 = vmatpush2.msra.mxu0 0.0
        %1214 = vmatprep.subr.mxu0 0.0
        %1215 = vmatpush2.msra.mxu0 0.0
        %1216 = vmatprep.subr.mxu0 0.0
        %1217 = vmatpush2.msra.mxu0 0.0
        %1218 = vmatprep.subr.mxu0 0.0
        %1219 = vmatpush2.msra.mxu0 0.0
        %1220 = vmatprep.subr.mxu0 0.0
        %1221 = vmatpush2.msra.mxu0 0.0
        %1222 = vmatprep.subr.mxu0 0.0
        %1223 = vmatpush2.msra.mxu0 0.0
        %1224 = vmatprep.subr.mxu0 0.0
        %1225 = vmatpush2.msra.mxu0 0.0
        %1226 = vmatprep.subr.mxu0 0.0
        %1227 = vmatpush2.msra.mxu0 0.0
        %1228 = vmatprep.subr.mxu0 0.0
        %1229 = vmatpush2.msra.mxu0 0.0
        %1230 = vmatprep.subr.mxu0 0.0
        %1231 = vmatpush2.msra.mxu0 0.0
        %1232 = vmatprep.subr.mxu0 0.0
        %1233 = vmatpush2.msra.mxu0 0.0
        %1234 = vmatprep.subr.mxu0 0.0
        %1235 = vmatpush2.msra.mxu0 0.0
        %1236 = vmatprep.subr.mxu0 0.0
        %1237 = vmatpush2.msra.mxu0 0.0
        %1238 = vmatprep.subr.mxu0 0.0
        %1239 = vmatpush2.msra.mxu0 0.0
        %1240 = vmatprep.subr.mxu0 0.0
        %1241 = vmatpush2.msra.mxu0 0.0
        %1242 = vmatprep.subr.mxu0 0.0
        %1243 = vmatpush2.msra.mxu0 0.0
        %1244 = vmatprep.mubr.f32.mxu0 0.0
        %1245 = vmatmul.mubr.f32.gmra.mxu0 %v1175
        %v1246 = vpop.f32.mrf.mxu0
        %v1247 = vadd.f32 0.0, %v1246
        %v1248 = vpop.f32.mrf.mxu0
        %1249 = vdwg.mxu0
        %v1250 = vld [vmem:[%s3 + $0x8] sm:$0xff]
        %v1252 = vsel %vm679, %v1247, 0
        %1254 = vmatprep.subr.mxu0 0.0
        %1255 = vmatpush1.msra.mxu0 0.0
        %1256 = vmatprep.subr.mxu0 0.0
        %1257 = vmatpush1.msra.mxu0 0.0
        %1258 = vmatprep.subr.mxu0 0.0
        %1259 = vmatpush1.msra.mxu0 0.0
        %1260 = vmatprep.subr.mxu0 0.0
        %1261 = vmatpush1.msra.mxu0 0.0
        %1262 = vmatprep.subr.mxu0 0.0
        %1263 = vmatpush1.msra.mxu0 0.0
        %1264 = vmatprep.subr.mxu0 0.0
        %1265 = vmatpush1.msra.mxu0 0.0
        %1266 = vmatprep.subr.mxu0 0.0
        %1267 = vmatpush1.msra.mxu0 0.0
        %1268 = vmatprep.subr.mxu0 0.0
        %1269 = vmatpush1.msra.mxu0 0.0
        %1270 = vmatprep.subr.mxu0 0.0
        %1271 = vmatpush1.msra.mxu0 0.0
        %1272 = vmatprep.subr.mxu0 0.0
        %1273 = vmatpush1.msra.mxu0 0.0
        %1274 = vmatprep.subr.mxu0 0.0
        %1275 = vmatpush1.msra.mxu0 0.0
        %1276 = vmatprep.subr.mxu0 0.0
        %1277 = vmatpush1.msra.mxu0 0.0
        %1278 = vmatprep.subr.mxu0 0.0
        %1279 = vmatpush1.msra.mxu0 0.0
        %1280 = vmatprep.subr.mxu0 0.0
        %1281 = vmatpush1.msra.mxu0 0.0
        %1282 = vmatprep.subr.mxu0 0.0
        %1283 = vmatpush1.msra.mxu0 0.0
        %1284 = vmatprep.subr.mxu0 0.0
        %1285 = vmatpush1.msra.mxu0 %v1250
        %1286 = vmatprep.subr.mxu0 0.0
        %1287 = vmatpush2.msra.mxu0 0.0
        %1288 = vmatprep.subr.mxu0 0.0
        %1289 = vmatpush2.msra.mxu0 0.0
        %1290 = vmatprep.subr.mxu0 0.0
        %1291 = vmatpush2.msra.mxu0 0.0
        %1292 = vmatprep.subr.mxu0 0.0
        %1293 = vmatpush2.msra.mxu0 0.0
        %1294 = vmatprep.subr.mxu0 0.0
        %1295 = vmatpush2.msra.mxu0 0.0
        %1296 = vmatprep.subr.mxu0 0.0
        %1297 = vmatpush2.msra.mxu0 0.0
        %1298 = vmatprep.subr.mxu0 0.0
        %1299 = vmatpush2.msra.mxu0 0.0
        %1300 = vmatprep.subr.mxu0 0.0
        %1301 = vmatpush2.msra.mxu0 0.0
        %1302 = vmatprep.subr.mxu0 0.0
        %1303 = vmatpush2.msra.mxu0 0.0
        %1304 = vmatprep.subr.mxu0 0.0
        %1305 = vmatpush2.msra.mxu0 0.0
        %1306 = vmatprep.subr.mxu0 0.0
        %1307 = vmatpush2.msra.mxu0 0.0
        %1308 = vmatprep.subr.mxu0 0.0
        %1309 = vmatpush2.msra.mxu0 0.0
        %1310 = vmatprep.subr.mxu0 0.0
        %1311 = vmatpush2.msra.mxu0 0.0
        %1312 = vmatprep.subr.mxu0 0.0
        %1313 = vmatpush2.msra.mxu0 0.0
        %1314 = vmatprep.subr.mxu0 0.0
        %1315 = vmatpush2.msra.mxu0 0.0
        %1316 = vmatprep.subr.mxu0 0.0
        %1317 = vmatpush2.msra.mxu0 0.0
        %1318 = vmatprep.mubr.f32.mxu0 0.0
        %1319 = vmatmul.mubr.f32.gmra.mxu0 %v1252
        %v1320 = vpop.f32.mrf.mxu0
        %v1321 = vadd.f32 0.0, %v1320
        %v1322 = vpop.f32.mrf.mxu0
        %1323 = vdwg.mxu0
        %v1325 = vsel %vm679, %v843, 0
        %1327 = vmatprep.subr.mxu0 0.0
        %1328 = vmatpush1.msra.mxu0 0.0
        %1329 = vmatprep.subr.mxu0 0.0
        %1330 = vmatpush1.msra.mxu0 0.0
        %1331 = vmatprep.subr.mxu0 0.0
        %1332 = vmatpush1.msra.mxu0 0.0
        %1333 = vmatprep.subr.mxu0 0.0
        %1334 = vmatpush1.msra.mxu0 0.0
        %1335 = vmatprep.subr.mxu0 0.0
        %1336 = vmatpush1.msra.mxu0 0.0
        %1337 = vmatprep.subr.mxu0 0.0
        %1338 = vmatpush1.msra.mxu0 0.0
        %1339 = vmatprep.subr.mxu0 0.0
        %1340 = vmatpush1.msra.mxu0 0.0
        %1341 = vmatprep.subr.mxu0 0.0
        %1342 = vmatpush1.msra.mxu0 0.0
        %1343 = vmatprep.subr.mxu0 0.0
        %1344 = vmatpush1.msra.mxu0 0.0
        %1345 = vmatprep.subr.mxu0 0.0
        %1346 = vmatpush1.msra.mxu0 0.0
        %1347 = vmatprep.subr.mxu0 0.0
        %1348 = vmatpush1.msra.mxu0 0.0
        %1349 = vmatprep.subr.mxu0 0.0
        %1350 = vmatpush1.msra.mxu0 0.0
        %1351 = vmatprep.subr.mxu0 0.0
        %1352 = vmatpush1.msra.mxu0 0.0
        %1353 = vmatprep.subr.mxu0 0.0
        %1354 = vmatpush1.msra.mxu0 0.0
        %1355 = vmatprep.subr.mxu0 0.0
        %1356 = vmatpush1.msra.mxu0 0.0
        %1357 = vmatprep.subr.mxu0 0.0
        %1358 = vmatpush1.msra.mxu0 %v846
        %1359 = vmatprep.subr.mxu0 0.0
        %1360 = vmatpush2.msra.mxu0 0.0
        %1361 = vmatprep.subr.mxu0 0.0
        %1362 = vmatpush2.msra.mxu0 0.0
        %1363 = vmatprep.subr.mxu0 0.0
        %1364 = vmatpush2.msra.mxu0 0.0
        %1365 = vmatprep.subr.mxu0 0.0
        %1366 = vmatpush2.msra.mxu0 0.0
        %1367 = vmatprep.subr.mxu0 0.0
        %1368 = vmatpush2.msra.mxu0 0.0
        %1369 = vmatprep.subr.mxu0 0.0
        %1370 = vmatpush2.msra.mxu0 0.0
        %1371 = vmatprep.subr.mxu0 0.0
        %1372 = vmatpush2.msra.mxu0 0.0
        %1373 = vmatprep.subr.mxu0 0.0
        %1374 = vmatpush2.msra.mxu0 0.0
        %1375 = vmatprep.subr.mxu0 0.0
        %1376 = vmatpush2.msra.mxu0 0.0
        %1377 = vmatprep.subr.mxu0 0.0
        %1378 = vmatpush2.msra.mxu0 0.0
        %1379 = vmatprep.subr.mxu0 0.0
        %1380 = vmatpush2.msra.mxu0 0.0
        %1381 = vmatprep.subr.mxu0 0.0
        %1382 = vmatpush2.msra.mxu0 0.0
        %1383 = vmatprep.subr.mxu0 0.0
        %1384 = vmatpush2.msra.mxu0 0.0
        %1385 = vmatprep.subr.mxu0 0.0
        %1386 = vmatpush2.msra.mxu0 0.0
        %1387 = vmatprep.subr.mxu0 0.0
        %1388 = vmatpush2.msra.mxu0 0.0
        %1389 = vmatprep.subr.mxu0 0.0
        %1390 = vmatpush2.msra.mxu0 0.0
        %1391 = vmatprep.mubr.f32.mxu0 0.0
        %1392 = vmatmul.mubr.f32.gmra.mxu0 %v1325
        %v1393 = vpop.f32.mrf.mxu0
        %v1394 = vadd.f32 %v1321, %v1393
        %v1395 = vpop.f32.mrf.mxu0
        %1396 = vdwg.mxu0
        %s1397 = scalar_lea.vmem %s2, 80
        %v1398 = vld [vmem:[%s1397] sm:$0xff]
        %v1399 = vld [vmem:[%s1397 + $0x8] sm:$0xff]
        %v1400 = vld [vmem:[%s1397 + $0x10] sm:$0xff]
        %v1401 = vld [vmem:[%s1397 + $0x18] sm:$0xff]
        %v1402 = vld [vmem:[%s1397 + $0x20] sm:$0x1]
        %v1403 = vlaneseq
        %v1404 = vshrl.u32 %v1403, 7
        %v1405 = vsub.s32 0, %v1404
        %v1406 = vrot.slane %v1402, %v1405
        %1407 = vmatprep.subr.mxu0 0.0
        %1408 = vmatpush1.msra.mxu0 0.0
        %1409 = vmatprep.subr.mxu0 0.0
        %1410 = vmatpush1.msra.mxu0 0.0
        %1411 = vmatprep.subr.mxu0 0.0
        %1412 = vmatpush1.msra.mxu0 0.0
        %1413 = vmatprep.subr.mxu0 0.0
        %1414 = vmatpush1.msra.mxu0 0.0
        %1415 = vmatprep.subr.mxu0 0.0
        %1416 = vmatpush1.msra.mxu0 0.0
        %1417 = vmatprep.subr.mxu0 0.0
        %1418 = vmatpush1.msra.mxu0 0.0
        %1419 = vmatprep.subr.mxu0 0.0
        %1420 = vmatpush1.msra.mxu0 0.0
        %1421 = vmatprep.subr.mxu0 0.0
        %1422 = vmatpush1.msra.mxu0 0.0
        %1423 = vmatprep.subr.mxu0 0.0
        %1424 = vmatpush1.msra.mxu0 0.0
        %1425 = vmatprep.subr.mxu0 0.0
        %1426 = vmatpush1.msra.mxu0 0.0
        %1427 = vmatprep.subr.mxu0 0.0
        %1428 = vmatpush1.msra.mxu0 0.0
        %1429 = vmatprep.subr.mxu0 0.0
        %1430 = vmatpush1.msra.mxu0 0.0
        %1431 = vmatprep.subr.mxu0 0.0
        %1432 = vmatpush1.msra.mxu0 %v1401
        %1433 = vmatprep.subr.mxu0 0.0
        %1434 = vmatpush1.msra.mxu0 %v1400
        %1435 = vmatprep.subr.mxu0 0.0
        %1436 = vmatpush1.msra.mxu0 %v1399
        %1437 = vmatprep.subr.mxu0 0.0
        %1438 = vmatpush1.msra.mxu0 %v1398
        %1439 = vmatprep.subr.mxu0 0.0
        %1440 = vmatpush2.msra.mxu0 0.0
        %1441 = vmatprep.subr.mxu0 0.0
        %1442 = vmatpush2.msra.mxu0 0.0
        %1443 = vmatprep.subr.mxu0 0.0
        %1444 = vmatpush2.msra.mxu0 0.0
        %1445 = vmatprep.subr.mxu0 0.0
        %1446 = vmatpush2.msra.mxu0 0.0
        %1447 = vmatprep.subr.mxu0 0.0
        %1448 = vmatpush2.msra.mxu0 0.0
        %1449 = vmatprep.subr.mxu0 0.0
        %1450 = vmatpush2.msra.mxu0 0.0
        %1451 = vmatprep.subr.mxu0 0.0
        %1452 = vmatpush2.msra.mxu0 0.0
        %1453 = vmatprep.subr.mxu0 0.0
        %1454 = vmatpush2.msra.mxu0 0.0
        %1455 = vmatprep.subr.mxu0 0.0
        %1456 = vmatpush2.msra.mxu0 0.0
        %1457 = vmatprep.subr.mxu0 0.0
        %1458 = vmatpush2.msra.mxu0 0.0
        %1459 = vmatprep.subr.mxu0 0.0
        %1460 = vmatpush2.msra.mxu0 0.0
        %1461 = vmatprep.subr.mxu0 0.0
        %1462 = vmatpush2.msra.mxu0 0.0
        %1463 = vmatprep.subr.mxu0 0.0
        %1464 = vmatpush2.msra.mxu0 0.0
        %1465 = vmatprep.subr.mxu0 0.0
        %1466 = vmatpush2.msra.mxu0 0.0
        %1467 = vmatprep.subr.mxu0 0.0
        %1468 = vmatpush2.msra.mxu0 0.0
        %1469 = vmatprep.subr.mxu0 0.0
        %1470 = vmatpush2.msra.mxu0 0.0
        %1471 = vmatprep.mubr.f32.mxu0 0.0
        %1472 = vmatmul.mubr.f32.gmra.mxu0 %v447
        %v1473 = vpop.f32.mrf.mxu0
        %v1474 = vadd.f32 %v1406, %v1473
        %v1475 = vpop.f32.mrf.mxu0
        %1476 = vdwg.mxu0
        %s1477 = scalar_lea.vmem %s2, 240
        %v1478 = vld [vmem:[%s1477] sm:$0xff]
        %v1479 = vld [vmem:[%s1477 + $0x8] sm:$0xff]
        %v1480 = vld [vmem:[%s1477 + $0x10] sm:$0xff]
        %v1481 = vld [vmem:[%s1477 + $0x18] sm:$0xff]
        %v1482 = vld [vmem:[%s1477 + $0x20] sm:$0x1]
        %v1483 = vlaneseq
        %v1484 = vshrl.u32 %v1483, 7
        %v1485 = vsub.s32 0, %v1484
        %v1486 = vrot.slane %v1482, %v1485
        %1487 = vmatprep.subr.mxu0 0.0
        %1488 = vmatpush1.msra.mxu0 0.0
        %1489 = vmatprep.subr.mxu0 0.0
        %1490 = vmatpush1.msra.mxu0 0.0
        %1491 = vmatprep.subr.mxu0 0.0
        %1492 = vmatpush1.msra.mxu0 0.0
        %1493 = vmatprep.subr.mxu0 0.0
        %1494 = vmatpush1.msra.mxu0 0.0
        %1495 = vmatprep.subr.mxu0 0.0
        %1496 = vmatpush1.msra.mxu0 0.0
        %1497 = vmatprep.subr.mxu0 0.0
        %1498 = vmatpush1.msra.mxu0 0.0
        %1499 = vmatprep.subr.mxu0 0.0
        %1500 = vmatpush1.msra.mxu0 0.0
        %1501 = vmatprep.subr.mxu0 0.0
        %1502 = vmatpush1.msra.mxu0 0.0
        %1503 = vmatprep.subr.mxu0 0.0
        %1504 = vmatpush1.msra.mxu0 0.0
        %1505 = vmatprep.subr.mxu0 0.0
        %1506 = vmatpush1.msra.mxu0 0.0
        %1507 = vmatprep.subr.mxu0 0.0
        %1508 = vmatpush1.msra.mxu0 0.0
        %1509 = vmatprep.subr.mxu0 0.0
        %1510 = vmatpush1.msra.mxu0 0.0
        %1511 = vmatprep.subr.mxu0 0.0
        %1512 = vmatpush1.msra.mxu0 %v1481
        %1513 = vmatprep.subr.mxu0 0.0
        %1514 = vmatpush1.msra.mxu0 %v1480
        %1515 = vmatprep.subr.mxu0 0.0
        %1516 = vmatpush1.msra.mxu0 %v1479
        %1517 = vmatprep.subr.mxu0 0.0
        %1518 = vmatpush1.msra.mxu0 %v1478
        %1519 = vmatprep.subr.mxu0 0.0
        %1520 = vmatpush2.msra.mxu0 0.0
        %1521 = vmatprep.subr.mxu0 0.0
        %1522 = vmatpush2.msra.mxu0 0.0
        %1523 = vmatprep.subr.mxu0 0.0
        %1524 = vmatpush2.msra.mxu0 0.0
        %1525 = vmatprep.subr.mxu0 0.0
        %1526 = vmatpush2.msra.mxu0 0.0
        %1527 = vmatprep.subr.mxu0 0.0
        %1528 = vmatpush2.msra.mxu0 0.0
        %1529 = vmatprep.subr.mxu0 0.0
        %1530 = vmatpush2.msra.mxu0 0.0
        %1531 = vmatprep.subr.mxu0 0.0
        %1532 = vmatpush2.msra.mxu0 0.0
        %1533 = vmatprep.subr.mxu0 0.0
        %1534 = vmatpush2.msra.mxu0 0.0
        %1535 = vmatprep.subr.mxu0 0.0
        %1536 = vmatpush2.msra.mxu0 0.0
        %1537 = vmatprep.subr.mxu0 0.0
        %1538 = vmatpush2.msra.mxu0 0.0
        %1539 = vmatprep.subr.mxu0 0.0
        %1540 = vmatpush2.msra.mxu0 0.0
        %1541 = vmatprep.subr.mxu0 0.0
        %1542 = vmatpush2.msra.mxu0 0.0
        %1543 = vmatprep.subr.mxu0 0.0
        %1544 = vmatpush2.msra.mxu0 0.0
        %1545 = vmatprep.subr.mxu0 0.0
        %1546 = vmatpush2.msra.mxu0 0.0
        %1547 = vmatprep.subr.mxu0 0.0
        %1548 = vmatpush2.msra.mxu0 0.0
        %1549 = vmatprep.subr.mxu0 0.0
        %1550 = vmatpush2.msra.mxu0 0.0
        %1551 = vmatprep.mubr.f32.mxu0 0.0
        %1552 = vmatmul.mubr.f32.gmra.mxu0 %v447
        %v1553 = vpop.f32.mrf.mxu0
        %v1554 = vadd.f32 %v1486, %v1553
        %v1555 = vpop.f32.mrf.mxu0
        %1556 = vdwg.mxu0
        %s1557 = scalar_lea.vmem %s2, 400
        %v1558 = vld [vmem:[%s1557] sm:$0xff]
        %v1559 = vld [vmem:[%s1557 + $0x8] sm:$0xff]
        %v1560 = vld [vmem:[%s1557 + $0x10] sm:$0xff]
        %v1561 = vld [vmem:[%s1557 + $0x18] sm:$0xff]
        %v1562 = vld [vmem:[%s1557 + $0x20] sm:$0x1]
        %v1563 = vlaneseq
        %v1564 = vshrl.u32 %v1563, 7
        %v1565 = vsub.s32 0, %v1564
        %v1566 = vrot.slane %v1562, %v1565
        %1567 = vmatprep.subr.mxu0 0.0
        %1568 = vmatpush1.msra.mxu0 0.0
        %1569 = vmatprep.subr.mxu0 0.0
        %1570 = vmatpush1.msra.mxu0 0.0
        %1571 = vmatprep.subr.mxu0 0.0
        %1572 = vmatpush1.msra.mxu0 0.0
        %1573 = vmatprep.subr.mxu0 0.0
        %1574 = vmatpush1.msra.mxu0 0.0
        %1575 = vmatprep.subr.mxu0 0.0
        %1576 = vmatpush1.msra.mxu0 0.0
        %1577 = vmatprep.subr.mxu0 0.0
        %1578 = vmatpush1.msra.mxu0 0.0
        %1579 = vmatprep.subr.mxu0 0.0
        %1580 = vmatpush1.msra.mxu0 0.0
        %1581 = vmatprep.subr.mxu0 0.0
        %1582 = vmatpush1.msra.mxu0 0.0
        %1583 = vmatprep.subr.mxu0 0.0
        %1584 = vmatpush1.msra.mxu0 0.0
        %1585 = vmatprep.subr.mxu0 0.0
        %1586 = vmatpush1.msra.mxu0 0.0
        %1587 = vmatprep.subr.mxu0 0.0
        %1588 = vmatpush1.msra.mxu0 0.0
        %1589 = vmatprep.subr.mxu0 0.0
        %1590 = vmatpush1.msra.mxu0 0.0
        %1591 = vmatprep.subr.mxu0 0.0
        %1592 = vmatpush1.msra.mxu0 %v1561
        %1593 = vmatprep.subr.mxu0 0.0
        %1594 = vmatpush1.msra.mxu0 %v1560
        %1595 = vmatprep.subr.mxu0 0.0
        %1596 = vmatpush1.msra.mxu0 %v1559
        %1597 = vmatprep.subr.mxu0 0.0
        %1598 = vmatpush1.msra.mxu0 %v1558
        %1599 = vmatprep.subr.mxu0 0.0
        %1600 = vmatpush2.msra.mxu0 0.0
        %1601 = vmatprep.subr.mxu0 0.0
        %1602 = vmatpush2.msra.mxu0 0.0
        %1603 = vmatprep.subr.mxu0 0.0
        %1604 = vmatpush2.msra.mxu0 0.0
        %1605 = vmatprep.subr.mxu0 0.0
        %1606 = vmatpush2.msra.mxu0 0.0
        %1607 = vmatprep.subr.mxu0 0.0
        %1608 = vmatpush2.msra.mxu0 0.0
        %1609 = vmatprep.subr.mxu0 0.0
        %1610 = vmatpush2.msra.mxu0 0.0
        %1611 = vmatprep.subr.mxu0 0.0
        %1612 = vmatpush2.msra.mxu0 0.0
        %1613 = vmatprep.subr.mxu0 0.0
        %1614 = vmatpush2.msra.mxu0 0.0
        %1615 = vmatprep.subr.mxu0 0.0
        %1616 = vmatpush2.msra.mxu0 0.0
        %1617 = vmatprep.subr.mxu0 0.0
        %1618 = vmatpush2.msra.mxu0 0.0
        %1619 = vmatprep.subr.mxu0 0.0
        %1620 = vmatpush2.msra.mxu0 0.0
        %1621 = vmatprep.subr.mxu0 0.0
        %1622 = vmatpush2.msra.mxu0 0.0
        %1623 = vmatprep.subr.mxu0 0.0
        %1624 = vmatpush2.msra.mxu0 0.0
        %1625 = vmatprep.subr.mxu0 0.0
        %1626 = vmatpush2.msra.mxu0 0.0
        %1627 = vmatprep.subr.mxu0 0.0
        %1628 = vmatpush2.msra.mxu0 0.0
        %1629 = vmatprep.subr.mxu0 0.0
        %1630 = vmatpush2.msra.mxu0 0.0
        %1631 = vmatprep.mubr.f32.mxu0 0.0
        %1632 = vmatmul.mubr.f32.gmra.mxu0 %v447
        %v1633 = vpop.f32.mrf.mxu0
        %v1634 = vadd.f32 %v1566, %v1633
        %v1635 = vpop.f32.mrf.mxu0
        %1636 = vdwg.mxu0
        %v1638 = vsel %vm679, %v1474, 0
        %v1641 = vsel %vm679, %v1554, 0
        %1643 = vmatprep.subr.mxu0 0.0
        %1644 = vmatpush1.xpose.msra.mxu0 0.0
        %1645 = vmatprep.subr.mxu0 0.0
        %1646 = vmatpush1.xpose.msra.mxu0 0.0
        %1647 = vmatprep.subr.mxu0 0.0
        %1648 = vmatpush1.xpose.msra.mxu0 0.0
        %1649 = vmatprep.subr.mxu0 0.0
        %1650 = vmatpush1.xpose.msra.mxu0 0.0
        %1651 = vmatprep.subr.mxu0 0.0
        %1652 = vmatpush1.xpose.msra.mxu0 0.0
        %1653 = vmatprep.subr.mxu0 0.0
        %1654 = vmatpush1.xpose.msra.mxu0 0.0
        %1655 = vmatprep.subr.mxu0 0.0
        %1656 = vmatpush1.xpose.msra.mxu0 0.0
        %1657 = vmatprep.subr.mxu0 0.0
        %1658 = vmatpush1.xpose.msra.mxu0 0.0
        %1659 = vmatprep.subr.mxu0 0.0
        %1660 = vmatpush1.xpose.msra.mxu0 0.0
        %1661 = vmatprep.subr.mxu0 0.0
        %1662 = vmatpush1.xpose.msra.mxu0 0.0
        %1663 = vmatprep.subr.mxu0 0.0
        %1664 = vmatpush1.xpose.msra.mxu0 0.0
        %1665 = vmatprep.subr.mxu0 0.0
        %1666 = vmatpush1.xpose.msra.mxu0 0.0
        %1667 = vmatprep.subr.mxu0 0.0
        %1668 = vmatpush1.xpose.msra.mxu0 0.0
        %1669 = vmatprep.subr.mxu0 0.0
        %1670 = vmatpush1.xpose.msra.mxu0 0.0
        %1671 = vmatprep.subr.mxu0 0.0
        %1672 = vmatpush1.xpose.msra.mxu0 0.0
        %1673 = vmatprep.subr.mxu0 0.0
        %1674 = vmatpush1.xpose.msra.mxu0 %v1641
        %1675 = vmatprep.subr.mxu0 0.0
        %1676 = vmatpush2.xpose.msra.mxu0 0.0
        %1677 = vmatprep.subr.mxu0 0.0
        %1678 = vmatpush2.xpose.msra.mxu0 0.0
        %1679 = vmatprep.subr.mxu0 0.0
        %1680 = vmatpush2.xpose.msra.mxu0 0.0
        %1681 = vmatprep.subr.mxu0 0.0
        %1682 = vmatpush2.xpose.msra.mxu0 0.0
        %1683 = vmatprep.subr.mxu0 0.0
        %1684 = vmatpush2.xpose.msra.mxu0 0.0
        %1685 = vmatprep.subr.mxu0 0.0
        %1686 = vmatpush2.xpose.msra.mxu0 0.0
        %1687 = vmatprep.subr.mxu0 0.0
        %1688 = vmatpush2.xpose.msra.mxu0 0.0
        %1689 = vmatprep.subr.mxu0 0.0
        %1690 = vmatpush2.xpose.msra.mxu0 0.0
        %1691 = vmatprep.subr.mxu0 0.0
        %1692 = vmatpush2.xpose.msra.mxu0 0.0
        %1693 = vmatprep.subr.mxu0 0.0
        %1694 = vmatpush2.xpose.msra.mxu0 0.0
        %1695 = vmatprep.subr.mxu0 0.0
        %1696 = vmatpush2.xpose.msra.mxu0 0.0
        %1697 = vmatprep.subr.mxu0 0.0
        %1698 = vmatpush2.xpose.msra.mxu0 0.0
        %1699 = vmatprep.subr.mxu0 0.0
        %1700 = vmatpush2.xpose.msra.mxu0 0.0
        %1701 = vmatprep.subr.mxu0 0.0
        %1702 = vmatpush2.xpose.msra.mxu0 0.0
        %1703 = vmatprep.subr.mxu0 0.0
        %1704 = vmatpush2.xpose.msra.mxu0 0.0
        %1705 = vmatprep.subr.mxu0 0.0
        %1706 = vmatpush2.xpose.msra.mxu0 0.0
        %1707 = vmatprep.mubr.f32.mxu0 0.0
        %1708 = vmatmul.mubr.f32.gmra.mxu0 %v1638
        %v1709 = vpop.f32.mrf.mxu0
        %v1710 = vadd.f32 0.0, %v1709
        %v1711 = vpop.f32.mrf.mxu0
        %1712 = vdwg.mxu0
        %v1713 = vsel %vm756, %v1710, -inf
        %1714 = vmax.xlane.f32.xlu0 %v1713
        %v1715 = vpop.xlane.xlu0 %1714
        %v1716 = vsub.f32 %v1710, %v1715
        %v1717 = vmul.f32 %v1716, 1.442695
        %v1718 = vpow.pop %v1717
        %v1719 = vsel %vm756, %v1718, 0.0
        %1720 = vadd.xlane.f32.xlu0 %v1719
        %v1721 = vpop.xlane.xlu0 %1720
        %v1722 = vrcp.pop %v1721
        %v1723 = vmul.f32 %v1718, %v1722
        %v1725 = vsel %vm768, %v1723, 0
        %v1728 = vsel %vm772, %v1634, 0
        %1730 = vmatprep.subr.mxu0 0.0
        %1731 = vmatpush1.msra.mxu0 0.0
        %1732 = vmatprep.subr.mxu0 0.0
        %1733 = vmatpush1.msra.mxu0 0.0
        %1734 = vmatprep.subr.mxu0 0.0
        %1735 = vmatpush1.msra.mxu0 0.0
        %1736 = vmatprep.subr.mxu0 0.0
        %1737 = vmatpush1.msra.mxu0 0.0
        %1738 = vmatprep.subr.mxu0 0.0
        %1739 = vmatpush1.msra.mxu0 0.0
        %1740 = vmatprep.subr.mxu0 0.0
        %1741 = vmatpush1.msra.mxu0 0.0
        %1742 = vmatprep.subr.mxu0 0.0
        %1743 = vmatpush1.msra.mxu0 0.0
        %1744 = vmatprep.subr.mxu0 0.0
        %1745 = vmatpush1.msra.mxu0 0.0
        %1746 = vmatprep.subr.mxu0 0.0
        %1747 = vmatpush1.msra.mxu0 0.0
        %1748 = vmatprep.subr.mxu0 0.0
        %1749 = vmatpush1.msra.mxu0 0.0
        %1750 = vmatprep.subr.mxu0 0.0
        %1751 = vmatpush1.msra.mxu0 0.0
        %1752 = vmatprep.subr.mxu0 0.0
        %1753 = vmatpush1.msra.mxu0 0.0
        %1754 = vmatprep.subr.mxu0 0.0
        %1755 = vmatpush1.msra.mxu0 0.0
        %1756 = vmatprep.subr.mxu0 0.0
        %1757 = vmatpush1.msra.mxu0 0.0
        %1758 = vmatprep.subr.mxu0 0.0
        %1759 = vmatpush1.msra.mxu0 0.0
        %1760 = vmatprep.subr.mxu0 0.0
        %1761 = vmatpush1.msra.mxu0 %v1728
        %1762 = vmatprep.subr.mxu0 0.0
        %1763 = vmatpush2.msra.mxu0 0.0
        %1764 = vmatprep.subr.mxu0 0.0
        %1765 = vmatpush2.msra.mxu0 0.0
        %1766 = vmatprep.subr.mxu0 0.0
        %1767 = vmatpush2.msra.mxu0 0.0
        %1768 = vmatprep.subr.mxu0 0.0
        %1769 = vmatpush2.msra.mxu0 0.0
        %1770 = vmatprep.subr.mxu0 0.0
        %1771 = vmatpush2.msra.mxu0 0.0
        %1772 = vmatprep.subr.mxu0 0.0
        %1773 = vmatpush2.msra.mxu0 0.0
        %1774 = vmatprep.subr.mxu0 0.0
        %1775 = vmatpush2.msra.mxu0 0.0
        %1776 = vmatprep.subr.mxu0 0.0
        %1777 = vmatpush2.msra.mxu0 0.0
        %1778 = vmatprep.subr.mxu0 0.0
        %1779 = vmatpush2.msra.mxu0 0.0
        %1780 = vmatprep.subr.mxu0 0.0
        %1781 = vmatpush2.msra.mxu0 0.0
        %1782 = vmatprep.subr.mxu0 0.0
        %1783 = vmatpush2.msra.mxu0 0.0
        %1784 = vmatprep.subr.mxu0 0.0
        %1785 = vmatpush2.msra.mxu0 0.0
        %1786 = vmatprep.subr.mxu0 0.0
        %1787 = vmatpush2.msra.mxu0 0.0
        %1788 = vmatprep.subr.mxu0 0.0
        %1789 = vmatpush2.msra.mxu0 0.0
        %1790 = vmatprep.subr.mxu0 0.0
        %1791 = vmatpush2.msra.mxu0 0.0
        %1792 = vmatprep.subr.mxu0 0.0
        %1793 = vmatpush2.msra.mxu0 0.0
        %1794 = vmatprep.mubr.f32.mxu0 0.0
        %1795 = vmatmul.mubr.f32.gmra.mxu0 %v1725
        %v1796 = vpop.f32.mrf.mxu0
        %v1797 = vadd.f32 0.0, %v1796
        %v1798 = vpop.f32.mrf.mxu0
        %1799 = vdwg.mxu0
        %v1800 = vld [vmem:[%s3 + $0x10] sm:$0xff]
        %v1802 = vsel %vm679, %v1797, 0
        %1804 = vmatprep.subr.mxu0 0.0
        %1805 = vmatpush1.msra.mxu0 0.0
        %1806 = vmatprep.subr.mxu0 0.0
        %1807 = vmatpush1.msra.mxu0 0.0
        %1808 = vmatprep.subr.mxu0 0.0
        %1809 = vmatpush1.msra.mxu0 0.0
        %1810 = vmatprep.subr.mxu0 0.0
        %1811 = vmatpush1.msra.mxu0 0.0
        %1812 = vmatprep.subr.mxu0 0.0
        %1813 = vmatpush1.msra.mxu0 0.0
        %1814 = vmatprep.subr.mxu0 0.0
        %1815 = vmatpush1.msra.mxu0 0.0
        %1816 = vmatprep.subr.mxu0 0.0
        %1817 = vmatpush1.msra.mxu0 0.0
        %1818 = vmatprep.subr.mxu0 0.0
        %1819 = vmatpush1.msra.mxu0 0.0
        %1820 = vmatprep.subr.mxu0 0.0
        %1821 = vmatpush1.msra.mxu0 0.0
        %1822 = vmatprep.subr.mxu0 0.0
        %1823 = vmatpush1.msra.mxu0 0.0
        %1824 = vmatprep.subr.mxu0 0.0
        %1825 = vmatpush1.msra.mxu0 0.0
        %1826 = vmatprep.subr.mxu0 0.0
        %1827 = vmatpush1.msra.mxu0 0.0
        %1828 = vmatprep.subr.mxu0 0.0
        %1829 = vmatpush1.msra.mxu0 0.0
        %1830 = vmatprep.subr.mxu0 0.0
        %1831 = vmatpush1.msra.mxu0 0.0
        %1832 = vmatprep.subr.mxu0 0.0
        %1833 = vmatpush1.msra.mxu0 0.0
        %1834 = vmatprep.subr.mxu0 0.0
        %1835 = vmatpush1.msra.mxu0 %v1800
        %1836 = vmatprep.subr.mxu0 0.0
        %1837 = vmatpush2.msra.mxu0 0.0
        %1838 = vmatprep.subr.mxu0 0.0
        %1839 = vmatpush2.msra.mxu0 0.0
        %1840 = vmatprep.subr.mxu0 0.0
        %1841 = vmatpush2.msra.mxu0 0.0
        %1842 = vmatprep.subr.mxu0 0.0
        %1843 = vmatpush2.msra.mxu0 0.0
        %1844 = vmatprep.subr.mxu0 0.0
        %1845 = vmatpush2.msra.mxu0 0.0
        %1846 = vmatprep.subr.mxu0 0.0
        %1847 = vmatpush2.msra.mxu0 0.0
        %1848 = vmatprep.subr.mxu0 0.0
        %1849 = vmatpush2.msra.mxu0 0.0
        %1850 = vmatprep.subr.mxu0 0.0
        %1851 = vmatpush2.msra.mxu0 0.0
        %1852 = vmatprep.subr.mxu0 0.0
        %1853 = vmatpush2.msra.mxu0 0.0
        %1854 = vmatprep.subr.mxu0 0.0
        %1855 = vmatpush2.msra.mxu0 0.0
        %1856 = vmatprep.subr.mxu0 0.0
        %1857 = vmatpush2.msra.mxu0 0.0
        %1858 = vmatprep.subr.mxu0 0.0
        %1859 = vmatpush2.msra.mxu0 0.0
        %1860 = vmatprep.subr.mxu0 0.0
        %1861 = vmatpush2.msra.mxu0 0.0
        %1862 = vmatprep.subr.mxu0 0.0
        %1863 = vmatpush2.msra.mxu0 0.0
        %1864 = vmatprep.subr.mxu0 0.0
        %1865 = vmatpush2.msra.mxu0 0.0
        %1866 = vmatprep.subr.mxu0 0.0
        %1867 = vmatpush2.msra.mxu0 0.0
        %1868 = vmatprep.mubr.f32.mxu0 0.0
        %1869 = vmatmul.mubr.f32.gmra.mxu0 %v1802
        %v1870 = vpop.f32.mrf.mxu0
        %v1871 = vadd.f32 0.0, %v1870
        %v1872 = vpop.f32.mrf.mxu0
        %1873 = vdwg.mxu0
        %v1874 = vadd.f32 %v1394, %v1871
        %s1875 = scalar_lea.vmem %s2, 120
        %v1876 = vld [vmem:[%s1875] sm:$0xff]
        %v1877 = vld [vmem:[%s1875 + $0x8] sm:$0xff]
        %v1878 = vld [vmem:[%s1875 + $0x10] sm:$0xff]
        %v1879 = vld [vmem:[%s1875 + $0x18] sm:$0xff]
        %v1880 = vld [vmem:[%s1875 + $0x20] sm:$0x1]
        %v1881 = vlaneseq
        %v1882 = vshrl.u32 %v1881, 7
        %v1883 = vsub.s32 0, %v1882
        %v1884 = vrot.slane %v1880, %v1883
        %1885 = vmatprep.subr.mxu0 0.0
        %1886 = vmatpush1.msra.mxu0 0.0
        %1887 = vmatprep.subr.mxu0 0.0
        %1888 = vmatpush1.msra.mxu0 0.0
        %1889 = vmatprep.subr.mxu0 0.0
        %1890 = vmatpush1.msra.mxu0 0.0
        %1891 = vmatprep.subr.mxu0 0.0
        %1892 = vmatpush1.msra.mxu0 0.0
        %1893 = vmatprep.subr.mxu0 0.0
        %1894 = vmatpush1.msra.mxu0 0.0
        %1895 = vmatprep.subr.mxu0 0.0
        %1896 = vmatpush1.msra.mxu0 0.0
        %1897 = vmatprep.subr.mxu0 0.0
        %1898 = vmatpush1.msra.mxu0 0.0
        %1899 = vmatprep.subr.mxu0 0.0
        %1900 = vmatpush1.msra.mxu0 0.0
        %1901 = vmatprep.subr.mxu0 0.0
        %1902 = vmatpush1.msra.mxu0 0.0
        %1903 = vmatprep.subr.mxu0 0.0
        %1904 = vmatpush1.msra.mxu0 0.0
        %1905 = vmatprep.subr.mxu0 0.0
        %1906 = vmatpush1.msra.mxu0 0.0
        %1907 = vmatprep.subr.mxu0 0.0
        %1908 = vmatpush1.msra.mxu0 0.0
        %1909 = vmatprep.subr.mxu0 0.0
        %1910 = vmatpush1.msra.mxu0 %v1879
        %1911 = vmatprep.subr.mxu0 0.0
        %1912 = vmatpush1.msra.mxu0 %v1878
        %1913 = vmatprep.subr.mxu0 0.0
        %1914 = vmatpush1.msra.mxu0 %v1877
        %1915 = vmatprep.subr.mxu0 0.0
        %1916 = vmatpush1.msra.mxu0 %v1876
        %1917 = vmatprep.subr.mxu0 0.0
        %1918 = vmatpush2.msra.mxu0 0.0
        %1919 = vmatprep.subr.mxu0 0.0
        %1920 = vmatpush2.msra.mxu0 0.0
        %1921 = vmatprep.subr.mxu0 0.0
        %1922 = vmatpush2.msra.mxu0 0.0
        %1923 = vmatprep.subr.mxu0 0.0
        %1924 = vmatpush2.msra.mxu0 0.0
        %1925 = vmatprep.subr.mxu0 0.0
        %1926 = vmatpush2.msra.mxu0 0.0
        %1927 = vmatprep.subr.mxu0 0.0
        %1928 = vmatpush2.msra.mxu0 0.0
        %1929 = vmatprep.subr.mxu0 0.0
        %1930 = vmatpush2.msra.mxu0 0.0
        %1931 = vmatprep.subr.mxu0 0.0
        %1932 = vmatpush2.msra.mxu0 0.0
        %1933 = vmatprep.subr.mxu0 0.0
        %1934 = vmatpush2.msra.mxu0 0.0
        %1935 = vmatprep.subr.mxu0 0.0
        %1936 = vmatpush2.msra.mxu0 0.0
        %1937 = vmatprep.subr.mxu0 0.0
        %1938 = vmatpush2.msra.mxu0 0.0
        %1939 = vmatprep.subr.mxu0 0.0
        %1940 = vmatpush2.msra.mxu0 0.0
        %1941 = vmatprep.subr.mxu0 0.0
        %1942 = vmatpush2.msra.mxu0 0.0
        %1943 = vmatprep.subr.mxu0 0.0
        %1944 = vmatpush2.msra.mxu0 0.0
        %1945 = vmatprep.subr.mxu0 0.0
        %1946 = vmatpush2.msra.mxu0 0.0
        %1947 = vmatprep.subr.mxu0 0.0
        %1948 = vmatpush2.msra.mxu0 0.0
        %1949 = vmatprep.mubr.f32.mxu0 0.0
        %1950 = vmatmul.mubr.f32.gmra.mxu0 %v447
        %v1951 = vpop.f32.mrf.mxu0
        %v1952 = vadd.f32 %v1884, %v1951
        %v1953 = vpop.f32.mrf.mxu0
        %1954 = vdwg.mxu0
        %s1955 = scalar_lea.vmem %s2, 280
        %v1956 = vld [vmem:[%s1955] sm:$0xff]
        %v1957 = vld [vmem:[%s1955 + $0x8] sm:$0xff]
        %v1958 = vld [vmem:[%s1955 + $0x10] sm:$0xff]
        %v1959 = vld [vmem:[%s1955 + $0x18] sm:$0xff]
        %v1960 = vld [vmem:[%s1955 + $0x20] sm:$0x1]
        %v1961 = vlaneseq
        %v1962 = vshrl.u32 %v1961, 7
        %v1963 = vsub.s32 0, %v1962
        %v1964 = vrot.slane %v1960, %v1963
        %1965 = vmatprep.subr.mxu0 0.0
        %1966 = vmatpush1.msra.mxu0 0.0
        %1967 = vmatprep.subr.mxu0 0.0
        %1968 = vmatpush1.msra.mxu0 0.0
        %1969 = vmatprep.subr.mxu0 0.0
        %1970 = vmatpush1.msra.mxu0 0.0
        %1971 = vmatprep.subr.mxu0 0.0
        %1972 = vmatpush1.msra.mxu0 0.0
        %1973 = vmatprep.subr.mxu0 0.0
        %1974 = vmatpush1.msra.mxu0 0.0
        %1975 = vmatprep.subr.mxu0 0.0
        %1976 = vmatpush1.msra.mxu0 0.0
        %1977 = vmatprep.subr.mxu0 0.0
        %1978 = vmatpush1.msra.mxu0 0.0
        %1979 = vmatprep.subr.mxu0 0.0
        %1980 = vmatpush1.msra.mxu0 0.0
        %1981 = vmatprep.subr.mxu0 0.0
        %1982 = vmatpush1.msra.mxu0 0.0
        %1983 = vmatprep.subr.mxu0 0.0
        %1984 = vmatpush1.msra.mxu0 0.0
        %1985 = vmatprep.subr.mxu0 0.0
        %1986 = vmatpush1.msra.mxu0 0.0
        %1987 = vmatprep.subr.mxu0 0.0
        %1988 = vmatpush1.msra.mxu0 0.0
        %1989 = vmatprep.subr.mxu0 0.0
        %1990 = vmatpush1.msra.mxu0 %v1959
        %1991 = vmatprep.subr.mxu0 0.0
        %1992 = vmatpush1.msra.mxu0 %v1958
        %1993 = vmatprep.subr.mxu0 0.0
        %1994 = vmatpush1.msra.mxu0 %v1957
        %1995 = vmatprep.subr.mxu0 0.0
        %1996 = vmatpush1.msra.mxu0 %v1956
        %1997 = vmatprep.subr.mxu0 0.0
        %1998 = vmatpush2.msra.mxu0 0.0
        %1999 = vmatprep.subr.mxu0 0.0
        %2000 = vmatpush2.msra.mxu0 0.0
        %2001 = vmatprep.subr.mxu0 0.0
        %2002 = vmatpush2.msra.mxu0 0.0
        %2003 = vmatprep.subr.mxu0 0.0
        %2004 = vmatpush2.msra.mxu0 0.0
        %2005 = vmatprep.subr.mxu0 0.0
        %2006 = vmatpush2.msra.mxu0 0.0
        %2007 = vmatprep.subr.mxu0 0.0
        %2008 = vmatpush2.msra.mxu0 0.0
        %2009 = vmatprep.subr.mxu0 0.0
        %2010 = vmatpush2.msra.mxu0 0.0
        %2011 = vmatprep.subr.mxu0 0.0
        %2012 = vmatpush2.msra.mxu0 0.0
        %2013 = vmatprep.subr.mxu0 0.0
        %2014 = vmatpush2.msra.mxu0 0.0
        %2015 = vmatprep.subr.mxu0 0.0
        %2016 = vmatpush2.msra.mxu0 0.0
        %2017 = vmatprep.subr.mxu0 0.0
        %2018 = vmatpush2.msra.mxu0 0.0
        %2019 = vmatprep.subr.mxu0 0.0
        %2020 = vmatpush2.msra.mxu0 0.0
        %2021 = vmatprep.subr.mxu0 0.0
        %2022 = vmatpush2.msra.mxu0 0.0
        %2023 = vmatprep.subr.mxu0 0.0
        %2024 = vmatpush2.msra.mxu0 0.0
        %2025 = vmatprep.subr.mxu0 0.0
        %2026 = vmatpush2.msra.mxu0 0.0
        %2027 = vmatprep.subr.mxu0 0.0
        %2028 = vmatpush2.msra.mxu0 0.0
        %2029 = vmatprep.mubr.f32.mxu0 0.0
        %2030 = vmatmul.mubr.f32.gmra.mxu0 %v447
        %v2031 = vpop.f32.mrf.mxu0
        %v2032 = vadd.f32 %v1964, %v2031
        %v2033 = vpop.f32.mrf.mxu0
        %2034 = vdwg.mxu0
        %s2035 = scalar_lea.vmem %s2, 440
        %v2036 = vld [vmem:[%s2035] sm:$0xff]
        %v2037 = vld [vmem:[%s2035 + $0x8] sm:$0xff]
        %v2038 = vld [vmem:[%s2035 + $0x10] sm:$0xff]
        %v2039 = vld [vmem:[%s2035 + $0x18] sm:$0xff]
        %v2040 = vld [vmem:[%s2035 + $0x20] sm:$0x1]
        %v2041 = vlaneseq
        %v2042 = vshrl.u32 %v2041, 7
        %v2043 = vsub.s32 0, %v2042
        %v2044 = vrot.slane %v2040, %v2043
        %2045 = vmatprep.subr.mxu0 0.0
        %2046 = vmatpush1.msra.mxu0 0.0
        %2047 = vmatprep.subr.mxu0 0.0
        %2048 = vmatpush1.msra.mxu0 0.0
        %2049 = vmatprep.subr.mxu0 0.0
        %2050 = vmatpush1.msra.mxu0 0.0
        %2051 = vmatprep.subr.mxu0 0.0
        %2052 = vmatpush1.msra.mxu0 0.0
        %2053 = vmatprep.subr.mxu0 0.0
        %2054 = vmatpush1.msra.mxu0 0.0
        %2055 = vmatprep.subr.mxu0 0.0
        %2056 = vmatpush1.msra.mxu0 0.0
        %2057 = vmatprep.subr.mxu0 0.0
        %2058 = vmatpush1.msra.mxu0 0.0
        %2059 = vmatprep.subr.mxu0 0.0
        %2060 = vmatpush1.msra.mxu0 0.0
        %2061 = vmatprep.subr.mxu0 0.0
        %2062 = vmatpush1.msra.mxu0 0.0
        %2063 = vmatprep.subr.mxu0 0.0
        %2064 = vmatpush1.msra.mxu0 0.0
        %2065 = vmatprep.subr.mxu0 0.0
        %2066 = vmatpush1.msra.mxu0 0.0
        %2067 = vmatprep.subr.mxu0 0.0
        %2068 = vmatpush1.msra.mxu0 0.0
        %2069 = vmatprep.subr.mxu0 0.0
        %2070 = vmatpush1.msra.mxu0 %v2039
        %2071 = vmatprep.subr.mxu0 0.0
        %2072 = vmatpush1.msra.mxu0 %v2038
        %2073 = vmatprep.subr.mxu0 0.0
        %2074 = vmatpush1.msra.mxu0 %v2037
        %2075 = vmatprep.subr.mxu0 0.0
        %2076 = vmatpush1.msra.mxu0 %v2036
        %2077 = vmatprep.subr.mxu0 0.0
        %2078 = vmatpush2.msra.mxu0 0.0
        %2079 = vmatprep.subr.mxu0 0.0
        %2080 = vmatpush2.msra.mxu0 0.0
        %2081 = vmatprep.subr.mxu0 0.0
        %2082 = vmatpush2.msra.mxu0 0.0
        %2083 = vmatprep.subr.mxu0 0.0
        %2084 = vmatpush2.msra.mxu0 0.0
        %2085 = vmatprep.subr.mxu0 0.0
        %2086 = vmatpush2.msra.mxu0 0.0
        %2087 = vmatprep.subr.mxu0 0.0
        %2088 = vmatpush2.msra.mxu0 0.0
        %2089 = vmatprep.subr.mxu0 0.0
        %2090 = vmatpush2.msra.mxu0 0.0
        %2091 = vmatprep.subr.mxu0 0.0
        %2092 = vmatpush2.msra.mxu0 0.0
        %2093 = vmatprep.subr.mxu0 0.0
        %2094 = vmatpush2.msra.mxu0 0.0
        %2095 = vmatprep.subr.mxu0 0.0
        %2096 = vmatpush2.msra.mxu0 0.0
        %2097 = vmatprep.subr.mxu0 0.0
        %2098 = vmatpush2.msra.mxu0 0.0
        %2099 = vmatprep.subr.mxu0 0.0
        %2100 = vmatpush2.msra.mxu0 0.0
        %2101 = vmatprep.subr.mxu0 0.0
        %2102 = vmatpush2.msra.mxu0 0.0
        %2103 = vmatprep.subr.mxu0 0.0
        %2104 = vmatpush2.msra.mxu0 0.0
        %2105 = vmatprep.subr.mxu0 0.0
        %2106 = vmatpush2.msra.mxu0 0.0
        %2107 = vmatprep.subr.mxu0 0.0
        %2108 = vmatpush2.msra.mxu0 0.0
        %2109 = vmatprep.mubr.f32.mxu0 0.0
        %2110 = vmatmul.mubr.f32.gmra.mxu0 %v447
        %v2111 = vpop.f32.mrf.mxu0
        %v2112 = vadd.f32 %v2044, %v2111
        %v2113 = vpop.f32.mrf.mxu0
        %2114 = vdwg.mxu0
        %v2116 = vsel %vm679, %v1952, 0
        %v2119 = vsel %vm679, %v2032, 0
        %2121 = vmatprep.subr.mxu0 0.0
        %2122 = vmatpush1.xpose.msra.mxu0 0.0
        %2123 = vmatprep.subr.mxu0 0.0
        %2124 = vmatpush1.xpose.msra.mxu0 0.0
        %2125 = vmatprep.subr.mxu0 0.0
        %2126 = vmatpush1.xpose.msra.mxu0 0.0
        %2127 = vmatprep.subr.mxu0 0.0
        %2128 = vmatpush1.xpose.msra.mxu0 0.0
        %2129 = vmatprep.subr.mxu0 0.0
        %2130 = vmatpush1.xpose.msra.mxu0 0.0
        %2131 = vmatprep.subr.mxu0 0.0
        %2132 = vmatpush1.xpose.msra.mxu0 0.0
        %2133 = vmatprep.subr.mxu0 0.0
        %2134 = vmatpush1.xpose.msra.mxu0 0.0
        %2135 = vmatprep.subr.mxu0 0.0
        %2136 = vmatpush1.xpose.msra.mxu0 0.0
        %2137 = vmatprep.subr.mxu0 0.0
        %2138 = vmatpush1.xpose.msra.mxu0 0.0
        %2139 = vmatprep.subr.mxu0 0.0
        %2140 = vmatpush1.xpose.msra.mxu0 0.0
        %2141 = vmatprep.subr.mxu0 0.0
        %2142 = vmatpush1.xpose.msra.mxu0 0.0
        %2143 = vmatprep.subr.mxu0 0.0
        %2144 = vmatpush1.xpose.msra.mxu0 0.0
        %2145 = vmatprep.subr.mxu0 0.0
        %2146 = vmatpush1.xpose.msra.mxu0 0.0
        %2147 = vmatprep.subr.mxu0 0.0
        %2148 = vmatpush1.xpose.msra.mxu0 0.0
        %2149 = vmatprep.subr.mxu0 0.0
        %2150 = vmatpush1.xpose.msra.mxu0 0.0
        %2151 = vmatprep.subr.mxu0 0.0
        %2152 = vmatpush1.xpose.msra.mxu0 %v2119
        %2153 = vmatprep.subr.mxu0 0.0
        %2154 = vmatpush2.xpose.msra.mxu0 0.0
        %2155 = vmatprep.subr.mxu0 0.0
        %2156 = vmatpush2.xpose.msra.mxu0 0.0
        %2157 = vmatprep.subr.mxu0 0.0
        %2158 = vmatpush2.xpose.msra.mxu0 0.0
        %2159 = vmatprep.subr.mxu0 0.0
        %2160 = vmatpush2.xpose.msra.mxu0 0.0
        %2161 = vmatprep.subr.mxu0 0.0
        %2162 = vmatpush2.xpose.msra.mxu0 0.0
        %2163 = vmatprep.subr.mxu0 0.0
        %2164 = vmatpush2.xpose.msra.mxu0 0.0
        %2165 = vmatprep.subr.mxu0 0.0
        %2166 = vmatpush2.xpose.msra.mxu0 0.0
        %2167 = vmatprep.subr.mxu0 0.0
        %2168 = vmatpush2.xpose.msra.mxu0 0.0
        %2169 = vmatprep.subr.mxu0 0.0
        %2170 = vmatpush2.xpose.msra.mxu0 0.0
        %2171 = vmatprep.subr.mxu0 0.0
        %2172 = vmatpush2.xpose.msra.mxu0 0.0
        %2173 = vmatprep.subr.mxu0 0.0
        %2174 = vmatpush2.xpose.msra.mxu0 0.0
        %2175 = vmatprep.subr.mxu0 0.0
        %2176 = vmatpush2.xpose.msra.mxu0 0.0
        %2177 = vmatprep.subr.mxu0 0.0
        %2178 = vmatpush2.xpose.msra.mxu0 0.0
        %2179 = vmatprep.subr.mxu0 0.0
        %2180 = vmatpush2.xpose.msra.mxu0 0.0
        %2181 = vmatprep.subr.mxu0 0.0
        %2182 = vmatpush2.xpose.msra.mxu0 0.0
        %2183 = vmatprep.subr.mxu0 0.0
        %2184 = vmatpush2.xpose.msra.mxu0 0.0
        %2185 = vmatprep.mubr.f32.mxu0 0.0
        %2186 = vmatmul.mubr.f32.gmra.mxu0 %v2116
        %v2187 = vpop.f32.mrf.mxu0
        %v2188 = vadd.f32 0.0, %v2187
        %v2189 = vpop.f32.mrf.mxu0
        %2190 = vdwg.mxu0
        %v2191 = vsel %vm756, %v2188, -inf
        %2192 = vmax.xlane.f32.xlu0 %v2191
        %v2193 = vpop.xlane.xlu0 %2192
        %v2194 = vsub.f32 %v2188, %v2193
        %v2195 = vmul.f32 %v2194, 1.442695
        %v2196 = vpow.pop %v2195
        %v2197 = vsel %vm756, %v2196, 0.0
        %2198 = vadd.xlane.f32.xlu0 %v2197
        %v2199 = vpop.xlane.xlu0 %2198
        %v2200 = vrcp.pop %v2199
        %v2201 = vmul.f32 %v2196, %v2200
        %v2203 = vsel %vm768, %v2201, 0
        %v2206 = vsel %vm772, %v2112, 0
        %2208 = vmatprep.subr.mxu0 0.0
        %2209 = vmatpush1.msra.mxu0 0.0
        %2210 = vmatprep.subr.mxu0 0.0
        %2211 = vmatpush1.msra.mxu0 0.0
        %2212 = vmatprep.subr.mxu0 0.0
        %2213 = vmatpush1.msra.mxu0 0.0
        %2214 = vmatprep.subr.mxu0 0.0
        %2215 = vmatpush1.msra.mxu0 0.0
        %2216 = vmatprep.subr.mxu0 0.0
        %2217 = vmatpush1.msra.mxu0 0.0
        %2218 = vmatprep.subr.mxu0 0.0
        %2219 = vmatpush1.msra.mxu0 0.0
        %2220 = vmatprep.subr.mxu0 0.0
        %2221 = vmatpush1.msra.mxu0 0.0
        %2222 = vmatprep.subr.mxu0 0.0
        %2223 = vmatpush1.msra.mxu0 0.0
        %2224 = vmatprep.subr.mxu0 0.0
        %2225 = vmatpush1.msra.mxu0 0.0
        %2226 = vmatprep.subr.mxu0 0.0
        %2227 = vmatpush1.msra.mxu0 0.0
        %2228 = vmatprep.subr.mxu0 0.0
        %2229 = vmatpush1.msra.mxu0 0.0
        %2230 = vmatprep.subr.mxu0 0.0
        %2231 = vmatpush1.msra.mxu0 0.0
        %2232 = vmatprep.subr.mxu0 0.0
        %2233 = vmatpush1.msra.mxu0 0.0
        %2234 = vmatprep.subr.mxu0 0.0
        %2235 = vmatpush1.msra.mxu0 0.0
        %2236 = vmatprep.subr.mxu0 0.0
        %2237 = vmatpush1.msra.mxu0 0.0
        %2238 = vmatprep.subr.mxu0 0.0
        %2239 = vmatpush1.msra.mxu0 %v2206
        %2240 = vmatprep.subr.mxu0 0.0
        %2241 = vmatpush2.msra.mxu0 0.0
        %2242 = vmatprep.subr.mxu0 0.0
        %2243 = vmatpush2.msra.mxu0 0.0
        %2244 = vmatprep.subr.mxu0 0.0
        %2245 = vmatpush2.msra.mxu0 0.0
        %2246 = vmatprep.subr.mxu0 0.0
        %2247 = vmatpush2.msra.mxu0 0.0
        %2248 = vmatprep.subr.mxu0 0.0
        %2249 = vmatpush2.msra.mxu0 0.0
        %2250 = vmatprep.subr.mxu0 0.0
        %2251 = vmatpush2.msra.mxu0 0.0
        %2252 = vmatprep.subr.mxu0 0.0
        %2253 = vmatpush2.msra.mxu0 0.0
        %2254 = vmatprep.subr.mxu0 0.0
        %2255 = vmatpush2.msra.mxu0 0.0
        %2256 = vmatprep.subr.mxu0 0.0
        %2257 = vmatpush2.msra.mxu0 0.0
        %2258 = vmatprep.subr.mxu0 0.0
        %2259 = vmatpush2.msra.mxu0 0.0
        %2260 = vmatprep.subr.mxu0 0.0
        %2261 = vmatpush2.msra.mxu0 0.0
        %2262 = vmatprep.subr.mxu0 0.0
        %2263 = vmatpush2.msra.mxu0 0.0
        %2264 = vmatprep.subr.mxu0 0.0
        %2265 = vmatpush2.msra.mxu0 0.0
        %2266 = vmatprep.subr.mxu0 0.0
        %2267 = vmatpush2.msra.mxu0 0.0
        %2268 = vmatprep.subr.mxu0 0.0
        %2269 = vmatpush2.msra.mxu0 0.0
        %2270 = vmatprep.subr.mxu0 0.0
        %2271 = vmatpush2.msra.mxu0 0.0
        %2272 = vmatprep.mubr.f32.mxu0 0.0
        %2273 = vmatmul.mubr.f32.gmra.mxu0 %v2203
        %v2274 = vpop.f32.mrf.mxu0
        %v2275 = vadd.f32 0.0, %v2274
        %v2276 = vpop.f32.mrf.mxu0
        %2277 = vdwg.mxu0
        %v2278 = vld [vmem:[%s3 + $0x18] sm:$0xff]
        %v2280 = vsel %vm679, %v2275, 0
        %2282 = vmatprep.subr.mxu0 0.0
        %2283 = vmatpush1.msra.mxu0 0.0
        %2284 = vmatprep.subr.mxu0 0.0
        %2285 = vmatpush1.msra.mxu0 0.0
        %2286 = vmatprep.subr.mxu0 0.0
        %2287 = vmatpush1.msra.mxu0 0.0
        %2288 = vmatprep.subr.mxu0 0.0
        %2289 = vmatpush1.msra.mxu0 0.0
        %2290 = vmatprep.subr.mxu0 0.0
        %2291 = vmatpush1.msra.mxu0 0.0
        %2292 = vmatprep.subr.mxu0 0.0
        %2293 = vmatpush1.msra.mxu0 0.0
        %2294 = vmatprep.subr.mxu0 0.0
        %2295 = vmatpush1.msra.mxu0 0.0
        %2296 = vmatprep.subr.mxu0 0.0
        %2297 = vmatpush1.msra.mxu0 0.0
        %2298 = vmatprep.subr.mxu0 0.0
        %2299 = vmatpush1.msra.mxu0 0.0
        %2300 = vmatprep.subr.mxu0 0.0
        %2301 = vmatpush1.msra.mxu0 0.0
        %2302 = vmatprep.subr.mxu0 0.0
        %2303 = vmatpush1.msra.mxu0 0.0
        %2304 = vmatprep.subr.mxu0 0.0
        %2305 = vmatpush1.msra.mxu0 0.0
        %2306 = vmatprep.subr.mxu0 0.0
        %2307 = vmatpush1.msra.mxu0 0.0
        %2308 = vmatprep.subr.mxu0 0.0
        %2309 = vmatpush1.msra.mxu0 0.0
        %2310 = vmatprep.subr.mxu0 0.0
        %2311 = vmatpush1.msra.mxu0 0.0
        %2312 = vmatprep.subr.mxu0 0.0
        %2313 = vmatpush1.msra.mxu0 %v2278
        %2314 = vmatprep.subr.mxu0 0.0
        %2315 = vmatpush2.msra.mxu0 0.0
        %2316 = vmatprep.subr.mxu0 0.0
        %2317 = vmatpush2.msra.mxu0 0.0
        %2318 = vmatprep.subr.mxu0 0.0
        %2319 = vmatpush2.msra.mxu0 0.0
        %2320 = vmatprep.subr.mxu0 0.0
        %2321 = vmatpush2.msra.mxu0 0.0
        %2322 = vmatprep.subr.mxu0 0.0
        %2323 = vmatpush2.msra.mxu0 0.0
        %2324 = vmatprep.subr.mxu0 0.0
        %2325 = vmatpush2.msra.mxu0 0.0
        %2326 = vmatprep.subr.mxu0 0.0
        %2327 = vmatpush2.msra.mxu0 0.0
        %2328 = vmatprep.subr.mxu0 0.0
        %2329 = vmatpush2.msra.mxu0 0.0
        %2330 = vmatprep.subr.mxu0 0.0
        %2331 = vmatpush2.msra.mxu0 0.0
        %2332 = vmatprep.subr.mxu0 0.0
        %2333 = vmatpush2.msra.mxu0 0.0
        %2334 = vmatprep.subr.mxu0 0.0
        %2335 = vmatpush2.msra.mxu0 0.0
        %2336 = vmatprep.subr.mxu0 0.0
        %2337 = vmatpush2.msra.mxu0 0.0
        %2338 = vmatprep.subr.mxu0 0.0
        %2339 = vmatpush2.msra.mxu0 0.0
        %2340 = vmatprep.subr.mxu0 0.0
        %2341 = vmatpush2.msra.mxu0 0.0
        %2342 = vmatprep.subr.mxu0 0.0
        %2343 = vmatpush2.msra.mxu0 0.0
        %2344 = vmatprep.subr.mxu0 0.0
        %2345 = vmatpush2.msra.mxu0 0.0
        %2346 = vmatprep.mubr.f32.mxu0 0.0
        %2347 = vmatmul.mubr.f32.gmra.mxu0 %v2280
        %v2348 = vpop.f32.mrf.mxu0
        %v2349 = vadd.f32 0.0, %v2348
        %v2350 = vpop.f32.mrf.mxu0
        %2351 = vdwg.mxu0
        %v2352 = vadd.f32 %v1874, %v2349
        %v2353 = vadd.f32 %v401, %v2352
        %v2354 = vld [vmem:[%s3 + $0x20] sm:$0x1]
        %v2355 = vlaneseq
        %v2356 = vshrl.u32 %v2355, 7
        %v2357 = vsub.s32 0, %v2356
        %v2358 = vrot.slane %v2354, %v2357
        %v2359 = vadd.f32 %v2353, %v2358
        %s2360 = scalar_lea.vmem %s4, 2
        %v2361 = vld [vmem:[%s2360] sm:$0x1]
        %s2362 = scalar_lea.vmem %s4, 3
        %v2363 = vld [vmem:[%s2362] sm:$0x1]
        %v2364 = vsel %vm407, %v2359, 0.0
        %2365 = vadd.xlane.f32.xlu0 %v2364
        %v2366 = vpop.xlane.xlu0 %2365
        %v2367 = vmul.f32 %v2366, %v411
        %v2368 = vsub.f32 %v2359, %v2367
        %v2369 = vmul.f32 %v2368, %v2368
        %v2370 = vsel %vm407, %v2369, 0.0
        %2371 = vadd.xlane.f32.xlu0 %v2370
        %v2372 = vpop.xlane.xlu0 %2371
        %v2373 = vmul.f32 %v2372, %v411
        %v2374 = vadd.f32 %v2373, 1e-06
        %v2375 = vrsqrt.pop %v2374
        %v2376 = vmul.f32 %v2368, %v2375
        %v2378 = vlaneseq
        %v2379 = vshrl.u32 %v2378, 7
        %v2380 = vsub.s32 0, %v2379
        %v2381 = vrot.slane %v2361, %v2380
        %v2383 = vmul.f32 %v2376, %v2381
        %v2385 = vlaneseq
        %v2386 = vshrl.u32 %v2385, 7
        %v2387 = vsub.s32 0, %v2386
        %v2388 = vrot.slane %v2363, %v2387
        %v2390 = vadd.f32 %v2383, %v2388
        %v2391 = vld [vmem:[%s5] sm:$0xff]
        %v2392 = vld [vmem:[%s5 + $0x8] sm:$0xff]
        %v2393 = vld [vmem:[%s5 + $0x10] sm:$0xff]
        %v2394 = vld [vmem:[%s5 + $0x18] sm:$0xff]
        %v2395 = vld [vmem:[%s5 + $0x20] sm:$0x1]
        %v2396 = vlaneseq
        %v2397 = vshrl.u32 %v2396, 7
        %v2398 = vsub.s32 0, %v2397
        %v2399 = vrot.slane %v2395, %v2398
        %v2401 = vsel %vm445, %v2390, 0
        %2403 = vmatprep.subr.mxu0 0.0
        %2404 = vmatpush1.msra.mxu0 0.0
        %2405 = vmatprep.subr.mxu0 0.0
        %2406 = vmatpush1.msra.mxu0 0.0
        %2407 = vmatprep.subr.mxu0 0.0
        %2408 = vmatpush1.msra.mxu0 0.0
        %2409 = vmatprep.subr.mxu0 0.0
        %2410 = vmatpush1.msra.mxu0 0.0
        %2411 = vmatprep.subr.mxu0 0.0
        %2412 = vmatpush1.msra.mxu0 0.0
        %2413 = vmatprep.subr.mxu0 0.0
        %2414 = vmatpush1.msra.mxu0 0.0
        %2415 = vmatprep.subr.mxu0 0.0
        %2416 = vmatpush1.msra.mxu0 0.0
        %2417 = vmatprep.subr.mxu0 0.0
        %2418 = vmatpush1.msra.mxu0 0.0
        %2419 = vmatprep.subr.mxu0 0.0
        %2420 = vmatpush1.msra.mxu0 0.0
        %2421 = vmatprep.subr.mxu0 0.0
        %2422 = vmatpush1.msra.mxu0 0.0
        %2423 = vmatprep.subr.mxu0 0.0
        %2424 = vmatpush1.msra.mxu0 0.0
        %2425 = vmatprep.subr.mxu0 0.0
        %2426 = vmatpush1.msra.mxu0 0.0
        %2427 = vmatprep.subr.mxu0 0.0
        %2428 = vmatpush1.msra.mxu0 %v2394
        %2429 = vmatprep.subr.mxu0 0.0
        %2430 = vmatpush1.msra.mxu0 %v2393
        %2431 = vmatprep.subr.mxu0 0.0
        %2432 = vmatpush1.msra.mxu0 %v2392
        %2433 = vmatprep.subr.mxu0 0.0
        %2434 = vmatpush1.msra.mxu0 %v2391
        %2435 = vmatprep.subr.mxu0 0.0
        %2436 = vmatpush2.msra.mxu0 0.0
        %2437 = vmatprep.subr.mxu0 0.0
        %2438 = vmatpush2.msra.mxu0 0.0
        %2439 = vmatprep.subr.mxu0 0.0
        %2440 = vmatpush2.msra.mxu0 0.0
        %2441 = vmatprep.subr.mxu0 0.0
        %2442 = vmatpush2.msra.mxu0 0.0
        %2443 = vmatprep.subr.mxu0 0.0
        %2444 = vmatpush2.msra.mxu0 0.0
        %2445 = vmatprep.subr.mxu0 0.0
        %2446 = vmatpush2.msra.mxu0 0.0
        %2447 = vmatprep.subr.mxu0 0.0
        %2448 = vmatpush2.msra.mxu0 0.0
        %2449 = vmatprep.subr.mxu0 0.0
        %2450 = vmatpush2.msra.mxu0 0.0
        %2451 = vmatprep.subr.mxu0 0.0
        %2452 = vmatpush2.msra.mxu0 0.0
        %2453 = vmatprep.subr.mxu0 0.0
        %2454 = vmatpush2.msra.mxu0 0.0
        %2455 = vmatprep.subr.mxu0 0.0
        %2456 = vmatpush2.msra.mxu0 0.0
        %2457 = vmatprep.subr.mxu0 0.0
        %2458 = vmatpush2.msra.mxu0 0.0
        %2459 = vmatprep.subr.mxu0 0.0
        %2460 = vmatpush2.msra.mxu0 0.0
        %2461 = vmatprep.subr.mxu0 0.0
        %2462 = vmatpush2.msra.mxu0 0.0
        %2463 = vmatprep.subr.mxu0 0.0
        %2464 = vmatpush2.msra.mxu0 0.0
        %2465 = vmatprep.subr.mxu0 0.0
        %2466 = vmatpush2.msra.mxu0 0.0
        %2467 = vmatprep.mubr.f32.mxu0 0.0
        %2468 = vmatmul.mubr.f32.gmra.mxu0 %v2401
        %v2469 = vpop.f32.mrf.mxu0
        %v2470 = vadd.f32 %v2399, %v2469
        %v2471 = vpop.f32.mrf.mxu0
        %2472 = vdwg.mxu0
        %v2473 = vmul.f32 %v2470, 0.5
        %v2474 = vmul.f32 %v2470, 0.70710677
        %v2475 = verf.f32.pop %v2474
        %v2476 = vadd.f32 %v2475, 1.0
        %v2477 = vmul.f32 %v2473, %v2476
        %v2478 = vld [vmem:[%s6] sm:$0xff]
        %v2479 = vld [vmem:[%s6 + $0x8] sm:$0xff]
        %v2480 = vld [vmem:[%s6 + $0x10] sm:$0xff]
        %v2481 = vld [vmem:[%s6 + $0x18] sm:$0xff]
        %v2482 = vld [vmem:[%s6 + $0x20] sm:$0xff]
        %v2483 = vld [vmem:[%s6 + $0x28] sm:$0xff]
        %v2484 = vld [vmem:[%s6 + $0x30] sm:$0xff]
        %v2485 = vld [vmem:[%s6 + $0x38] sm:$0xff]
        %v2487 = vsel %vm330, %v2477, 0
        %2489 = vmatprep.subr.mxu0 0.0
        %2490 = vmatpush1.msra.mxu0 0.0
        %2491 = vmatprep.subr.mxu0 0.0
        %2492 = vmatpush1.msra.mxu0 0.0
        %2493 = vmatprep.subr.mxu0 0.0
        %2494 = vmatpush1.msra.mxu0 0.0
        %2495 = vmatprep.subr.mxu0 0.0
        %2496 = vmatpush1.msra.mxu0 0.0
        %2497 = vmatprep.subr.mxu0 0.0
        %2498 = vmatpush1.msra.mxu0 0.0
        %2499 = vmatprep.subr.mxu0 0.0
        %2500 = vmatpush1.msra.mxu0 0.0
        %2501 = vmatprep.subr.mxu0 0.0
        %2502 = vmatpush1.msra.mxu0 0.0
        %2503 = vmatprep.subr.mxu0 0.0
        %2504 = vmatpush1.msra.mxu0 0.0
        %2505 = vmatprep.subr.mxu0 0.0
        %2506 = vmatpush1.msra.mxu0 %v2485
        %2507 = vmatprep.subr.mxu0 0.0
        %2508 = vmatpush1.msra.mxu0 %v2484
        %2509 = vmatprep.subr.mxu0 0.0
        %2510 = vmatpush1.msra.mxu0 %v2483
        %2511 = vmatprep.subr.mxu0 0.0
        %2512 = vmatpush1.msra.mxu0 %v2482
        %2513 = vmatprep.subr.mxu0 0.0
        %2514 = vmatpush1.msra.mxu0 %v2481
        %2515 = vmatprep.subr.mxu0 0.0
        %2516 = vmatpush1.msra.mxu0 %v2480
        %2517 = vmatprep.subr.mxu0 0.0
        %2518 = vmatpush1.msra.mxu0 %v2479
        %2519 = vmatprep.subr.mxu0 0.0
        %2520 = vmatpush1.msra.mxu0 %v2478
        %2521 = vmatprep.subr.mxu0 0.0
        %2522 = vmatpush2.msra.mxu0 0.0
        %2523 = vmatprep.subr.mxu0 0.0
        %2524 = vmatpush2.msra.mxu0 0.0
        %2525 = vmatprep.subr.mxu0 0.0
        %2526 = vmatpush2.msra.mxu0 0.0
        %2527 = vmatprep.subr.mxu0 0.0
        %2528 = vmatpush2.msra.mxu0 0.0
        %2529 = vmatprep.subr.mxu0 0.0
        %2530 = vmatpush2.msra.mxu0 0.0
        %2531 = vmatprep.subr.mxu0 0.0
        %2532 = vmatpush2.msra.mxu0 0.0
        %2533 = vmatprep.subr.mxu0 0.0
        %2534 = vmatpush2.msra.mxu0 0.0
        %2535 = vmatprep.subr.mxu0 0.0
        %2536 = vmatpush2.msra.mxu0 0.0
        %2537 = vmatprep.subr.mxu0 0.0
        %2538 = vmatpush2.msra.mxu0 0.0
        %2539 = vmatprep.subr.mxu0 0.0
        %2540 = vmatpush2.msra.mxu0 0.0
        %2541 = vmatprep.subr.mxu0 0.0
        %2542 = vmatpush2.msra.mxu0 0.0
        %2543 = vmatprep.subr.mxu0 0.0
        %2544 = vmatpush2.msra.mxu0 0.0
        %2545 = vmatprep.subr.mxu0 0.0
        %2546 = vmatpush2.msra.mxu0 0.0
        %2547 = vmatprep.subr.mxu0 0.0
        %2548 = vmatpush2.msra.mxu0 0.0
        %2549 = vmatprep.subr.mxu0 0.0
        %2550 = vmatpush2.msra.mxu0 0.0
        %2551 = vmatprep.subr.mxu0 0.0
        %2552 = vmatpush2.msra.mxu0 0.0
        %2553 = vmatprep.mubr.f32.mxu0 0.0
        %2554 = vmatmul.mubr.f32.gmra.mxu0 %v2487
        %v2555 = vpop.f32.mrf.mxu0
        %v2556 = vadd.f32 0.0, %v2555
        %v2557 = vpop.f32.mrf.mxu0
        %2558 = vdwg.mxu0
        %v2559 = vadd.f32 %v2359, %v2556
        %v2560 = vld [vmem:[%s6 + $0x40] sm:$0x1]
        %v2561 = vlaneseq
        %v2562 = vshrl.u32 %v2561, 7
        %v2563 = vsub.s32 0, %v2562
        %v2564 = vrot.slane %v2560, %v2563
        %v2565 = vadd.f32 %v2559, %v2564
        %s2566 = scalar_lea.vmem %s4, 4
        %v2567 = vld [vmem:[%s2566] sm:$0x1]
        %s2568 = scalar_lea.vmem %s4, 5
        %v2569 = vld [vmem:[%s2568] sm:$0x1]
        %v2570 = vsel %vm407, %v2565, 0.0
        %2571 = vadd.xlane.f32.xlu0 %v2570
        %v2572 = vpop.xlane.xlu0 %2571
        %v2573 = vmul.f32 %v2572, %v411
        %v2574 = vsub.f32 %v2565, %v2573
        %v2575 = vmul.f32 %v2574, %v2574
        %v2576 = vsel %vm407, %v2575, 0.0
        %2577 = vadd.xlane.f32.xlu0 %v2576
        %v2578 = vpop.xlane.xlu0 %2577
        %v2579 = vmul.f32 %v2578, %v411
        %v2580 = vadd.f32 %v2579, 1e-06
        %v2581 = vrsqrt.pop %v2580
        %v2582 = vmul.f32 %v2574, %v2581
        %v2584 = vlaneseq
        %v2585 = vshrl.u32 %v2584, 7
        %v2586 = vsub.s32 0, %v2585
        %v2587 = vrot.slane %v2567, %v2586
        %v2589 = vmul.f32 %v2582, %v2587
        %v2591 = vlaneseq
        %v2592 = vshrl.u32 %v2591, 7
        %v2593 = vsub.s32 0, %v2592
        %v2594 = vrot.slane %v2569, %v2593
        %v2596 = vadd.f32 %v2589, %v2594
        %s2597 = scalar_lea.vmem %s2, 480
        %v2598 = vld [vmem:[%s2597] sm:$0xff]
        %v2599 = vld [vmem:[%s2597 + $0x8] sm:$0xff]
        %v2600 = vld [vmem:[%s2597 + $0x10] sm:$0xff]
        %v2601 = vld [vmem:[%s2597 + $0x18] sm:$0xff]
        %v2602 = vld [vmem:[%s2597 + $0x20] sm:$0x1]
        %v2603 = vlaneseq
        %v2604 = vshrl.u32 %v2603, 7
        %v2605 = vsub.s32 0, %v2604
        %v2606 = vrot.slane %v2602, %v2605
        %v2608 = vsel %vm445, %v2596, 0
        %2610 = vmatprep.subr.mxu0 0.0
        %2611 = vmatpush1.msra.mxu0 0.0
        %2612 = vmatprep.subr.mxu0 0.0
        %2613 = vmatpush1.msra.mxu0 0.0
        %2614 = vmatprep.subr.mxu0 0.0
        %2615 = vmatpush1.msra.mxu0 0.0
        %2616 = vmatprep.subr.mxu0 0.0
        %2617 = vmatpush1.msra.mxu0 0.0
        %2618 = vmatprep.subr.mxu0 0.0
        %2619 = vmatpush1.msra.mxu0 0.0
        %2620 = vmatprep.subr.mxu0 0.0
        %2621 = vmatpush1.msra.mxu0 0.0
        %2622 = vmatprep.subr.mxu0 0.0
        %2623 = vmatpush1.msra.mxu0 0.0
        %2624 = vmatprep.subr.mxu0 0.0
        %2625 = vmatpush1.msra.mxu0 0.0
        %2626 = vmatprep.subr.mxu0 0.0
        %2627 = vmatpush1.msra.mxu0 0.0
        %2628 = vmatprep.subr.mxu0 0.0
        %2629 = vmatpush1.msra.mxu0 0.0
        %2630 = vmatprep.subr.mxu0 0.0
        %2631 = vmatpush1.msra.mxu0 0.0
        %2632 = vmatprep.subr.mxu0 0.0
        %2633 = vmatpush1.msra.mxu0 0.0
        %2634 = vmatprep.subr.mxu0 0.0
        %2635 = vmatpush1.msra.mxu0 %v2601
        %2636 = vmatprep.subr.mxu0 0.0
        %2637 = vmatpush1.msra.mxu0 %v2600
        %2638 = vmatprep.subr.mxu0 0.0
        %2639 = vmatpush1.msra.mxu0 %v2599
        %2640 = vmatprep.subr.mxu0 0.0
        %2641 = vmatpush1.msra.mxu0 %v2598
        %2642 = vmatprep.subr.mxu0 0.0
        %2643 = vmatpush2.msra.mxu0 0.0
        %2644 = vmatprep.subr.mxu0 0.0
        %2645 = vmatpush2.msra.mxu0 0.0
        %2646 = vmatprep.subr.mxu0 0.0
        %2647 = vmatpush2.msra.mxu0 0.0
        %2648 = vmatprep.subr.mxu0 0.0
        %2649 = vmatpush2.msra.mxu0 0.0
        %2650 = vmatprep.subr.mxu0 0.0
        %2651 = vmatpush2.msra.mxu0 0.0
        %2652 = vmatprep.subr.mxu0 0.0
        %2653 = vmatpush2.msra.mxu0 0.0
        %2654 = vmatprep.subr.mxu0 0.0
        %2655 = vmatpush2.msra.mxu0 0.0
        %2656 = vmatprep.subr.mxu0 0.0
        %2657 = vmatpush2.msra.mxu0 0.0
        %2658 = vmatprep.subr.mxu0 0.0
        %2659 = vmatpush2.msra.mxu0 0.0
        %2660 = vmatprep.subr.mxu0 0.0
        %2661 = vmatpush2.msra.mxu0 0.0
        %2662 = vmatprep.subr.mxu0 0.0
        %2663 = vmatpush2.msra.mxu0 0.0
        %2664 = vmatprep.subr.mxu0 0.0
        %2665 = vmatpush2.msra.mxu0 0.0
        %2666 = vmatprep.subr.mxu0 0.0
        %2667 = vmatpush2.msra.mxu0 0.0
        %2668 = vmatprep.subr.mxu0 0.0
        %2669 = vmatpush2.msra.mxu0 0.0
        %2670 = vmatprep.subr.mxu0 0.0
        %2671 = vmatpush2.msra.mxu0 0.0
        %2672 = vmatprep.subr.mxu0 0.0
        %2673 = vmatpush2.msra.mxu0 0.0
        %2674 = vmatprep.mubr.f32.mxu0 0.0
        %2675 = vmatmul.mubr.f32.gmra.mxu0 %v2608
        %v2676 = vpop.f32.mrf.mxu0
        %v2677 = vadd.f32 %v2606, %v2676
        %v2678 = vpop.f32.mrf.mxu0
        %2679 = vdwg.mxu0
        %s2680 = scalar_lea.vmem %s2, 640
        %v2681 = vld [vmem:[%s2680] sm:$0xff]
        %v2682 = vld [vmem:[%s2680 + $0x8] sm:$0xff]
        %v2683 = vld [vmem:[%s2680 + $0x10] sm:$0xff]
        %v2684 = vld [vmem:[%s2680 + $0x18] sm:$0xff]
        %v2685 = vld [vmem:[%s2680 + $0x20] sm:$0x1]
        %v2686 = vlaneseq
        %v2687 = vshrl.u32 %v2686, 7
        %v2688 = vsub.s32 0, %v2687
        %v2689 = vrot.slane %v2685, %v2688
        %2690 = vmatprep.subr.mxu0 0.0
        %2691 = vmatpush1.msra.mxu0 0.0
        %2692 = vmatprep.subr.mxu0 0.0
        %2693 = vmatpush1.msra.mxu0 0.0
        %2694 = vmatprep.subr.mxu0 0.0
        %2695 = vmatpush1.msra.mxu0 0.0
        %2696 = vmatprep.subr.mxu0 0.0
        %2697 = vmatpush1.msra.mxu0 0.0
        %2698 = vmatprep.subr.mxu0 0.0
        %2699 = vmatpush1.msra.mxu0 0.0
        %2700 = vmatprep.subr.mxu0 0.0
        %2701 = vmatpush1.msra.mxu0 0.0
        %2702 = vmatprep.subr.mxu0 0.0
        %2703 = vmatpush1.msra.mxu0 0.0
        %2704 = vmatprep.subr.mxu0 0.0
        %2705 = vmatpush1.msra.mxu0 0.0
        %2706 = vmatprep.subr.mxu0 0.0
        %2707 = vmatpush1.msra.mxu0 0.0
        %2708 = vmatprep.subr.mxu0 0.0
        %2709 = vmatpush1.msra.mxu0 0.0
        %2710 = vmatprep.subr.mxu0 0.0
        %2711 = vmatpush1.msra.mxu0 0.0
        %2712 = vmatprep.subr.mxu0 0.0
        %2713 = vmatpush1.msra.mxu0 0.0
        %2714 = vmatprep.subr.mxu0 0.0
        %2715 = vmatpush1.msra.mxu0 %v2684
        %2716 = vmatprep.subr.mxu0 0.0
        %2717 = vmatpush1.msra.mxu0 %v2683
        %2718 = vmatprep.subr.mxu0 0.0
        %2719 = vmatpush1.msra.mxu0 %v2682
        %2720 = vmatprep.subr.mxu0 0.0
        %2721 = vmatpush1.msra.mxu0 %v2681
        %2722 = vmatprep.subr.mxu0 0.0
        %2723 = vmatpush2.msra.mxu0 0.0
        %2724 = vmatprep.subr.mxu0 0.0
        %2725 = vmatpush2.msra.mxu0 0.0
        %2726 = vmatprep.subr.mxu0 0.0
        %2727 = vmatpush2.msra.mxu0 0.0
        %2728 = vmatprep.subr.mxu0 0.0
        %2729 = vmatpush2.msra.mxu0 0.0
        %2730 = vmatprep.subr.mxu0 0.0
        %2731 = vmatpush2.msra.mxu0 0.0
        %2732 = vmatprep.subr.mxu0 0.0
        %2733 = vmatpush2.msra.mxu0 0.0
        %2734 = vmatprep.subr.mxu0 0.0
        %2735 = vmatpush2.msra.mxu0 0.0
        %2736 = vmatprep.subr.mxu0 0.0
        %2737 = vmatpush2.msra.mxu0 0.0
        %2738 = vmatprep.subr.mxu0 0.0
        %2739 = vmatpush2.msra.mxu0 0.0
        %2740 = vmatprep.subr.mxu0 0.0
        %2741 = vmatpush2.msra.mxu0 0.0
        %2742 = vmatprep.subr.mxu0 0.0
        %2743 = vmatpush2.msra.mxu0 0.0
        %2744 = vmatprep.subr.mxu0 0.0
        %2745 = vmatpush2.msra.mxu0 0.0
        %2746 = vmatprep.subr.mxu0 0.0
        %2747 = vmatpush2.msra.mxu0 0.0
        %2748 = vmatprep.subr.mxu0 0.0
        %2749 = vmatpush2.msra.mxu0 0.0
        %2750 = vmatprep.subr.mxu0 0.0
        %2751 = vmatpush2.msra.mxu0 0.0
        %2752 = vmatprep.subr.mxu0 0.0
        %2753 = vmatpush2.msra.mxu0 0.0
        %2754 = vmatprep.mubr.f32.mxu0 0.0
        %2755 = vmatmul.mubr.f32.gmra.mxu0 %v2608
        %v2756 = vpop.f32.mrf.mxu0
        %v2757 = vadd.f32 %v2689, %v2756
        %v2758 = vpop.f32.mrf.mxu0
        %2759 = vdwg.mxu0
        %s2760 = scalar_lea.vmem %s2, 800
        %v2761 = vld [vmem:[%s2760] sm:$0xff]
        %v2762 = vld [vmem:[%s2760 + $0x8] sm:$0xff]
        %v2763 = vld [vmem:[%s2760 + $0x10] sm:$0xff]
        %v2764 = vld [vmem:[%s2760 + $0x18] sm:$0xff]
        %v2765 = vld [vmem:[%s2760 + $0x20] sm:$0x1]
        %v2766 = vlaneseq
        %v2767 = vshrl.u32 %v2766, 7
        %v2768 = vsub.s32 0, %v2767
        %v2769 = vrot.slane %v2765, %v2768
        %2770 = vmatprep.subr.mxu0 0.0
        %2771 = vmatpush1.msra.mxu0 0.0
        %2772 = vmatprep.subr.mxu0 0.0
        %2773 = vmatpush1.msra.mxu0 0.0
        %2774 = vmatprep.subr.mxu0 0.0
        %2775 = vmatpush1.msra.mxu0 0.0
        %2776 = vmatprep.subr.mxu0 0.0
        %2777 = vmatpush1.msra.mxu0 0.0
        %2778 = vmatprep.subr.mxu0 0.0
        %2779 = vmatpush1.msra.mxu0 0.0
        %2780 = vmatprep.subr.mxu0 0.0
        %2781 = vmatpush1.msra.mxu0 0.0
        %2782 = vmatprep.subr.mxu0 0.0
        %2783 = vmatpush1.msra.mxu0 0.0
        %2784 = vmatprep.subr.mxu0 0.0
        %2785 = vmatpush1.msra.mxu0 0.0
        %2786 = vmatprep.subr.mxu0 0.0
        %2787 = vmatpush1.msra.mxu0 0.0
        %2788 = vmatprep.subr.mxu0 0.0
        %2789 = vmatpush1.msra.mxu0 0.0
        %2790 = vmatprep.subr.mxu0 0.0
        %2791 = vmatpush1.msra.mxu0 0.0
        %2792 = vmatprep.subr.mxu0 0.0
        %2793 = vmatpush1.msra.mxu0 0.0
        %2794 = vmatprep.subr.mxu0 0.0
        %2795 = vmatpush1.msra.mxu0 %v2764
        %2796 = vmatprep.subr.mxu0 0.0
        %2797 = vmatpush1.msra.mxu0 %v2763
        %2798 = vmatprep.subr.mxu0 0.0
        %2799 = vmatpush1.msra.mxu0 %v2762
        %2800 = vmatprep.subr.mxu0 0.0
        %2801 = vmatpush1.msra.mxu0 %v2761
        %2802 = vmatprep.subr.mxu0 0.0
        %2803 = vmatpush2.msra.mxu0 0.0
        %2804 = vmatprep.subr.mxu0 0.0
        %2805 = vmatpush2.msra.mxu0 0.0
        %2806 = vmatprep.subr.mxu0 0.0
        %2807 = vmatpush2.msra.mxu0 0.0
        %2808 = vmatprep.subr.mxu0 0.0
        %2809 = vmatpush2.msra.mxu0 0.0
        %2810 = vmatprep.subr.mxu0 0.0
        %2811 = vmatpush2.msra.mxu0 0.0
        %2812 = vmatprep.subr.mxu0 0.0
        %2813 = vmatpush2.msra.mxu0 0.0
        %2814 = vmatprep.subr.mxu0 0.0
        %2815 = vmatpush2.msra.mxu0 0.0
        %2816 = vmatprep.subr.mxu0 0.0
        %2817 = vmatpush2.msra.mxu0 0.0
        %2818 = vmatprep.subr.mxu0 0.0
        %2819 = vmatpush2.msra.mxu0 0.0
        %2820 = vmatprep.subr.mxu0 0.0
        %2821 = vmatpush2.msra.mxu0 0.0
        %2822 = vmatprep.subr.mxu0 0.0
        %2823 = vmatpush2.msra.mxu0 0.0
        %2824 = vmatprep.subr.mxu0 0.0
        %2825 = vmatpush2.msra.mxu0 0.0
        %2826 = vmatprep.subr.mxu0 0.0
        %2827 = vmatpush2.msra.mxu0 0.0
        %2828 = vmatprep.subr.mxu0 0.0
        %2829 = vmatpush2.msra.mxu0 0.0
        %2830 = vmatprep.subr.mxu0 0.0
        %2831 = vmatpush2.msra.mxu0 0.0
        %2832 = vmatprep.subr.mxu0 0.0
        %2833 = vmatpush2.msra.mxu0 0.0
        %2834 = vmatprep.mubr.f32.mxu0 0.0
        %2835 = vmatmul.mubr.f32.gmra.mxu0 %v2608
        %v2836 = vpop.f32.mrf.mxu0
        %v2837 = vadd.f32 %v2769, %v2836
        %v2838 = vpop.f32.mrf.mxu0
        %2839 = vdwg.mxu0
        %v2841 = vsel %vm679, %v2677, 0
        %v2844 = vsel %vm679, %v2757, 0
        %2846 = vmatprep.subr.mxu0 0.0
        %2847 = vmatpush1.xpose.msra.mxu0 0.0
        %2848 = vmatprep.subr.mxu0 0.0
        %2849 = vmatpush1.xpose.msra.mxu0 0.0
        %2850 = vmatprep.subr.mxu0 0.0
        %2851 = vmatpush1.xpose.msra.mxu0 0.0
        %2852 = vmatprep.subr.mxu0 0.0
        %2853 = vmatpush1.xpose.msra.mxu0 0.0
        %2854 = vmatprep.subr.mxu0 0.0
        %2855 = vmatpush1.xpose.msra.mxu0 0.0
        %2856 = vmatprep.subr.mxu0 0.0
        %2857 = vmatpush1.xpose.msra.mxu0 0.0
        %2858 = vmatprep.subr.mxu0 0.0
        %2859 = vmatpush1.xpose.msra.mxu0 0.0
        %2860 = vmatprep.subr.mxu0 0.0
        %2861 = vmatpush1.xpose.msra.mxu0 0.0
        %2862 = vmatprep.subr.mxu0 0.0
        %2863 = vmatpush1.xpose.msra.mxu0 0.0
        %2864 = vmatprep.subr.mxu0 0.0
        %2865 = vmatpush1.xpose.msra.mxu0 0.0
        %2866 = vmatprep.subr.mxu0 0.0
        %2867 = vmatpush1.xpose.msra.mxu0 0.0
        %2868 = vmatprep.subr.mxu0 0.0
        %2869 = vmatpush1.xpose.msra.mxu0 0.0
        %2870 = vmatprep.subr.mxu0 0.0
        %2871 = vmatpush1.xpose.msra.mxu0 0.0
        %2872 = vmatprep.subr.mxu0 0.0
        %2873 = vmatpush1.xpose.msra.mxu0 0.0
        %2874 = vmatprep.subr.mxu0 0.0
        %2875 = vmatpush1.xpose.msra.mxu0 0.0
        %2876 = vmatprep.subr.mxu0 0.0
        %2877 = vmatpush1.xpose.msra.mxu0 %v2844
        %2878 = vmatprep.subr.mxu0 0.0
        %2879 = vmatpush2.xpose.msra.mxu0 0.0
        %2880 = vmatprep.subr.mxu0 0.0
        %2881 = vmatpush2.xpose.msra.mxu0 0.0
        %2882 = vmatprep.subr.mxu0 0.0
        %2883 = vmatpush2.xpose.msra.mxu0 0.0
        %2884 = vmatprep.subr.mxu0 0.0
        %2885 = vmatpush2.xpose.msra.mxu0 0.0
        %2886 = vmatprep.subr.mxu0 0.0
        %2887 = vmatpush2.xpose.msra.mxu0 0.0
        %2888 = vmatprep.subr.mxu0 0.0
        %2889 = vmatpush2.xpose.msra.mxu0 0.0
        %2890 = vmatprep.subr.mxu0 0.0
        %2891 = vmatpush2.xpose.msra.mxu0 0.0
        %2892 = vmatprep.subr.mxu0 0.0
        %2893 = vmatpush2.xpose.msra.mxu0 0.0
        %2894 = vmatprep.subr.mxu0 0.0
        %2895 = vmatpush2.xpose.msra.mxu0 0.0
        %2896 = vmatprep.subr.mxu0 0.0
        %2897 = vmatpush2.xpose.msra.mxu0 0.0
        %2898 = vmatprep.subr.mxu0 0.0
        %2899 = vmatpush2.xpose.msra.mxu0 0.0
        %2900 = vmatprep.subr.mxu0 0.0
        %2901 = vmatpush2.xpose.msra.mxu0 0.0
        %2902 = vmatprep.subr.mxu0 0.0
        %2903 = vmatpush2.xpose.msra.mxu0 0.0
        %2904 = vmatprep.subr.mxu0 0.0
        %2905 = vmatpush2.xpose.msra.mxu0 0.0
        %2906 = vmatprep.subr.mxu0 0.0
        %2907 = vmatpush2.xpose.msra.mxu0 0.0
        %2908 = vmatprep.subr.mxu0 0.0
        %2909 = vmatpush2.xpose.msra.mxu0 0.0
        %2910 = vmatprep.mubr.f32.mxu0 0.0
        %2911 = vmatmul.mubr.f32.gmra.mxu0 %v2841
        %v2912 = vpop.f32.mrf.mxu0
        %v2913 = vadd.f32 0.0, %v2912
        %v2914 = vpop.f32.mrf.mxu0
        %2915 = vdwg.mxu0
        %v2916 = vsel %vm756, %v2913, -inf
        %2917 = vmax.xlane.f32.xlu0 %v2916
        %v2918 = vpop.xlane.xlu0 %2917
        %v2919 = vsub.f32 %v2913, %v2918
        %v2920 = vmul.f32 %v2919, 1.442695
        %v2921 = vpow.pop %v2920
        %v2922 = vsel %vm756, %v2921, 0.0
        %2923 = vadd.xlane.f32.xlu0 %v2922
        %v2924 = vpop.xlane.xlu0 %2923
        %v2925 = vrcp.pop %v2924
        %v2926 = vmul.f32 %v2921, %v2925
        %v2928 = vsel %vm768, %v2926, 0
        %v2931 = vsel %vm772, %v2837, 0
        %2933 = vmatprep.subr.mxu0 0.0
        %2934 = vmatpush1.msra.mxu0 0.0
        %2935 = vmatprep.subr.mxu0 0.0
        %2936 = vmatpush1.msra.mxu0 0.0
        %2937 = vmatprep.subr.mxu0 0.0
        %2938 = vmatpush1.msra.mxu0 0.0
        %2939 = vmatprep.subr.mxu0 0.0
        %2940 = vmatpush1.msra.mxu0 0.0
        %2941 = vmatprep.subr.mxu0 0.0
        %2942 = vmatpush1.msra.mxu0 0.0
        %2943 = vmatprep.subr.mxu0 0.0
        %2944 = vmatpush1.msra.mxu0 0.0
        %2945 = vmatprep.subr.mxu0 0.0
        %2946 = vmatpush1.msra.mxu0 0.0
        %2947 = vmatprep.subr.mxu0 0.0
        %2948 = vmatpush1.msra.mxu0 0.0
        %2949 = vmatprep.subr.mxu0 0.0
        %2950 = vmatpush1.msra.mxu0 0.0
        %2951 = vmatprep.subr.mxu0 0.0
        %2952 = vmatpush1.msra.mxu0 0.0
        %2953 = vmatprep.subr.mxu0 0.0
        %2954 = vmatpush1.msra.mxu0 0.0
        %2955 = vmatprep.subr.mxu0 0.0
        %2956 = vmatpush1.msra.mxu0 0.0
        %2957 = vmatprep.subr.mxu0 0.0
        %2958 = vmatpush1.msra.mxu0 0.0
        %2959 = vmatprep.subr.mxu0 0.0
        %2960 = vmatpush1.msra.mxu0 0.0
        %2961 = vmatprep.subr.mxu0 0.0
        %2962 = vmatpush1.msra.mxu0 0.0
        %2963 = vmatprep.subr.mxu0 0.0
        %2964 = vmatpush1.msra.mxu0 %v2931
        %2965 = vmatprep.subr.mxu0 0.0
        %2966 = vmatpush2.msra.mxu0 0.0
        %2967 = vmatprep.subr.mxu0 0.0
        %2968 = vmatpush2.msra.mxu0 0.0
        %2969 = vmatprep.subr.mxu0 0.0
        %2970 = vmatpush2.msra.mxu0 0.0
        %2971 = vmatprep.subr.mxu0 0.0
        %2972 = vmatpush2.msra.mxu0 0.0
        %2973 = vmatprep.subr.mxu0 0.0
        %2974 = vmatpush2.msra.mxu0 0.0
        %2975 = vmatprep.subr.mxu0 0.0
        %2976 = vmatpush2.msra.mxu0 0.0
        %2977 = vmatprep.subr.mxu0 0.0
        %2978 = vmatpush2.msra.mxu0 0.0
        %2979 = vmatprep.subr.mxu0 0.0
        %2980 = vmatpush2.msra.mxu0 0.0
        %2981 = vmatprep.subr.mxu0 0.0
        %2982 = vmatpush2.msra.mxu0 0.0
        %2983 = vmatprep.subr.mxu0 0.0
        %2984 = vmatpush2.msra.mxu0 0.0
        %2985 = vmatprep.subr.mxu0 0.0
        %2986 = vmatpush2.msra.mxu0 0.0
        %2987 = vmatprep.subr.mxu0 0.0
        %2988 = vmatpush2.msra.mxu0 0.0
        %2989 = vmatprep.subr.mxu0 0.0
        %2990 = vmatpush2.msra.mxu0 0.0
        %2991 = vmatprep.subr.mxu0 0.0
        %2992 = vmatpush2.msra.mxu0 0.0
        %2993 = vmatprep.subr.mxu0 0.0
        %2994 = vmatpush2.msra.mxu0 0.0
        %2995 = vmatprep.subr.mxu0 0.0
        %2996 = vmatpush2.msra.mxu0 0.0
        %2997 = vmatprep.mubr.f32.mxu0 0.0
        %2998 = vmatmul.mubr.f32.gmra.mxu0 %v2928
        %v2999 = vpop.f32.mrf.mxu0
        %v3000 = vadd.f32 0.0, %v2999
        %v3001 = vpop.f32.mrf.mxu0
        %3002 = vdwg.mxu0
        %s3003 = scalar_lea.vmem %s3, 40
        %v3004 = vld [vmem:[%s3003] sm:$0xff]
        %s3005 = scalar_lea.vmem %s2, 520
        %v3006 = vld [vmem:[%s3005] sm:$0xff]
        %v3007 = vld [vmem:[%s3005 + $0x8] sm:$0xff]
        %v3008 = vld [vmem:[%s3005 + $0x10] sm:$0xff]
        %v3009 = vld [vmem:[%s3005 + $0x18] sm:$0xff]
        %v3010 = vld [vmem:[%s3005 + $0x20] sm:$0x1]
        %v3011 = vlaneseq
        %v3012 = vshrl.u32 %v3011, 7
        %v3013 = vsub.s32 0, %v3012
        %v3014 = vrot.slane %v3010, %v3013
        %3015 = vmatprep.subr.mxu0 0.0
        %3016 = vmatpush1.msra.mxu0 0.0
        %3017 = vmatprep.subr.mxu0 0.0
        %3018 = vmatpush1.msra.mxu0 0.0
        %3019 = vmatprep.subr.mxu0 0.0
        %3020 = vmatpush1.msra.mxu0 0.0
        %3021 = vmatprep.subr.mxu0 0.0
        %3022 = vmatpush1.msra.mxu0 0.0
        %3023 = vmatprep.subr.mxu0 0.0
        %3024 = vmatpush1.msra.mxu0 0.0
        %3025 = vmatprep.subr.mxu0 0.0
        %3026 = vmatpush1.msra.mxu0 0.0
        %3027 = vmatprep.subr.mxu0 0.0
        %3028 = vmatpush1.msra.mxu0 0.0
        %3029 = vmatprep.subr.mxu0 0.0
        %3030 = vmatpush1.msra.mxu0 0.0
        %3031 = vmatprep.subr.mxu0 0.0
        %3032 = vmatpush1.msra.mxu0 0.0
        %3033 = vmatprep.subr.mxu0 0.0
        %3034 = vmatpush1.msra.mxu0 0.0
        %3035 = vmatprep.subr.mxu0 0.0
        %3036 = vmatpush1.msra.mxu0 0.0
        %3037 = vmatprep.subr.mxu0 0.0
        %3038 = vmatpush1.msra.mxu0 0.0
        %3039 = vmatprep.subr.mxu0 0.0
        %3040 = vmatpush1.msra.mxu0 %v3009
        %3041 = vmatprep.subr.mxu0 0.0
        %3042 = vmatpush1.msra.mxu0 %v3008
        %3043 = vmatprep.subr.mxu0 0.0
        %3044 = vmatpush1.msra.mxu0 %v3007
        %3045 = vmatprep.subr.mxu0 0.0
        %3046 = vmatpush1.msra.mxu0 %v3006
        %3047 = vmatprep.subr.mxu0 0.0
        %3048 = vmatpush2.msra.mxu0 0.0
        %3049 = vmatprep.subr.mxu0 0.0
        %3050 = vmatpush2.msra.mxu0 0.0
        %3051 = vmatprep.subr.mxu0 0.0
        %3052 = vmatpush2.msra.mxu0 0.0
        %3053 = vmatprep.subr.mxu0 0.0
        %3054 = vmatpush2.msra.mxu0 0.0
        %3055 = vmatprep.subr.mxu0 0.0
        %3056 = vmatpush2.msra.mxu0 0.0
        %3057 = vmatprep.subr.mxu0 0.0
        %3058 = vmatpush2.msra.mxu0 0.0
        %3059 = vmatprep.subr.mxu0 0.0
        %3060 = vmatpush2.msra.mxu0 0.0
        %3061 = vmatprep.subr.mxu0 0.0
        %3062 = vmatpush2.msra.mxu0 0.0
        %3063 = vmatprep.subr.mxu0 0.0
        %3064 = vmatpush2.msra.mxu0 0.0
        %3065 = vmatprep.subr.mxu0 0.0
        %3066 = vmatpush2.msra.mxu0 0.0
        %3067 = vmatprep.subr.mxu0 0.0
        %3068 = vmatpush2.msra.mxu0 0.0
        %3069 = vmatprep.subr.mxu0 0.0
        %3070 = vmatpush2.msra.mxu0 0.0
        %3071 = vmatprep.subr.mxu0 0.0
        %3072 = vmatpush2.msra.mxu0 0.0
        %3073 = vmatprep.subr.mxu0 0.0
        %3074 = vmatpush2.msra.mxu0 0.0
        %3075 = vmatprep.subr.mxu0 0.0
        %3076 = vmatpush2.msra.mxu0 0.0
        %3077 = vmatprep.subr.mxu0 0.0
        %3078 = vmatpush2.msra.mxu0 0.0
        %3079 = vmatprep.mubr.f32.mxu0 0.0
        %3080 = vmatmul.mubr.f32.gmra.mxu0 %v2608
        %v3081 = vpop.f32.mrf.mxu0
        %v3082 = vadd.f32 %v3014, %v3081
        %v3083 = vpop.f32.mrf.mxu0
        %3084 = vdwg.mxu0
        %s3085 = scalar_lea.vmem %s2, 680
        %v3086 = vld [vmem:[%s3085] sm:$0xff]
        %v3087 = vld [vmem:[%s3085 + $0x8] sm:$0xff]
        %v3088 = vld [vmem:[%s3085 + $0x10] sm:$0xff]
        %v3089 = vld [vmem:[%s3085 + $0x18] sm:$0xff]
        %v3090 = vld [vmem:[%s3085 + $0x20] sm:$0x1]
        %v3091 = vlaneseq
        %v3092 = vshrl.u32 %v3091, 7
        %v3093 = vsub.s32 0, %v3092
        %v3094 = vrot.slane %v3090, %v3093
        %3095 = vmatprep.subr.mxu0 0.0
        %3096 = vmatpush1.msra.mxu0 0.0
        %3097 = vmatprep.subr.mxu0 0.0
        %3098 = vmatpush1.msra.mxu0 0.0
        %3099 = vmatprep.subr.mxu0 0.0
        %3100 = vmatpush1.msra.mxu0 0.0
        %3101 = vmatprep.subr.mxu0 0.0
        %3102 = vmatpush1.msra.mxu0 0.0
        %3103 = vmatprep.subr.mxu0 0.0
        %3104 = vmatpush1.msra.mxu0 0.0
        %3105 = vmatprep.subr.mxu0 0.0
        %3106 = vmatpush1.msra.mxu0 0.0
        %3107 = vmatprep.subr.mxu0 0.0
        %3108 = vmatpush1.msra.mxu0 0.0
        %3109 = vmatprep.subr.mxu0 0.0
        %3110 = vmatpush1.msra.mxu0 0.0
        %3111 = vmatprep.subr.mxu0 0.0
        %3112 = vmatpush1.msra.mxu0 0.0
        %3113 = vmatprep.subr.mxu0 0.0
        %3114 = vmatpush1.msra.mxu0 0.0
        %3115 = vmatprep.subr.mxu0 0.0
        %3116 = vmatpush1.msra.mxu0 0.0
        %3117 = vmatprep.subr.mxu0 0.0
        %3118 = vmatpush1.msra.mxu0 0.0
        %3119 = vmatprep.subr.mxu0 0.0
        %3120 = vmatpush1.msra.mxu0 %v3089
        %3121 = vmatprep.subr.mxu0 0.0
        %3122 = vmatpush1.msra.mxu0 %v3088
        %3123 = vmatprep.subr.mxu0 0.0
        %3124 = vmatpush1.msra.mxu0 %v3087
        %3125 = vmatprep.subr.mxu0 0.0
        %3126 = vmatpush1.msra.mxu0 %v3086
        %3127 = vmatprep.subr.mxu0 0.0
        %3128 = vmatpush2.msra.mxu0 0.0
        %3129 = vmatprep.subr.mxu0 0.0
        %3130 = vmatpush2.msra.mxu0 0.0
        %3131 = vmatprep.subr.mxu0 0.0
        %3132 = vmatpush2.msra.mxu0 0.0
        %3133 = vmatprep.subr.mxu0 0.0
        %3134 = vmatpush2.msra.mxu0 0.0
        %3135 = vmatprep.subr.mxu0 0.0
        %3136 = vmatpush2.msra.mxu0 0.0
        %3137 = vmatprep.subr.mxu0 0.0
        %3138 = vmatpush2.msra.mxu0 0.0
        %3139 = vmatprep.subr.mxu0 0.0
        %3140 = vmatpush2.msra.mxu0 0.0
        %3141 = vmatprep.subr.mxu0 0.0
        %3142 = vmatpush2.msra.mxu0 0.0
        %3143 = vmatprep.subr.mxu0 0.0
        %3144 = vmatpush2.msra.mxu0 0.0
        %3145 = vmatprep.subr.mxu0 0.0
        %3146 = vmatpush2.msra.mxu0 0.0
        %3147 = vmatprep.subr.mxu0 0.0
        %3148 = vmatpush2.msra.mxu0 0.0
        %3149 = vmatprep.subr.mxu0 0.0
        %3150 = vmatpush2.msra.mxu0 0.0
        %3151 = vmatprep.subr.mxu0 0.0
        %3152 = vmatpush2.msra.mxu0 0.0
        %3153 = vmatprep.subr.mxu0 0.0
        %3154 = vmatpush2.msra.mxu0 0.0
        %3155 = vmatprep.subr.mxu0 0.0
        %3156 = vmatpush2.msra.mxu0 0.0
        %3157 = vmatprep.subr.mxu0 0.0
        %3158 = vmatpush2.msra.mxu0 0.0
        %3159 = vmatprep.mubr.f32.mxu0 0.0
        %3160 = vmatmul.mubr.f32.gmra.mxu0 %v2608
        %v3161 = vpop.f32.mrf.mxu0
        %v3162 = vadd.f32 %v3094, %v3161
        %v3163 = vpop.f32.mrf.mxu0
        %3164 = vdwg.mxu0
        %s3165 = scalar_lea.vmem %s2, 840
        %v3166 = vld [vmem:[%s3165] sm:$0xff]
        %v3167 = vld [vmem:[%s3165 + $0x8] sm:$0xff]
        %v3168 = vld [vmem:[%s3165 + $0x10] sm:$0xff]
        %v3169 = vld [vmem:[%s3165 + $0x18] sm:$0xff]
        %v3170 = vld [vmem:[%s3165 + $0x20] sm:$0x1]
        %v3171 = vlaneseq
        %v3172 = vshrl.u32 %v3171, 7
        %v3173 = vsub.s32 0, %v3172
        %v3174 = vrot.slane %v3170, %v3173
        %3175 = vmatprep.subr.mxu0 0.0
        %3176 = vmatpush1.msra.mxu0 0.0
        %3177 = vmatprep.subr.mxu0 0.0
        %3178 = vmatpush1.msra.mxu0 0.0
        %3179 = vmatprep.subr.mxu0 0.0
        %3180 = vmatpush1.msra.mxu0 0.0
        %3181 = vmatprep.subr.mxu0 0.0
        %3182 = vmatpush1.msra.mxu0 0.0
        %3183 = vmatprep.subr.mxu0 0.0
        %3184 = vmatpush1.msra.mxu0 0.0
        %3185 = vmatprep.subr.mxu0 0.0
        %3186 = vmatpush1.msra.mxu0 0.0
        %3187 = vmatprep.subr.mxu0 0.0
        %3188 = vmatpush1.msra.mxu0 0.0
        %3189 = vmatprep.subr.mxu0 0.0
        %3190 = vmatpush1.msra.mxu0 0.0
        %3191 = vmatprep.subr.mxu0 0.0
        %3192 = vmatpush1.msra.mxu0 0.0
        %3193 = vmatprep.subr.mxu0 0.0
        %3194 = vmatpush1.msra.mxu0 0.0
        %3195 = vmatprep.subr.mxu0 0.0
        %3196 = vmatpush1.msra.mxu0 0.0
        %3197 = vmatprep.subr.mxu0 0.0
        %3198 = vmatpush1.msra.mxu0 0.0
        %3199 = vmatprep.subr.mxu0 0.0
        %3200 = vmatpush1.msra.mxu0 %v3169
        %3201 = vmatprep.subr.mxu0 0.0
        %3202 = vmatpush1.msra.mxu0 %v3168
        %3203 = vmatprep.subr.mxu0 0.0
        %3204 = vmatpush1.msra.mxu0 %v3167
        %3205 = vmatprep.subr.mxu0 0.0
        %3206 = vmatpush1.msra.mxu0 %v3166
        %3207 = vmatprep.subr.mxu0 0.0
        %3208 = vmatpush2.msra.mxu0 0.0
        %3209 = vmatprep.subr.mxu0 0.0
        %3210 = vmatpush2.msra.mxu0 0.0
        %3211 = vmatprep.subr.mxu0 0.0
        %3212 = vmatpush2.msra.mxu0 0.0
        %3213 = vmatprep.subr.mxu0 0.0
        %3214 = vmatpush2.msra.mxu0 0.0
        %3215 = vmatprep.subr.mxu0 0.0
        %3216 = vmatpush2.msra.mxu0 0.0
        %3217 = vmatprep.subr.mxu0 0.0
        %3218 = vmatpush2.msra.mxu0 0.0
        %3219 = vmatprep.subr.mxu0 0.0
        %3220 = vmatpush2.msra.mxu0 0.0
        %3221 = vmatprep.subr.mxu0 0.0
        %3222 = vmatpush2.msra.mxu0 0.0
        %3223 = vmatprep.subr.mxu0 0.0
        %3224 = vmatpush2.msra.mxu0 0.0
        %3225 = vmatprep.subr.mxu0 0.0
        %3226 = vmatpush2.msra.mxu0 0.0
        %3227 = vmatprep.subr.mxu0 0.0
        %3228 = vmatpush2.msra.mxu0 0.0
        %3229 = vmatprep.subr.mxu0 0.0
        %3230 = vmatpush2.msra.mxu0 0.0
        %3231 = vmatprep.subr.mxu0 0.0
        %3232 = vmatpush2.msra.mxu0 0.0
        %3233 = vmatprep.subr.mxu0 0.0
        %3234 = vmatpush2.msra.mxu0 0.0
        %3235 = vmatprep.subr.mxu0 0.0
        %3236 = vmatpush2.msra.mxu0 0.0
        %3237 = vmatprep.subr.mxu0 0.0
        %3238 = vmatpush2.msra.mxu0 0.0
        %3239 = vmatprep.mubr.f32.mxu0 0.0
        %3240 = vmatmul.mubr.f32.gmra.mxu0 %v2608
        %v3241 = vpop.f32.mrf.mxu0
        %v3242 = vadd.f32 %v3174, %v3241
        %v3243 = vpop.f32.mrf.mxu0
        %3244 = vdwg.mxu0
        %v3246 = vsel %vm679, %v3082, 0
        %v3249 = vsel %vm679, %v3162, 0
        %3251 = vmatprep.subr.mxu0 0.0
        %3252 = vmatpush1.xpose.msra.mxu0 0.0
        %3253 = vmatprep.subr.mxu0 0.0
        %3254 = vmatpush1.xpose.msra.mxu0 0.0
        %3255 = vmatprep.subr.mxu0 0.0
        %3256 = vmatpush1.xpose.msra.mxu0 0.0
        %3257 = vmatprep.subr.mxu0 0.0
        %3258 = vmatpush1.xpose.msra.mxu0 0.0
        %3259 = vmatprep.subr.mxu0 0.0
        %3260 = vmatpush1.xpose.msra.mxu0 0.0
        %3261 = vmatprep.subr.mxu0 0.0
        %3262 = vmatpush1.xpose.msra.mxu0 0.0
        %3263 = vmatprep.subr.mxu0 0.0
        %3264 = vmatpush1.xpose.msra.mxu0 0.0
        %3265 = vmatprep.subr.mxu0 0.0
        %3266 = vmatpush1.xpose.msra.mxu0 0.0
        %3267 = vmatprep.subr.mxu0 0.0
        %3268 = vmatpush1.xpose.msra.mxu0 0.0
        %3269 = vmatprep.subr.mxu0 0.0
        %3270 = vmatpush1.xpose.msra.mxu0 0.0
        %3271 = vmatprep.subr.mxu0 0.0
        %3272 = vmatpush1.xpose.msra.mxu0 0.0
        %3273 = vmatprep.subr.mxu0 0.0
        %3274 = vmatpush1.xpose.msra.mxu0 0.0
        %3275 = vmatprep.subr.mxu0 0.0
        %3276 = vmatpush1.xpose.msra.mxu0 0.0
        %3277 = vmatprep.subr.mxu0 0.0
        %3278 = vmatpush1.xpose.msra.mxu0 0.0
        %3279 = vmatprep.subr.mxu0 0.0
        %3280 = vmatpush1.xpose.msra.mxu0 0.0
        %3281 = vmatprep.subr.mxu0 0.0
        %3282 = vmatpush1.xpose.msra.mxu0 %v3249
        %3283 = vmatprep.subr.mxu0 0.0
        %3284 = vmatpush2.xpose.msra.mxu0 0.0
        %3285 = vmatprep.subr.mxu0 0.0
        %3286 = vmatpush2.xpose.msra.mxu0 0.0
        %3287 = vmatprep.subr.mxu0 0.0
        %3288 = vmatpush2.xpose.msra.mxu0 0.0
        %3289 = vmatprep.subr.mxu0 0.0
        %3290 = vmatpush2.xpose.msra.mxu0 0.0
        %3291 = vmatprep.subr.mxu0 0.0
        %3292 = vmatpush2.xpose.msra.mxu0 0.0
        %3293 = vmatprep.subr.mxu0 0.0
        %3294 = vmatpush2.xpose.msra.mxu0 0.0
        %3295 = vmatprep.subr.mxu0 0.0
        %3296 = vmatpush2.xpose.msra.mxu0 0.0
        %3297 = vmatprep.subr.mxu0 0.0
        %3298 = vmatpush2.xpose.msra.mxu0 0.0
        %3299 = vmatprep.subr.mxu0 0.0
        %3300 = vmatpush2.xpose.msra.mxu0 0.0
        %3301 = vmatprep.subr.mxu0 0.0
        %3302 = vmatpush2.xpose.msra.mxu0 0.0
        %3303 = vmatprep.subr.mxu0 0.0
        %3304 = vmatpush2.xpose.msra.mxu0 0.0
        %3305 = vmatprep.subr.mxu0 0.0
        %3306 = vmatpush2.xpose.msra.mxu0 0.0
        %3307 = vmatprep.subr.mxu0 0.0
        %3308 = vmatpush2.xpose.msra.mxu0 0.0
        %3309 = vmatprep.subr.mxu0 0.0
        %3310 = vmatpush2.xpose.msra.mxu0 0.0
        %3311 = vmatprep.subr.mxu0 0.0
        %3312 = vmatpush2.xpose.msra.mxu0 0.0
        %3313 = vmatprep.subr.mxu0 0.0
        %3314 = vmatpush2.xpose.msra.mxu0 0.0
        %3315 = vmatprep.mubr.f32.mxu0 0.0
        %3316 = vmatmul.mubr.f32.gmra.mxu0 %v3246
        %v3317 = vpop.f32.mrf.mxu0
        %v3318 = vadd.f32 0.0, %v3317
        %v3319 = vpop.f32.mrf.mxu0
        %3320 = vdwg.mxu0
        %v3321 = vsel %vm756, %v3318, -inf
        %3322 = vmax.xlane.f32.xlu0 %v3321
        %v3323 = vpop.xlane.xlu0 %3322
        %v3324 = vsub.f32 %v3318, %v3323
        %v3325 = vmul.f32 %v3324, 1.442695
        %v3326 = vpow.pop %v3325
        %v3327 = vsel %vm756, %v3326, 0.0
        %3328 = vadd.xlane.f32.xlu0 %v3327
        %v3329 = vpop.xlane.xlu0 %3328
        %v3330 = vrcp.pop %v3329
        %v3331 = vmul.f32 %v3326, %v3330
        %v3333 = vsel %vm768, %v3331, 0
        %v3336 = vsel %vm772, %v3242, 0
        %3338 = vmatprep.subr.mxu0 0.0
        %3339 = vmatpush1.msra.mxu0 0.0
        %3340 = vmatprep.subr.mxu0 0.0
        %3341 = vmatpush1.msra.mxu0 0.0
        %3342 = vmatprep.subr.mxu0 0.0
        %3343 = vmatpush1.msra.mxu0 0.0
        %3344 = vmatprep.subr.mxu0 0.0
        %3345 = vmatpush1.msra.mxu0 0.0
        %3346 = vmatprep.subr.mxu0 0.0
        %3347 = vmatpush1.msra.mxu0 0.0
        %3348 = vmatprep.subr.mxu0 0.0
        %3349 = vmatpush1.msra.mxu0 0.0
        %3350 = vmatprep.subr.mxu0 0.0
        %3351 = vmatpush1.msra.mxu0 0.0
        %3352 = vmatprep.subr.mxu0 0.0
        %3353 = vmatpush1.msra.mxu0 0.0
        %3354 = vmatprep.subr.mxu0 0.0
        %3355 = vmatpush1.msra.mxu0 0.0
        %3356 = vmatprep.subr.mxu0 0.0
        %3357 = vmatpush1.msra.mxu0 0.0
        %3358 = vmatprep.subr.mxu0 0.0
        %3359 = vmatpush1.msra.mxu0 0.0
        %3360 = vmatprep.subr.mxu0 0.0
        %3361 = vmatpush1.msra.mxu0 0.0
        %3362 = vmatprep.subr.mxu0 0.0
        %3363 = vmatpush1.msra.mxu0 0.0
        %3364 = vmatprep.subr.mxu0 0.0
        %3365 = vmatpush1.msra.mxu0 0.0
        %3366 = vmatprep.subr.mxu0 0.0
        %3367 = vmatpush1.msra.mxu0 0.0
        %3368 = vmatprep.subr.mxu0 0.0
        %3369 = vmatpush1.msra.mxu0 %v3336
        %3370 = vmatprep.subr.mxu0 0.0
        %3371 = vmatpush2.msra.mxu0 0.0
        %3372 = vmatprep.subr.mxu0 0.0
        %3373 = vmatpush2.msra.mxu0 0.0
        %3374 = vmatprep.subr.mxu0 0.0
        %3375 = vmatpush2.msra.mxu0 0.0
        %3376 = vmatprep.subr.mxu0 0.0
        %3377 = vmatpush2.msra.mxu0 0.0
        %3378 = vmatprep.subr.mxu0 0.0
        %3379 = vmatpush2.msra.mxu0 0.0
        %3380 = vmatprep.subr.mxu0 0.0
        %3381 = vmatpush2.msra.mxu0 0.0
        %3382 = vmatprep.subr.mxu0 0.0
        %3383 = vmatpush2.msra.mxu0 0.0
        %3384 = vmatprep.subr.mxu0 0.0
        %3385 = vmatpush2.msra.mxu0 0.0
        %3386 = vmatprep.subr.mxu0 0.0
        %3387 = vmatpush2.msra.mxu0 0.0
        %3388 = vmatprep.subr.mxu0 0.0
        %3389 = vmatpush2.msra.mxu0 0.0
        %3390 = vmatprep.subr.mxu0 0.0
        %3391 = vmatpush2.msra.mxu0 0.0
        %3392 = vmatprep.subr.mxu0 0.0
        %3393 = vmatpush2.msra.mxu0 0.0
        %3394 = vmatprep.subr.mxu0 0.0
        %3395 = vmatpush2.msra.mxu0 0.0
        %3396 = vmatprep.subr.mxu0 0.0
        %3397 = vmatpush2.msra.mxu0 0.0
        %3398 = vmatprep.subr.mxu0 0.0
        %3399 = vmatpush2.msra.mxu0 0.0
        %3400 = vmatprep.subr.mxu0 0.0
        %3401 = vmatpush2.msra.mxu0 0.0
        %3402 = vmatprep.mubr.f32.mxu0 0.0
        %3403 = vmatmul.mubr.f32.gmra.mxu0 %v3333
        %v3404 = vpop.f32.mrf.mxu0
        %v3405 = vadd.f32 0.0, %v3404
        %v3406 = vpop.f32.mrf.mxu0
        %3407 = vdwg.mxu0
        %v3408 = vld [vmem:[%s3003 + $0x8] sm:$0xff]
        %v3410 = vsel %vm679, %v3405, 0
        %3412 = vmatprep.subr.mxu0 0.0
        %3413 = vmatpush1.msra.mxu0 0.0
        %3414 = vmatprep.subr.mxu0 0.0
        %3415 = vmatpush1.msra.mxu0 0.0
        %3416 = vmatprep.subr.mxu0 0.0
        %3417 = vmatpush1.msra.mxu0 0.0
        %3418 = vmatprep.subr.mxu0 0.0
        %3419 = vmatpush1.msra.mxu0 0.0
        %3420 = vmatprep.subr.mxu0 0.0
        %3421 = vmatpush1.msra.mxu0 0.0
        %3422 = vmatprep.subr.mxu0 0.0
        %3423 = vmatpush1.msra.mxu0 0.0
        %3424 = vmatprep.subr.mxu0 0.0
        %3425 = vmatpush1.msra.mxu0 0.0
        %3426 = vmatprep.subr.mxu0 0.0
        %3427 = vmatpush1.msra.mxu0 0.0
        %3428 = vmatprep.subr.mxu0 0.0
        %3429 = vmatpush1.msra.mxu0 0.0
        %3430 = vmatprep.subr.mxu0 0.0
        %3431 = vmatpush1.msra.mxu0 0.0
        %3432 = vmatprep.subr.mxu0 0.0
        %3433 = vmatpush1.msra.mxu0 0.0
        %3434 = vmatprep.subr.mxu0 0.0
        %3435 = vmatpush1.msra.mxu0 0.0
        %3436 = vmatprep.subr.mxu0 0.0
        %3437 = vmatpush1.msra.mxu0 0.0
        %3438 = vmatprep.subr.mxu0 0.0
        %3439 = vmatpush1.msra.mxu0 0.0
        %3440 = vmatprep.subr.mxu0 0.0
        %3441 = vmatpush1.msra.mxu0 0.0
        %3442 = vmatprep.subr.mxu0 0.0
        %3443 = vmatpush1.msra.mxu0 %v3408
        %3444 = vmatprep.subr.mxu0 0.0
        %3445 = vmatpush2.msra.mxu0 0.0
        %3446 = vmatprep.subr.mxu0 0.0
        %3447 = vmatpush2.msra.mxu0 0.0
        %3448 = vmatprep.subr.mxu0 0.0
        %3449 = vmatpush2.msra.mxu0 0.0
        %3450 = vmatprep.subr.mxu0 0.0
        %3451 = vmatpush2.msra.mxu0 0.0
        %3452 = vmatprep.subr.mxu0 0.0
        %3453 = vmatpush2.msra.mxu0 0.0
        %3454 = vmatprep.subr.mxu0 0.0
        %3455 = vmatpush2.msra.mxu0 0.0
        %3456 = vmatprep.subr.mxu0 0.0
        %3457 = vmatpush2.msra.mxu0 0.0
        %3458 = vmatprep.subr.mxu0 0.0
        %3459 = vmatpush2.msra.mxu0 0.0
        %3460 = vmatprep.subr.mxu0 0.0
        %3461 = vmatpush2.msra.mxu0 0.0
        %3462 = vmatprep.subr.mxu0 0.0
        %3463 = vmatpush2.msra.mxu0 0.0
        %3464 = vmatprep.subr.mxu0 0.0
        %3465 = vmatpush2.msra.mxu0 0.0
        %3466 = vmatprep.subr.mxu0 0.0
        %3467 = vmatpush2.msra.mxu0 0.0
        %3468 = vmatprep.subr.mxu0 0.0
        %3469 = vmatpush2.msra.mxu0 0.0
        %3470 = vmatprep.subr.mxu0 0.0
        %3471 = vmatpush2.msra.mxu0 0.0
        %3472 = vmatprep.subr.mxu0 0.0
        %3473 = vmatpush2.msra.mxu0 0.0
        %3474 = vmatprep.subr.mxu0 0.0
        %3475 = vmatpush2.msra.mxu0 0.0
        %3476 = vmatprep.mubr.f32.mxu0 0.0
        %3477 = vmatmul.mubr.f32.gmra.mxu0 %v3410
        %v3478 = vpop.f32.mrf.mxu0
        %v3479 = vadd.f32 0.0, %v3478
        %v3480 = vpop.f32.mrf.mxu0
        %3481 = vdwg.mxu0
        %v3483 = vsel %vm679, %v3000, 0
        %3485 = vmatprep.subr.mxu0 0.0
        %3486 = vmatpush1.msra.mxu0 0.0
        %3487 = vmatprep.subr.mxu0 0.0
        %3488 = vmatpush1.msra.mxu0 0.0
        %3489 = vmatprep.subr.mxu0 0.0
        %3490 = vmatpush1.msra.mxu0 0.0
        %3491 = vmatprep.subr.mxu0 0.0
        %3492 = vmatpush1.msra.mxu0 0.0
        %3493 = vmatprep.subr.mxu0 0.0
        %3494 = vmatpush1.msra.mxu0 0.0
        %3495 = vmatprep.subr.mxu0 0.0
        %3496 = vmatpush1.msra.mxu0 0.0
        %3497 = vmatprep.subr.mxu0 0.0
        %3498 = vmatpush1.msra.mxu0 0.0
        %3499 = vmatprep.subr.mxu0 0.0
        %3500 = vmatpush1.msra.mxu0 0.0
        %3501 = vmatprep.subr.mxu0 0.0
        %3502 = vmatpush1.msra.mxu0 0.0
        %3503 = vmatprep.subr.mxu0 0.0
        %3504 = vmatpush1.msra.mxu0 0.0
        %3505 = vmatprep.subr.mxu0 0.0
        %3506 = vmatpush1.msra.mxu0 0.0
        %3507 = vmatprep.subr.mxu0 0.0
        %3508 = vmatpush1.msra.mxu0 0.0
        %3509 = vmatprep.subr.mxu0 0.0
        %3510 = vmatpush1.msra.mxu0 0.0
        %3511 = vmatprep.subr.mxu0 0.0
        %3512 = vmatpush1.msra.mxu0 0.0
        %3513 = vmatprep.subr.mxu0 0.0
        %3514 = vmatpush1.msra.mxu0 0.0
        %3515 = vmatprep.subr.mxu0 0.0
        %3516 = vmatpush1.msra.mxu0 %v3004
        %3517 = vmatprep.subr.mxu0 0.0
        %3518 = vmatpush2.msra.mxu0 0.0
        %3519 = vmatprep.subr.mxu0 0.0
        %3520 = vmatpush2.msra.mxu0 0.0
        %3521 = vmatprep.subr.mxu0 0.0
        %3522 = vmatpush2.msra.mxu0 0.0
        %3523 = vmatprep.subr.mxu0 0.0
        %3524 = vmatpush2.msra.mxu0 0.0
        %3525 = vmatprep.subr.mxu0 0.0
        %3526 = vmatpush2.msra.mxu0 0.0
        %3527 = vmatprep.subr.mxu0 0.0
        %3528 = vmatpush2.msra.mxu0 0.0
        %3529 = vmatprep.subr.mxu0 0.0
        %3530 = vmatpush2.msra.mxu0 0.0
        %3531 = vmatprep.subr.mxu0 0.0
        %3532 = vmatpush2.msra.mxu0 0.0
        %3533 = vmatprep.subr.mxu0 0.0
        %3534 = vmatpush2.msra.mxu0 0.0
        %3535 = vmatprep.subr.mxu0 0.0
        %3536 = vmatpush2.msra.mxu0 0.0
        %3537 = vmatprep.subr.mxu0 0.0
        %3538 = vmatpush2.msra.mxu0 0.0
        %3539 = vmatprep.subr.mxu0 0.0
        %3540 = vmatpush2.msra.mxu0 0.0
        %3541 = vmatprep.subr.mxu0 0.0
        %3542 = vmatpush2.msra.mxu0 0.0
        %3543 = vmatprep.subr.mxu0 0.0
        %3544 = vmatpush2.msra.mxu0 0.0
        %3545 = vmatprep.subr.mxu0 0.0
        %3546 = vmatpush2.msra.mxu0 0.0
        %3547 = vmatprep.subr.mxu0 0.0
        %3548 = vmatpush2.msra.mxu0 0.0
        %3549 = vmatprep.mubr.f32.mxu0 0.0
        %3550 = vmatmul.mubr.f32.gmra.mxu0 %v3483
        %v3551 = vpop.f32.mrf.mxu0
        %v3552 = vadd.f32 %v3479, %v3551
        %v3553 = vpop.f32.mrf.mxu0
        %3554 = vdwg.mxu0
        %s3555 = scalar_lea.vmem %s2, 560
        %v3556 = vld [vmem:[%s3555] sm:$0xff]
        %v3557 = vld [vmem:[%s3555 + $0x8] sm:$0xff]
        %v3558 = vld [vmem:[%s3555 + $0x10] sm:$0xff]
        %v3559 = vld [vmem:[%s3555 + $0x18] sm:$0xff]
        %v3560 = vld [vmem:[%s3555 + $0x20] sm:$0x1]
        %v3561 = vlaneseq
        %v3562 = vshrl.u32 %v3561, 7
        %v3563 = vsub.s32 0, %v3562
        %v3564 = vrot.slane %v3560, %v3563
        %3565 = vmatprep.subr.mxu0 0.0
        %3566 = vmatpush1.msra.mxu0 0.0
        %3567 = vmatprep.subr.mxu0 0.0
        %3568 = vmatpush1.msra.mxu0 0.0
        %3569 = vmatprep.subr.mxu0 0.0
        %3570 = vmatpush1.msra.mxu0 0.0
        %3571 = vmatprep.subr.mxu0 0.0
        %3572 = vmatpush1.msra.mxu0 0.0
        %3573 = vmatprep.subr.mxu0 0.0
        %3574 = vmatpush1.msra.mxu0 0.0
        %3575 = vmatprep.subr.mxu0 0.0
        %3576 = vmatpush1.msra.mxu0 0.0
        %3577 = vmatprep.subr.mxu0 0.0
        %3578 = vmatpush1.msra.mxu0 0.0
        %3579 = vmatprep.subr.mxu0 0.0
        %3580 = vmatpush1.msra.mxu0 0.0
        %3581 = vmatprep.subr.mxu0 0.0
        %3582 = vmatpush1.msra.mxu0 0.0
        %3583 = vmatprep.subr.mxu0 0.0
        %3584 = vmatpush1.msra.mxu0 0.0
        %3585 = vmatprep.subr.mxu0 0.0
        %3586 = vmatpush1.msra.mxu0 0.0
        %3587 = vmatprep.subr.mxu0 0.0
        %3588 = vmatpush1.msra.mxu0 0.0
        %3589 = vmatprep.subr.mxu0 0.0
        %3590 = vmatpush1.msra.mxu0 %v3559
        %3591 = vmatprep.subr.mxu0 0.0
        %3592 = vmatpush1.msra.mxu0 %v3558
        %3593 = vmatprep.subr.mxu0 0.0
        %3594 = vmatpush1.msra.mxu0 %v3557
        %3595 = vmatprep.subr.mxu0 0.0
        %3596 = vmatpush1.msra.mxu0 %v3556
        %3597 = vmatprep.subr.mxu0 0.0
        %3598 = vmatpush2.msra.mxu0 0.0
        %3599 = vmatprep.subr.mxu0 0.0
        %3600 = vmatpush2.msra.mxu0 0.0
        %3601 = vmatprep.subr.mxu0 0.0
        %3602 = vmatpush2.msra.mxu0 0.0
        %3603 = vmatprep.subr.mxu0 0.0
        %3604 = vmatpush2.msra.mxu0 0.0
        %3605 = vmatprep.subr.mxu0 0.0
        %3606 = vmatpush2.msra.mxu0 0.0
        %3607 = vmatprep.subr.mxu0 0.0
        %3608 = vmatpush2.msra.mxu0 0.0
        %3609 = vmatprep.subr.mxu0 0.0
        %3610 = vmatpush2.msra.mxu0 0.0
        %3611 = vmatprep.subr.mxu0 0.0
        %3612 = vmatpush2.msra.mxu0 0.0
        %3613 = vmatprep.subr.mxu0 0.0
        %3614 = vmatpush2.msra.mxu0 0.0
        %3615 = vmatprep.subr.mxu0 0.0
        %3616 = vmatpush2.msra.mxu0 0.0
        %3617 = vmatprep.subr.mxu0 0.0
        %3618 = vmatpush2.msra.mxu0 0.0
        %3619 = vmatprep.subr.mxu0 0.0
        %3620 = vmatpush2.msra.mxu0 0.0
        %3621 = vmatprep.subr.mxu0 0.0
        %3622 = vmatpush2.msra.mxu0 0.0
        %3623 = vmatprep.subr.mxu0 0.0
        %3624 = vmatpush2.msra.mxu0 0.0
        %3625 = vmatprep.subr.mxu0 0.0
        %3626 = vmatpush2.msra.mxu0 0.0
        %3627 = vmatprep.subr.mxu0 0.0
        %3628 = vmatpush2.msra.mxu0 0.0
        %3629 = vmatprep.mubr.f32.mxu0 0.0
        %3630 = vmatmul.mubr.f32.gmra.mxu0 %v2608
        %v3631 = vpop.f32.mrf.mxu0
        %v3632 = vadd.f32 %v3564, %v3631
        %v3633 = vpop.f32.mrf.mxu0
        %3634 = vdwg.mxu0
        %s3635 = scalar_lea.vmem %s2, 720
        %v3636 = vld [vmem:[%s3635] sm:$0xff]
        %v3637 = vld [vmem:[%s3635 + $0x8] sm:$0xff]
        %v3638 = vld [vmem:[%s3635 + $0x10] sm:$0xff]
        %v3639 = vld [vmem:[%s3635 + $0x18] sm:$0xff]
        %v3640 = vld [vmem:[%s3635 + $0x20] sm:$0x1]
        %v3641 = vlaneseq
        %v3642 = vshrl.u32 %v3641, 7
        %v3643 = vsub.s32 0, %v3642
        %v3644 = vrot.slane %v3640, %v3643
        %3645 = vmatprep.subr.mxu0 0.0
        %3646 = vmatpush1.msra.mxu0 0.0
        %3647 = vmatprep.subr.mxu0 0.0
        %3648 = vmatpush1.msra.mxu0 0.0
        %3649 = vmatprep.subr.mxu0 0.0
        %3650 = vmatpush1.msra.mxu0 0.0
        %3651 = vmatprep.subr.mxu0 0.0
        %3652 = vmatpush1.msra.mxu0 0.0
        %3653 = vmatprep.subr.mxu0 0.0
        %3654 = vmatpush1.msra.mxu0 0.0
        %3655 = vmatprep.subr.mxu0 0.0
        %3656 = vmatpush1.msra.mxu0 0.0
        %3657 = vmatprep.subr.mxu0 0.0
        %3658 = vmatpush1.msra.mxu0 0.0
        %3659 = vmatprep.subr.mxu0 0.0
        %3660 = vmatpush1.msra.mxu0 0.0
        %3661 = vmatprep.subr.mxu0 0.0
        %3662 = vmatpush1.msra.mxu0 0.0
        %3663 = vmatprep.subr.mxu0 0.0
        %3664 = vmatpush1.msra.mxu0 0.0
        %3665 = vmatprep.subr.mxu0 0.0
        %3666 = vmatpush1.msra.mxu0 0.0
        %3667 = vmatprep.subr.mxu0 0.0
        %3668 = vmatpush1.msra.mxu0 0.0
        %3669 = vmatprep.subr.mxu0 0.0
        %3670 = vmatpush1.msra.mxu0 %v3639
        %3671 = vmatprep.subr.mxu0 0.0
        %3672 = vmatpush1.msra.mxu0 %v3638
        %3673 = vmatprep.subr.mxu0 0.0
        %3674 = vmatpush1.msra.mxu0 %v3637
        %3675 = vmatprep.subr.mxu0 0.0
        %3676 = vmatpush1.msra.mxu0 %v3636
        %3677 = vmatprep.subr.mxu0 0.0
        %3678 = vmatpush2.msra.mxu0 0.0
        %3679 = vmatprep.subr.mxu0 0.0
        %3680 = vmatpush2.msra.mxu0 0.0
        %3681 = vmatprep.subr.mxu0 0.0
        %3682 = vmatpush2.msra.mxu0 0.0
        %3683 = vmatprep.subr.mxu0 0.0
        %3684 = vmatpush2.msra.mxu0 0.0
        %3685 = vmatprep.subr.mxu0 0.0
        %3686 = vmatpush2.msra.mxu0 0.0
        %3687 = vmatprep.subr.mxu0 0.0
        %3688 = vmatpush2.msra.mxu0 0.0
        %3689 = vmatprep.subr.mxu0 0.0
        %3690 = vmatpush2.msra.mxu0 0.0
        %3691 = vmatprep.subr.mxu0 0.0
        %3692 = vmatpush2.msra.mxu0 0.0
        %3693 = vmatprep.subr.mxu0 0.0
        %3694 = vmatpush2.msra.mxu0 0.0
        %3695 = vmatprep.subr.mxu0 0.0
        %3696 = vmatpush2.msra.mxu0 0.0
        %3697 = vmatprep.subr.mxu0 0.0
        %3698 = vmatpush2.msra.mxu0 0.0
        %3699 = vmatprep.subr.mxu0 0.0
        %3700 = vmatpush2.msra.mxu0 0.0
        %3701 = vmatprep.subr.mxu0 0.0
        %3702 = vmatpush2.msra.mxu0 0.0
        %3703 = vmatprep.subr.mxu0 0.0
        %3704 = vmatpush2.msra.mxu0 0.0
        %3705 = vmatprep.subr.mxu0 0.0
        %3706 = vmatpush2.msra.mxu0 0.0
        %3707 = vmatprep.subr.mxu0 0.0
        %3708 = vmatpush2.msra.mxu0 0.0
        %3709 = vmatprep.mubr.f32.mxu0 0.0
        %3710 = vmatmul.mubr.f32.gmra.mxu0 %v2608
        %v3711 = vpop.f32.mrf.mxu0
        %v3712 = vadd.f32 %v3644, %v3711
        %v3713 = vpop.f32.mrf.mxu0
        %3714 = vdwg.mxu0
        %s3715 = scalar_lea.vmem %s2, 880
        %v3716 = vld [vmem:[%s3715] sm:$0xff]
        %v3717 = vld [vmem:[%s3715 + $0x8] sm:$0xff]
        %v3718 = vld [vmem:[%s3715 + $0x10] sm:$0xff]
        %v3719 = vld [vmem:[%s3715 + $0x18] sm:$0xff]
        %v3720 = vld [vmem:[%s3715 + $0x20] sm:$0x1]
        %v3721 = vlaneseq
        %v3722 = vshrl.u32 %v3721, 7
        %v3723 = vsub.s32 0, %v3722
        %v3724 = vrot.slane %v3720, %v3723
        %3725 = vmatprep.subr.mxu0 0.0
        %3726 = vmatpush1.msra.mxu0 0.0
        %3727 = vmatprep.subr.mxu0 0.0
        %3728 = vmatpush1.msra.mxu0 0.0
        %3729 = vmatprep.subr.mxu0 0.0
        %3730 = vmatpush1.msra.mxu0 0.0
        %3731 = vmatprep.subr.mxu0 0.0
        %3732 = vmatpush1.msra.mxu0 0.0
        %3733 = vmatprep.subr.mxu0 0.0
        %3734 = vmatpush1.msra.mxu0 0.0
        %3735 = vmatprep.subr.mxu0 0.0
        %3736 = vmatpush1.msra.mxu0 0.0
        %3737 = vmatprep.subr.mxu0 0.0
        %3738 = vmatpush1.msra.mxu0 0.0
        %3739 = vmatprep.subr.mxu0 0.0
        %3740 = vmatpush1.msra.mxu0 0.0
        %3741 = vmatprep.subr.mxu0 0.0
        %3742 = vmatpush1.msra.mxu0 0.0
        %3743 = vmatprep.subr.mxu0 0.0
        %3744 = vmatpush1.msra.mxu0 0.0
        %3745 = vmatprep.subr.mxu0 0.0
        %3746 = vmatpush1.msra.mxu0 0.0
        %3747 = vmatprep.subr.mxu0 0.0
        %3748 = vmatpush1.msra.mxu0 0.0
        %3749 = vmatprep.subr.mxu0 0.0
        %3750 = vmatpush1.msra.mxu0 %v3719
        %3751 = vmatprep.subr.mxu0 0.0
        %3752 = vmatpush1.msra.mxu0 %v3718
        %3753 = vmatprep.subr.mxu0 0.0
        %3754 = vmatpush1.msra.mxu0 %v3717
        %3755 = vmatprep.subr.mxu0 0.0
        %3756 = vmatpush1.msra.mxu0 %v3716
        %3757 = vmatprep.subr.mxu0 0.0
        %3758 = vmatpush2.msra.mxu0 0.0
        %3759 = vmatprep.subr.mxu0 0.0
        %3760 = vmatpush2.msra.mxu0 0.0
        %3761 = vmatprep.subr.mxu0 0.0
        %3762 = vmatpush2.msra.mxu0 0.0
        %3763 = vmatprep.subr.mxu0 0.0
        %3764 = vmatpush2.msra.mxu0 0.0
        %3765 = vmatprep.subr.mxu0 0.0
        %3766 = vmatpush2.msra.mxu0 0.0
        %3767 = vmatprep.subr.mxu0 0.0
        %3768 = vmatpush2.msra.mxu0 0.0
        %3769 = vmatprep.subr.mxu0 0.0
        %3770 = vmatpush2.msra.mxu0 0.0
        %3771 = vmatprep.subr.mxu0 0.0
        %3772 = vmatpush2.msra.mxu0 0.0
        %3773 = vmatprep.subr.mxu0 0.0
        %3774 = vmatpush2.msra.mxu0 0.0
        %3775 = vmatprep.subr.mxu0 0.0
        %3776 = vmatpush2.msra.mxu0 0.0
        %3777 = vmatprep.subr.mxu0 0.0
        %3778 = vmatpush2.msra.mxu0 0.0
        %3779 = vmatprep.subr.mxu0 0.0
        %3780 = vmatpush2.msra.mxu0 0.0
        %3781 = vmatprep.subr.mxu0 0.0
        %3782 = vmatpush2.msra.mxu0 0.0
        %3783 = vmatprep.subr.mxu0 0.0
        %3784 = vmatpush2.msra.mxu0 0.0
        %3785 = vmatprep.subr.mxu0 0.0
        %3786 = vmatpush2.msra.mxu0 0.0
        %3787 = vmatprep.subr.mxu0 0.0
        %3788 = vmatpush2.msra.mxu0 0.0
        %3789 = vmatprep.mubr.f32.mxu0 0.0
        %3790 = vmatmul.mubr.f32.gmra.mxu0 %v2608
        %v3791 = vpop.f32.mrf.mxu0
        %v3792 = vadd.f32 %v3724, %v3791
        %v3793 = vpop.f32.mrf.mxu0
        %3794 = vdwg.mxu0
        %v3796 = vsel %vm679, %v3632, 0
        %v3799 = vsel %vm679, %v3712, 0
        %3801 = vmatprep.subr.mxu0 0.0
        %3802 = vmatpush1.xpose.msra.mxu0 0.0
        %3803 = vmatprep.subr.mxu0 0.0
        %3804 = vmatpush1.xpose.msra.mxu0 0.0
        %3805 = vmatprep.subr.mxu0 0.0
        %3806 = vmatpush1.xpose.msra.mxu0 0.0
        %3807 = vmatprep.subr.mxu0 0.0
        %3808 = vmatpush1.xpose.msra.mxu0 0.0
        %3809 = vmatprep.subr.mxu0 0.0
        %3810 = vmatpush1.xpose.msra.mxu0 0.0
        %3811 = vmatprep.subr.mxu0 0.0
        %3812 = vmatpush1.xpose.msra.mxu0 0.0
        %3813 = vmatprep.subr.mxu0 0.0
        %3814 = vmatpush1.xpose.msra.mxu0 0.0
        %3815 = vmatprep.subr.mxu0 0.0
        %3816 = vmatpush1.xpose.msra.mxu0 0.0
        %3817 = vmatprep.subr.mxu0 0.0
        %3818 = vmatpush1.xpose.msra.mxu0 0.0
        %3819 = vmatprep.subr.mxu0 0.0
        %3820 = vmatpush1.xpose.msra.mxu0 0.0
        %3821 = vmatprep.subr.mxu0 0.0
        %3822 = vmatpush1.xpose.msra.mxu0 0.0
        %3823 = vmatprep.subr.mxu0 0.0
        %3824 = vmatpush1.xpose.msra.mxu0 0.0
        %3825 = vmatprep.subr.mxu0 0.0
        %3826 = vmatpush1.xpose.msra.mxu0 0.0
        %3827 = vmatprep.subr.mxu0 0.0
        %3828 = vmatpush1.xpose.msra.mxu0 0.0
        %3829 = vmatprep.subr.mxu0 0.0
        %3830 = vmatpush1.xpose.msra.mxu0 0.0
        %3831 = vmatprep.subr.mxu0 0.0
        %3832 = vmatpush1.xpose.msra.mxu0 %v3799
        %3833 = vmatprep.subr.mxu0 0.0
        %3834 = vmatpush2.xpose.msra.mxu0 0.0
        %3835 = vmatprep.subr.mxu0 0.0
        %3836 = vmatpush2.xpose.msra.mxu0 0.0
        %3837 = vmatprep.subr.mxu0 0.0
        %3838 = vmatpush2.xpose.msra.mxu0 0.0
        %3839 = vmatprep.subr.mxu0 0.0
        %3840 = vmatpush2.xpose.msra.mxu0 0.0
        %3841 = vmatprep.subr.mxu0 0.0
        %3842 = vmatpush2.xpose.msra.mxu0 0.0
        %3843 = vmatprep.subr.mxu0 0.0
        %3844 = vmatpush2.xpose.msra.mxu0 0.0
        %3845 = vmatprep.subr.mxu0 0.0
        %3846 = vmatpush2.xpose.msra.mxu0 0.0
        %3847 = vmatprep.subr.mxu0 0.0
        %3848 = vmatpush2.xpose.msra.mxu0 0.0
        %3849 = vmatprep.subr.mxu0 0.0
        %3850 = vmatpush2.xpose.msra.mxu0 0.0
        %3851 = vmatprep.subr.mxu0 0.0
        %3852 = vmatpush2.xpose.msra.mxu0 0.0
        %3853 = vmatprep.subr.mxu0 0.0
        %3854 = vmatpush2.xpose.msra.mxu0 0.0
        %3855 = vmatprep.subr.mxu0 0.0
        %3856 = vmatpush2.xpose.msra.mxu0 0.0
        %3857 = vmatprep.subr.mxu0 0.0
        %3858 = vmatpush2.xpose.msra.mxu0 0.0
        %3859 = vmatprep.subr.mxu0 0.0
        %3860 = vmatpush2.xpose.msra.mxu0 0.0
        %3861 = vmatprep.subr.mxu0 0.0
        %3862 = vmatpush2.xpose.msra.mxu0 0.0
        %3863 = vmatprep.subr.mxu0 0.0
        %3864 = vmatpush2.xpose.msra.mxu0 0.0
        %3865 = vmatprep.mubr.f32.mxu0 0.0
        %3866 = vmatmul.mubr.f32.gmra.mxu0 %v3796
        %v3867 = vpop.f32.mrf.mxu0
        %v3868 = vadd.f32 0.0, %v3867
        %v3869 = vpop.f32.mrf.mxu0
        %3870 = vdwg.mxu0
        %v3871 = vsel %vm756, %v3868, -inf
        %3872 = vmax.xlane.f32.xlu0 %v3871
        %v3873 = vpop.xlane.xlu0 %3872
        %v3874 = vsub.f32 %v3868, %v3873
        %v3875 = vmul.f32 %v3874, 1.442695
        %v3876 = vpow.pop %v3875
        %v3877 = vsel %vm756, %v3876, 0.0
        %3878 = vadd.xlane.f32.xlu0 %v3877
        %v3879 = vpop.xlane.xlu0 %3878
        %v3880 = vrcp.pop %v3879
        %v3881 = vmul.f32 %v3876, %v3880
        %v3883 = vsel %vm768, %v3881, 0
        %v3886 = vsel %vm772, %v3792, 0
        %3888 = vmatprep.subr.mxu0 0.0
        %3889 = vmatpush1.msra.mxu0 0.0
        %3890 = vmatprep.subr.mxu0 0.0
        %3891 = vmatpush1.msra.mxu0 0.0
        %3892 = vmatprep.subr.mxu0 0.0
        %3893 = vmatpush1.msra.mxu0 0.0
        %3894 = vmatprep.subr.mxu0 0.0
        %3895 = vmatpush1.msra.mxu0 0.0
        %3896 = vmatprep.subr.mxu0 0.0
        %3897 = vmatpush1.msra.mxu0 0.0
        %3898 = vmatprep.subr.mxu0 0.0
        %3899 = vmatpush1.msra.mxu0 0.0
        %3900 = vmatprep.subr.mxu0 0.0
        %3901 = vmatpush1.msra.mxu0 0.0
        %3902 = vmatprep.subr.mxu0 0.0
        %3903 = vmatpush1.msra.mxu0 0.0
        %3904 = vmatprep.subr.mxu0 0.0
        %3905 = vmatpush1.msra.mxu0 0.0
        %3906 = vmatprep.subr.mxu0 0.0
        %3907 = vmatpush1.msra.mxu0 0.0
        %3908 = vmatprep.subr.mxu0 0.0
        %3909 = vmatpush1.msra.mxu0 0.0
        %3910 = vmatprep.subr.mxu0 0.0
        %3911 = vmatpush1.msra.mxu0 0.0
        %3912 = vmatprep.subr.mxu0 0.0
        %3913 = vmatpush1.msra.mxu0 0.0
        %3914 = vmatprep.subr.mxu0 0.0
        %3915 = vmatpush1.msra.mxu0 0.0
        %3916 = vmatprep.subr.mxu0 0.0
        %3917 = vmatpush1.msra.mxu0 0.0
        %3918 = vmatprep.subr.mxu0 0.0
        %3919 = vmatpush1.msra.mxu0 %v3886
        %3920 = vmatprep.subr.mxu0 0.0
        %3921 = vmatpush2.msra.mxu0 0.0
        %3922 = vmatprep.subr.mxu0 0.0
        %3923 = vmatpush2.msra.mxu0 0.0
        %3924 = vmatprep.subr.mxu0 0.0
        %3925 = vmatpush2.msra.mxu0 0.0
        %3926 = vmatprep.subr.mxu0 0.0
        %3927 = vmatpush2.msra.mxu0 0.0
        %3928 = vmatprep.subr.mxu0 0.0
        %3929 = vmatpush2.msra.mxu0 0.0
        %3930 = vmatprep.subr.mxu0 0.0
        %3931 = vmatpush2.msra.mxu0 0.0
        %3932 = vmatprep.subr.mxu0 0.0
        %3933 = vmatpush2.msra.mxu0 0.0
        %3934 = vmatprep.subr.mxu0 0.0
        %3935 = vmatpush2.msra.mxu0 0.0
        %3936 = vmatprep.subr.mxu0 0.0
        %3937 = vmatpush2.msra.mxu0 0.0
        %3938 = vmatprep.subr.mxu0 0.0
        %3939 = vmatpush2.msra.mxu0 0.0
        %3940 = vmatprep.subr.mxu0 0.0
        %3941 = vmatpush2.msra.mxu0 0.0
        %3942 = vmatprep.subr.mxu0 0.0
        %3943 = vmatpush2.msra.mxu0 0.0
        %3944 = vmatprep.subr.mxu0 0.0
        %3945 = vmatpush2.msra.mxu0 0.0
        %3946 = vmatprep.subr.mxu0 0.0
        %3947 = vmatpush2.msra.mxu0 0.0
        %3948 = vmatprep.subr.mxu0 0.0
        %3949 = vmatpush2.msra.mxu0 0.0
        %3950 = vmatprep.subr.mxu0 0.0
        %3951 = vmatpush2.msra.mxu0 0.0
        %3952 = vmatprep.mubr.f32.mxu0 0.0
        %3953 = vmatmul.mubr.f32.gmra.mxu0 %v3883
        %v3954 = vpop.f32.mrf.mxu0
        %v3955 = vadd.f32 0.0, %v3954
        %v3956 = vpop.f32.mrf.mxu0
        %3957 = vdwg.mxu0
        %v3958 = vld [vmem:[%s3003 + $0x10] sm:$0xff]
        %v3960 = vsel %vm679, %v3955, 0
        %3962 = vmatprep.subr.mxu0 0.0
        %3963 = vmatpush1.msra.mxu0 0.0
        %3964 = vmatprep.subr.mxu0 0.0
        %3965 = vmatpush1.msra.mxu0 0.0
        %3966 = vmatprep.subr.mxu0 0.0
        %3967 = vmatpush1.msra.mxu0 0.0
        %3968 = vmatprep.subr.mxu0 0.0
        %3969 = vmatpush1.msra.mxu0 0.0
        %3970 = vmatprep.subr.mxu0 0.0
        %3971 = vmatpush1.msra.mxu0 0.0
        %3972 = vmatprep.subr.mxu0 0.0
        %3973 = vmatpush1.msra.mxu0 0.0
        %3974 = vmatprep.subr.mxu0 0.0
        %3975 = vmatpush1.msra.mxu0 0.0
        %3976 = vmatprep.subr.mxu0 0.0
        %3977 = vmatpush1.msra.mxu0 0.0
        %3978 = vmatprep.subr.mxu0 0.0
        %3979 = vmatpush1.msra.mxu0 0.0
        %3980 = vmatprep.subr.mxu0 0.0
        %3981 = vmatpush1.msra.mxu0 0.0
        %3982 = vmatprep.subr.mxu0 0.0
        %3983 = vmatpush1.msra.mxu0 0.0
        %3984 = vmatprep.subr.mxu0 0.0
        %3985 = vmatpush1.msra.mxu0 0.0
        %3986 = vmatprep.subr.mxu0 0.0
        %3987 = vmatpush1.msra.mxu0 0.0
        %3988 = vmatprep.subr.mxu0 0.0
        %3989 = vmatpush1.msra.mxu0 0.0
        %3990 = vmatprep.subr.mxu0 0.0
        %3991 = vmatpush1.msra.mxu0 0.0
        %3992 = vmatprep.subr.mxu0 0.0
        %3993 = vmatpush1.msra.mxu0 %v3958
        %3994 = vmatprep.subr.mxu0 0.0
        %3995 = vmatpush2.msra.mxu0 0.0
        %3996 = vmatprep.subr.mxu0 0.0
        %3997 = vmatpush2.msra.mxu0 0.0
        %3998 = vmatprep.subr.mxu0 0.0
        %3999 = vmatpush2.msra.mxu0 0.0
        %4000 = vmatprep.subr.mxu0 0.0
        %4001 = vmatpush2.msra.mxu0 0.0
        %4002 = vmatprep.subr.mxu0 0.0
        %4003 = vmatpush2.msra.mxu0 0.0
        %4004 = vmatprep.subr.mxu0 0.0
        %4005 = vmatpush2.msra.mxu0 0.0
        %4006 = vmatprep.subr.mxu0 0.0
        %4007 = vmatpush2.msra.mxu0 0.0
        %4008 = vmatprep.subr.mxu0 0.0
        %4009 = vmatpush2.msra.mxu0 0.0
        %4010 = vmatprep.subr.mxu0 0.0
        %4011 = vmatpush2.msra.mxu0 0.0
        %4012 = vmatprep.subr.mxu0 0.0
        %4013 = vmatpush2.msra.mxu0 0.0
        %4014 = vmatprep.subr.mxu0 0.0
        %4015 = vmatpush2.msra.mxu0 0.0
        %4016 = vmatprep.subr.mxu0 0.0
        %4017 = vmatpush2.msra.mxu0 0.0
        %4018 = vmatprep.subr.mxu0 0.0
        %4019 = vmatpush2.msra.mxu0 0.0
        %4020 = vmatprep.subr.mxu0 0.0
        %4021 = vmatpush2.msra.mxu0 0.0
        %4022 = vmatprep.subr.mxu0 0.0
        %4023 = vmatpush2.msra.mxu0 0.0
        %4024 = vmatprep.subr.mxu0 0.0
        %4025 = vmatpush2.msra.mxu0 0.0
        %4026 = vmatprep.mubr.f32.mxu0 0.0
        %4027 = vmatmul.mubr.f32.gmra.mxu0 %v3960
        %v4028 = vpop.f32.mrf.mxu0
        %v4029 = vadd.f32 0.0, %v4028
        %v4030 = vpop.f32.mrf.mxu0
        %4031 = vdwg.mxu0
        %v4032 = vadd.f32 %v3552, %v4029
        %s4033 = scalar_lea.vmem %s2, 600
        %v4034 = vld [vmem:[%s4033] sm:$0xff]
        %v4035 = vld [vmem:[%s4033 + $0x8] sm:$0xff]
        %v4036 = vld [vmem:[%s4033 + $0x10] sm:$0xff]
        %v4037 = vld [vmem:[%s4033 + $0x18] sm:$0xff]
        %v4038 = vld [vmem:[%s4033 + $0x20] sm:$0x1]
        %v4039 = vlaneseq
        %v4040 = vshrl.u32 %v4039, 7
        %v4041 = vsub.s32 0, %v4040
        %v4042 = vrot.slane %v4038, %v4041
        %4043 = vmatprep.subr.mxu0 0.0
        %4044 = vmatpush1.msra.mxu0 0.0
        %4045 = vmatprep.subr.mxu0 0.0
        %4046 = vmatpush1.msra.mxu0 0.0
        %4047 = vmatprep.subr.mxu0 0.0
        %4048 = vmatpush1.msra.mxu0 0.0
        %4049 = vmatprep.subr.mxu0 0.0
        %4050 = vmatpush1.msra.mxu0 0.0
        %4051 = vmatprep.subr.mxu0 0.0
        %4052 = vmatpush1.msra.mxu0 0.0
        %4053 = vmatprep.subr.mxu0 0.0
        %4054 = vmatpush1.msra.mxu0 0.0
        %4055 = vmatprep.subr.mxu0 0.0
        %4056 = vmatpush1.msra.mxu0 0.0
        %4057 = vmatprep.subr.mxu0 0.0
        %4058 = vmatpush1.msra.mxu0 0.0
        %4059 = vmatprep.subr.mxu0 0.0
        %4060 = vmatpush1.msra.mxu0 0.0
        %4061 = vmatprep.subr.mxu0 0.0
        %4062 = vmatpush1.msra.mxu0 0.0
        %4063 = vmatprep.subr.mxu0 0.0
        %4064 = vmatpush1.msra.mxu0 0.0
        %4065 = vmatprep.subr.mxu0 0.0
        %4066 = vmatpush1.msra.mxu0 0.0
        %4067 = vmatprep.subr.mxu0 0.0
        %4068 = vmatpush1.msra.mxu0 %v4037
        %4069 = vmatprep.subr.mxu0 0.0
        %4070 = vmatpush1.msra.mxu0 %v4036
        %4071 = vmatprep.subr.mxu0 0.0
        %4072 = vmatpush1.msra.mxu0 %v4035
        %4073 = vmatprep.subr.mxu0 0.0
        %4074 = vmatpush1.msra.mxu0 %v4034
        %4075 = vmatprep.subr.mxu0 0.0
        %4076 = vmatpush2.msra.mxu0 0.0
        %4077 = vmatprep.subr.mxu0 0.0
        %4078 = vmatpush2.msra.mxu0 0.0
        %4079 = vmatprep.subr.mxu0 0.0
        %4080 = vmatpush2.msra.mxu0 0.0
        %4081 = vmatprep.subr.mxu0 0.0
        %4082 = vmatpush2.msra.mxu0 0.0
        %4083 = vmatprep.subr.mxu0 0.0
        %4084 = vmatpush2.msra.mxu0 0.0
        %4085 = vmatprep.subr.mxu0 0.0
        %4086 = vmatpush2.msra.mxu0 0.0
        %4087 = vmatprep.subr.mxu0 0.0
        %4088 = vmatpush2.msra.mxu0 0.0
        %4089 = vmatprep.subr.mxu0 0.0
        %4090 = vmatpush2.msra.mxu0 0.0
        %4091 = vmatprep.subr.mxu0 0.0
        %4092 = vmatpush2.msra.mxu0 0.0
        %4093 = vmatprep.subr.mxu0 0.0
        %4094 = vmatpush2.msra.mxu0 0.0
        %4095 = vmatprep.subr.mxu0 0.0
        %4096 = vmatpush2.msra.mxu0 0.0
        %4097 = vmatprep.subr.mxu0 0.0
        %4098 = vmatpush2.msra.mxu0 0.0
        %4099 = vmatprep.subr.mxu0 0.0
        %4100 = vmatpush2.msra.mxu0 0.0
        %4101 = vmatprep.subr.mxu0 0.0
        %4102 = vmatpush2.msra.mxu0 0.0
        %4103 = vmatprep.subr.mxu0 0.0
        %4104 = vmatpush2.msra.mxu0 0.0
        %4105 = vmatprep.subr.mxu0 0.0
        %4106 = vmatpush2.msra.mxu0 0.0
        %4107 = vmatprep.mubr.f32.mxu0 0.0
        %4108 = vmatmul.mubr.f32.gmra.mxu0 %v2608
        %v4109 = vpop.f32.mrf.mxu0
        %v4110 = vadd.f32 %v4042, %v4109
        %v4111 = vpop.f32.mrf.mxu0
        %4112 = vdwg.mxu0
        %s4113 = scalar_lea.vmem %s2, 760
        %v4114 = vld [vmem:[%s4113] sm:$0xff]
        %v4115 = vld [vmem:[%s4113 + $0x8] sm:$0xff]
        %v4116 = vld [vmem:[%s4113 + $0x10] sm:$0xff]
        %v4117 = vld [vmem:[%s4113 + $0x18] sm:$0xff]
        %v4118 = vld [vmem:[%s4113 + $0x20] sm:$0x1]
        %v4119 = vlaneseq
        %v4120 = vshrl.u32 %v4119, 7
        %v4121 = vsub.s32 0, %v4120
        %v4122 = vrot.slane %v4118, %v4121
        %4123 = vmatprep.subr.mxu0 0.0
        %4124 = vmatpush1.msra.mxu0 0.0
        %4125 = vmatprep.subr.mxu0 0.0
        %4126 = vmatpush1.msra.mxu0 0.0
        %4127 = vmatprep.subr.mxu0 0.0
        %4128 = vmatpush1.msra.mxu0 0.0
        %4129 = vmatprep.subr.mxu0 0.0
        %4130 = vmatpush1.msra.mxu0 0.0
        %4131 = vmatprep.subr.mxu0 0.0
        %4132 = vmatpush1.msra.mxu0 0.0
        %4133 = vmatprep.subr.mxu0 0.0
        %4134 = vmatpush1.msra.mxu0 0.0
        %4135 = vmatprep.subr.mxu0 0.0
        %4136 = vmatpush1.msra.mxu0 0.0
        %4137 = vmatprep.subr.mxu0 0.0
        %4138 = vmatpush1.msra.mxu0 0.0
        %4139 = vmatprep.subr.mxu0 0.0
        %4140 = vmatpush1.msra.mxu0 0.0
        %4141 = vmatprep.subr.mxu0 0.0
        %4142 = vmatpush1.msra.mxu0 0.0
        %4143 = vmatprep.subr.mxu0 0.0
        %4144 = vmatpush1.msra.mxu0 0.0
        %4145 = vmatprep.subr.mxu0 0.0
        %4146 = vmatpush1.msra.mxu0 0.0
        %4147 = vmatprep.subr.mxu0 0.0
        %4148 = vmatpush1.msra.mxu0 %v4117
        %4149 = vmatprep.subr.mxu0 0.0
        %4150 = vmatpush1.msra.mxu0 %v4116
        %4151 = vmatprep.subr.mxu0 0.0
        %4152 = vmatpush1.msra.mxu0 %v4115
        %4153 = vmatprep.subr.mxu0 0.0
        %4154 = vmatpush1.msra.mxu0 %v4114
        %4155 = vmatprep.subr.mxu0 0.0
        %4156 = vmatpush2.msra.mxu0 0.0
        %4157 = vmatprep.subr.mxu0 0.0
        %4158 = vmatpush2.msra.mxu0 0.0
        %4159 = vmatprep.subr.mxu0 0.0
        %4160 = vmatpush2.msra.mxu0 0.0
        %4161 = vmatprep.subr.mxu0 0.0
        %4162 = vmatpush2.msra.mxu0 0.0
        %4163 = vmatprep.subr.mxu0 0.0
        %4164 = vmatpush2.msra.mxu0 0.0
        %4165 = vmatprep.subr.mxu0 0.0
        %4166 = vmatpush2.msra.mxu0 0.0
        %4167 = vmatprep.subr.mxu0 0.0
        %4168 = vmatpush2.msra.mxu0 0.0
        %4169 = vmatprep.subr.mxu0 0.0
        %4170 = vmatpush2.msra.mxu0 0.0
        %4171 = vmatprep.subr.mxu0 0.0
        %4172 = vmatpush2.msra.mxu0 0.0
        %4173 = vmatprep.subr.mxu0 0.0
        %4174 = vmatpush2.msra.mxu0 0.0
        %4175 = vmatprep.subr.mxu0 0.0
        %4176 = vmatpush2.msra.mxu0 0.0
        %4177 = vmatprep.subr.mxu0 0.0
        %4178 = vmatpush2.msra.mxu0 0.0
        %4179 = vmatprep.subr.mxu0 0.0
        %4180 = vmatpush2.msra.mxu0 0.0
        %4181 = vmatprep.subr.mxu0 0.0
        %4182 = vmatpush2.msra.mxu0 0.0
        %4183 = vmatprep.subr.mxu0 0.0
        %4184 = vmatpush2.msra.mxu0 0.0
        %4185 = vmatprep.subr.mxu0 0.0
        %4186 = vmatpush2.msra.mxu0 0.0
        %4187 = vmatprep.mubr.f32.mxu0 0.0
        %4188 = vmatmul.mubr.f32.gmra.mxu0 %v2608
        %v4189 = vpop.f32.mrf.mxu0
        %v4190 = vadd.f32 %v4122, %v4189
        %v4191 = vpop.f32.mrf.mxu0
        %4192 = vdwg.mxu0
        %s4193 = scalar_lea.vmem %s2, 920
        %v4194 = vld [vmem:[%s4193] sm:$0xff]
        %v4195 = vld [vmem:[%s4193 + $0x8] sm:$0xff]
        %v4196 = vld [vmem:[%s4193 + $0x10] sm:$0xff]
        %v4197 = vld [vmem:[%s4193 + $0x18] sm:$0xff]
        %v4198 = vld [vmem:[%s4193 + $0x20] sm:$0x1]
        %v4199 = vlaneseq
        %v4200 = vshrl.u32 %v4199, 7
        %v4201 = vsub.s32 0, %v4200
        %v4202 = vrot.slane %v4198, %v4201
        %4203 = vmatprep.subr.mxu0 0.0
        %4204 = vmatpush1.msra.mxu0 0.0
        %4205 = vmatprep.subr.mxu0 0.0
        %4206 = vmatpush1.msra.mxu0 0.0
        %4207 = vmatprep.subr.mxu0 0.0
        %4208 = vmatpush1.msra.mxu0 0.0
        %4209 = vmatprep.subr.mxu0 0.0
        %4210 = vmatpush1.msra.mxu0 0.0
        %4211 = vmatprep.subr.mxu0 0.0
        %4212 = vmatpush1.msra.mxu0 0.0
        %4213 = vmatprep.subr.mxu0 0.0
        %4214 = vmatpush1.msra.mxu0 0.0
        %4215 = vmatprep.subr.mxu0 0.0
        %4216 = vmatpush1.msra.mxu0 0.0
        %4217 = vmatprep.subr.mxu0 0.0
        %4218 = vmatpush1.msra.mxu0 0.0
        %4219 = vmatprep.subr.mxu0 0.0
        %4220 = vmatpush1.msra.mxu0 0.0
        %4221 = vmatprep.subr.mxu0 0.0
        %4222 = vmatpush1.msra.mxu0 0.0
        %4223 = vmatprep.subr.mxu0 0.0
        %4224 = vmatpush1.msra.mxu0 0.0
        %4225 = vmatprep.subr.mxu0 0.0
        %4226 = vmatpush1.msra.mxu0 0.0
        %4227 = vmatprep.subr.mxu0 0.0
        %4228 = vmatpush1.msra.mxu0 %v4197
        %4229 = vmatprep.subr.mxu0 0.0
        %4230 = vmatpush1.msra.mxu0 %v4196
        %4231 = vmatprep.subr.mxu0 0.0
        %4232 = vmatpush1.msra.mxu0 %v4195
        %4233 = vmatprep.subr.mxu0 0.0
        %4234 = vmatpush1.msra.mxu0 %v4194
        %4235 = vmatprep.subr.mxu0 0.0
        %4236 = vmatpush2.msra.mxu0 0.0
        %4237 = vmatprep.subr.mxu0 0.0
        %4238 = vmatpush2.msra.mxu0 0.0
        %4239 = vmatprep.subr.mxu0 0.0
        %4240 = vmatpush2.msra.mxu0 0.0
        %4241 = vmatprep.subr.mxu0 0.0
        %4242 = vmatpush2.msra.mxu0 0.0
        %4243 = vmatprep.subr.mxu0 0.0
        %4244 = vmatpush2.msra.mxu0 0.0
        %4245 = vmatprep.subr.mxu0 0.0
        %4246 = vmatpush2.msra.mxu0 0.0
        %4247 = vmatprep.subr.mxu0 0.0
        %4248 = vmatpush2.msra.mxu0 0.0
        %4249 = vmatprep.subr.mxu0 0.0
        %4250 = vmatpush2.msra.mxu0 0.0
        %4251 = vmatprep.subr.mxu0 0.0
        %4252 = vmatpush2.msra.mxu0 0.0
        %4253 = vmatprep.subr.mxu0 0.0
        %4254 = vmatpush2.msra.mxu0 0.0
        %4255 = vmatprep.subr.mxu0 0.0
        %4256 = vmatpush2.msra.mxu0 0.0
        %4257 = vmatprep.subr.mxu0 0.0
        %4258 = vmatpush2.msra.mxu0 0.0
        %4259 = vmatprep.subr.mxu0 0.0
        %4260 = vmatpush2.msra.mxu0 0.0
        %4261 = vmatprep.subr.mxu0 0.0
        %4262 = vmatpush2.msra.mxu0 0.0
        %4263 = vmatprep.subr.mxu0 0.0
        %4264 = vmatpush2.msra.mxu0 0.0
        %4265 = vmatprep.subr.mxu0 0.0
        %4266 = vmatpush2.msra.mxu0 0.0
        %4267 = vmatprep.mubr.f32.mxu0 0.0
        %4268 = vmatmul.mubr.f32.gmra.mxu0 %v2608
        %v4269 = vpop.f32.mrf.mxu0
        %v4270 = vadd.f32 %v4202, %v4269
        %v4271 = vpop.f32.mrf.mxu0
        %4272 = vdwg.mxu0
        %v4274 = vsel %vm679, %v4110, 0
        %v4277 = vsel %vm679, %v4190, 0
        %4279 = vmatprep.subr.mxu0 0.0
        %4280 = vmatpush1.xpose.msra.mxu0 0.0
        %4281 = vmatprep.subr.mxu0 0.0
        %4282 = vmatpush1.xpose.msra.mxu0 0.0
        %4283 = vmatprep.subr.mxu0 0.0
        %4284 = vmatpush1.xpose.msra.mxu0 0.0
        %4285 = vmatprep.subr.mxu0 0.0
        %4286 = vmatpush1.xpose.msra.mxu0 0.0
        %4287 = vmatprep.subr.mxu0 0.0
        %4288 = vmatpush1.xpose.msra.mxu0 0.0
        %4289 = vmatprep.subr.mxu0 0.0
        %4290 = vmatpush1.xpose.msra.mxu0 0.0
        %4291 = vmatprep.subr.mxu0 0.0
        %4292 = vmatpush1.xpose.msra.mxu0 0.0
        %4293 = vmatprep.subr.mxu0 0.0
        %4294 = vmatpush1.xpose.msra.mxu0 0.0
        %4295 = vmatprep.subr.mxu0 0.0
        %4296 = vmatpush1.xpose.msra.mxu0 0.0
        %4297 = vmatprep.subr.mxu0 0.0
        %4298 = vmatpush1.xpose.msra.mxu0 0.0
        %4299 = vmatprep.subr.mxu0 0.0
        %4300 = vmatpush1.xpose.msra.mxu0 0.0
        %4301 = vmatprep.subr.mxu0 0.0
        %4302 = vmatpush1.xpose.msra.mxu0 0.0
        %4303 = vmatprep.subr.mxu0 0.0
        %4304 = vmatpush1.xpose.msra.mxu0 0.0
        %4305 = vmatprep.subr.mxu0 0.0
        %4306 = vmatpush1.xpose.msra.mxu0 0.0
        %4307 = vmatprep.subr.mxu0 0.0
        %4308 = vmatpush1.xpose.msra.mxu0 0.0
        %4309 = vmatprep.subr.mxu0 0.0
        %4310 = vmatpush1.xpose.msra.mxu0 %v4277
        %4311 = vmatprep.subr.mxu0 0.0
        %4312 = vmatpush2.xpose.msra.mxu0 0.0
        %4313 = vmatprep.subr.mxu0 0.0
        %4314 = vmatpush2.xpose.msra.mxu0 0.0
        %4315 = vmatprep.subr.mxu0 0.0
        %4316 = vmatpush2.xpose.msra.mxu0 0.0
        %4317 = vmatprep.subr.mxu0 0.0
        %4318 = vmatpush2.xpose.msra.mxu0 0.0
        %4319 = vmatprep.subr.mxu0 0.0
        %4320 = vmatpush2.xpose.msra.mxu0 0.0
        %4321 = vmatprep.subr.mxu0 0.0
        %4322 = vmatpush2.xpose.msra.mxu0 0.0
        %4323 = vmatprep.subr.mxu0 0.0
        %4324 = vmatpush2.xpose.msra.mxu0 0.0
        %4325 = vmatprep.subr.mxu0 0.0
        %4326 = vmatpush2.xpose.msra.mxu0 0.0
        %4327 = vmatprep.subr.mxu0 0.0
        %4328 = vmatpush2.xpose.msra.mxu0 0.0
        %4329 = vmatprep.subr.mxu0 0.0
        %4330 = vmatpush2.xpose.msra.mxu0 0.0
        %4331 = vmatprep.subr.mxu0 0.0
        %4332 = vmatpush2.xpose.msra.mxu0 0.0
        %4333 = vmatprep.subr.mxu0 0.0
        %4334 = vmatpush2.xpose.msra.mxu0 0.0
        %4335 = vmatprep.subr.mxu0 0.0
        %4336 = vmatpush2.xpose.msra.mxu0 0.0
        %4337 = vmatprep.subr.mxu0 0.0
        %4338 = vmatpush2.xpose.msra.mxu0 0.0
        %4339 = vmatprep.subr.mxu0 0.0
        %4340 = vmatpush2.xpose.msra.mxu0 0.0
        %4341 = vmatprep.subr.mxu0 0.0
        %4342 = vmatpush2.xpose.msra.mxu0 0.0
        %4343 = vmatprep.mubr.f32.mxu0 0.0
        %4344 = vmatmul.mubr.f32.gmra.mxu0 %v4274
        %v4345 = vpop.f32.mrf.mxu0
        %v4346 = vadd.f32 0.0, %v4345
        %v4347 = vpop.f32.mrf.mxu0
        %4348 = vdwg.mxu0
        %v4349 = vsel %vm756, %v4346, -inf
        %4350 = vmax.xlane.f32.xlu0 %v4349
        %v4351 = vpop.xlane.xlu0 %4350
        %v4352 = vsub.f32 %v4346, %v4351
        %v4353 = vmul.f32 %v4352, 1.442695
        %v4354 = vpow.pop %v4353
        %v4355 = vsel %vm756, %v4354, 0.0
        %4356 = vadd.xlane.f32.xlu0 %v4355
        %v4357 = vpop.xlane.xlu0 %4356
        %v4358 = vrcp.pop %v4357
        %v4359 = vmul.f32 %v4354, %v4358
        %v4361 = vsel %vm768, %v4359, 0
        %v4364 = vsel %vm772, %v4270, 0
        %4366 = vmatprep.subr.mxu0 0.0
        %4367 = vmatpush1.msra.mxu0 0.0
        %4368 = vmatprep.subr.mxu0 0.0
        %4369 = vmatpush1.msra.mxu0 0.0
        %4370 = vmatprep.subr.mxu0 0.0
        %4371 = vmatpush1.msra.mxu0 0.0
        %4372 = vmatprep.subr.mxu0 0.0
        %4373 = vmatpush1.msra.mxu0 0.0
        %4374 = vmatprep.subr.mxu0 0.0
        %4375 = vmatpush1.msra.mxu0 0.0
        %4376 = vmatprep.subr.mxu0 0.0
        %4377 = vmatpush1.msra.mxu0 0.0
        %4378 = vmatprep.subr.mxu0 0.0
        %4379 = vmatpush1.msra.mxu0 0.0
        %4380 = vmatprep.subr.mxu0 0.0
        %4381 = vmatpush1.msra.mxu0 0.0
        %4382 = vmatprep.subr.mxu0 0.0
        %4383 = vmatpush1.msra.mxu0 0.0
        %4384 = vmatprep.subr.mxu0 0.0
        %4385 = vmatpush1.msra.mxu0 0.0
        %4386 = vmatprep.subr.mxu0 0.0
        %4387 = vmatpush1.msra.mxu0 0.0
        %4388 = vmatprep.subr.mxu0 0.0
        %4389 = vmatpush1.msra.mxu0 0.0
        %4390 = vmatprep.subr.mxu0 0.0
        %4391 = vmatpush1.msra.mxu0 0.0
        %4392 = vmatprep.subr.mxu0 0.0
        %4393 = vmatpush1.msra.mxu0 0.0
        %4394 = vmatprep.subr.mxu0 0.0
        %4395 = vmatpush1.msra.mxu0 0.0
        %4396 = vmatprep.subr.mxu0 0.0
        %4397 = vmatpush1.msra.mxu0 %v4364
        %4398 = vmatprep.subr.mxu0 0.0
        %4399 = vmatpush2.msra.mxu0 0.0
        %4400 = vmatprep.subr.mxu0 0.0
        %4401 = vmatpush2.msra.mxu0 0.0
        %4402 = vmatprep.subr.mxu0 0.0
        %4403 = vmatpush2.msra.mxu0 0.0
        %4404 = vmatprep.subr.mxu0 0.0
        %4405 = vmatpush2.msra.mxu0 0.0
        %4406 = vmatprep.subr.mxu0 0.0
        %4407 = vmatpush2.msra.mxu0 0.0
        %4408 = vmatprep.subr.mxu0 0.0
        %4409 = vmatpush2.msra.mxu0 0.0
        %4410 = vmatprep.subr.mxu0 0.0
        %4411 = vmatpush2.msra.mxu0 0.0
        %4412 = vmatprep.subr.mxu0 0.0
        %4413 = vmatpush2.msra.mxu0 0.0
        %4414 = vmatprep.subr.mxu0 0.0
        %4415 = vmatpush2.msra.mxu0 0.0
        %4416 = vmatprep.subr.mxu0 0.0
        %4417 = vmatpush2.msra.mxu0 0.0
        %4418 = vmatprep.subr.mxu0 0.0
        %4419 = vmatpush2.msra.mxu0 0.0
        %4420 = vmatprep.subr.mxu0 0.0
        %4421 = vmatpush2.msra.mxu0 0.0
        %4422 = vmatprep.subr.mxu0 0.0
        %4423 = vmatpush2.msra.mxu0 0.0
        %4424 = vmatprep.subr.mxu0 0.0
        %4425 = vmatpush2.msra.mxu0 0.0
        %4426 = vmatprep.subr.mxu0 0.0
        %4427 = vmatpush2.msra.mxu0 0.0
        %4428 = vmatprep.subr.mxu0 0.0
        %4429 = vmatpush2.msra.mxu0 0.0
        %4430 = vmatprep.mubr.f32.mxu0 0.0
        %4431 = vmatmul.mubr.f32.gmra.mxu0 %v4361
        %v4432 = vpop.f32.mrf.mxu0
        %v4433 = vadd.f32 0.0, %v4432
        %v4434 = vpop.f32.mrf.mxu0
        %4435 = vdwg.mxu0
        %v4436 = vld [vmem:[%s3003 + $0x18] sm:$0xff]
        %v4438 = vsel %vm679, %v4433, 0
        %4440 = vmatprep.subr.mxu0 0.0
        %4441 = vmatpush1.msra.mxu0 0.0
        %4442 = vmatprep.subr.mxu0 0.0
        %4443 = vmatpush1.msra.mxu0 0.0
        %4444 = vmatprep.subr.mxu0 0.0
        %4445 = vmatpush1.msra.mxu0 0.0
        %4446 = vmatprep.subr.mxu0 0.0
        %4447 = vmatpush1.msra.mxu0 0.0
        %4448 = vmatprep.subr.mxu0 0.0
        %4449 = vmatpush1.msra.mxu0 0.0
        %4450 = vmatprep.subr.mxu0 0.0
        %4451 = vmatpush1.msra.mxu0 0.0
        %4452 = vmatprep.subr.mxu0 0.0
        %4453 = vmatpush1.msra.mxu0 0.0
        %4454 = vmatprep.subr.mxu0 0.0
        %4455 = vmatpush1.msra.mxu0 0.0
        %4456 = vmatprep.subr.mxu0 0.0
        %4457 = vmatpush1.msra.mxu0 0.0
        %4458 = vmatprep.subr.mxu0 0.0
        %4459 = vmatpush1.msra.mxu0 0.0
        %4460 = vmatprep.subr.mxu0 0.0
        %4461 = vmatpush1.msra.mxu0 0.0
        %4462 = vmatprep.subr.mxu0 0.0
        %4463 = vmatpush1.msra.mxu0 0.0
        %4464 = vmatprep.subr.mxu0 0.0
        %4465 = vmatpush1.msra.mxu0 0.0
        %4466 = vmatprep.subr.mxu0 0.0
        %4467 = vmatpush1.msra.mxu0 0.0
        %4468 = vmatprep.subr.mxu0 0.0
        %4469 = vmatpush1.msra.mxu0 0.0
        %4470 = vmatprep.subr.mxu0 0.0
        %4471 = vmatpush1.msra.mxu0 %v4436
        %4472 = vmatprep.subr.mxu0 0.0
        %4473 = vmatpush2.msra.mxu0 0.0
        %4474 = vmatprep.subr.mxu0 0.0
        %4475 = vmatpush2.msra.mxu0 0.0
        %4476 = vmatprep.subr.mxu0 0.0
        %4477 = vmatpush2.msra.mxu0 0.0
        %4478 = vmatprep.subr.mxu0 0.0
        %4479 = vmatpush2.msra.mxu0 0.0
        %4480 = vmatprep.subr.mxu0 0.0
        %4481 = vmatpush2.msra.mxu0 0.0
        %4482 = vmatprep.subr.mxu0 0.0
        %4483 = vmatpush2.msra.mxu0 0.0
        %4484 = vmatprep.subr.mxu0 0.0
        %4485 = vmatpush2.msra.mxu0 0.0
        %4486 = vmatprep.subr.mxu0 0.0
        %4487 = vmatpush2.msra.mxu0 0.0
        %4488 = vmatprep.subr.mxu0 0.0
        %4489 = vmatpush2.msra.mxu0 0.0
        %4490 = vmatprep.subr.mxu0 0.0
        %4491 = vmatpush2.msra.mxu0 0.0
        %4492 = vmatprep.subr.mxu0 0.0
        %4493 = vmatpush2.msra.mxu0 0.0
        %4494 = vmatprep.subr.mxu0 0.0
        %4495 = vmatpush2.msra.mxu0 0.0
        %4496 = vmatprep.subr.mxu0 0.0
        %4497 = vmatpush2.msra.mxu0 0.0
        %4498 = vmatprep.subr.mxu0 0.0
        %4499 = vmatpush2.msra.mxu0 0.0
        %4500 = vmatprep.subr.mxu0 0.0
        %4501 = vmatpush2.msra.mxu0 0.0
        %4502 = vmatprep.subr.mxu0 0.0
        %4503 = vmatpush2.msra.mxu0 0.0
        %4504 = vmatprep.mubr.f32.mxu0 0.0
        %4505 = vmatmul.mubr.f32.gmra.mxu0 %v4438
        %v4506 = vpop.f32.mrf.mxu0
        %v4507 = vadd.f32 0.0, %v4506
        %v4508 = vpop.f32.mrf.mxu0
        %4509 = vdwg.mxu0
        %v4510 = vadd.f32 %v4032, %v4507
        %v4511 = vadd.f32 %v2565, %v4510
        %v4512 = vld [vmem:[%s3003 + $0x20] sm:$0x1]
        %v4513 = vlaneseq
        %v4514 = vshrl.u32 %v4513, 7
        %v4515 = vsub.s32 0, %v4514
        %v4516 = vrot.slane %v4512, %v4515
        %v4517 = vadd.f32 %v4511, %v4516
        %s4518 = scalar_lea.vmem %s4, 6
        %v4519 = vld [vmem:[%s4518] sm:$0x1]
        %s4520 = scalar_lea.vmem %s4, 7
        %v4521 = vld [vmem:[%s4520] sm:$0x1]
        %v4522 = vsel %vm407, %v4517, 0.0
        %4523 = vadd.xlane.f32.xlu0 %v4522
        %v4524 = vpop.xlane.xlu0 %4523
        %v4525 = vmul.f32 %v4524, %v411
        %v4526 = vsub.f32 %v4517, %v4525
        %v4527 = vmul.f32 %v4526, %v4526
        %v4528 = vsel %vm407, %v4527, 0.0
        %4529 = vadd.xlane.f32.xlu0 %v4528
        %v4530 = vpop.xlane.xlu0 %4529
        %v4531 = vmul.f32 %v4530, %v411
        %v4532 = vadd.f32 %v4531, 1e-06
        %v4533 = vrsqrt.pop %v4532
        %v4534 = vmul.f32 %v4526, %v4533
        %v4536 = vlaneseq
        %v4537 = vshrl.u32 %v4536, 7
        %v4538 = vsub.s32 0, %v4537
        %v4539 = vrot.slane %v4519, %v4538
        %v4541 = vmul.f32 %v4534, %v4539
        %v4543 = vlaneseq
        %v4544 = vshrl.u32 %v4543, 7
        %v4545 = vsub.s32 0, %v4544
        %v4546 = vrot.slane %v4521, %v4545
        %v4548 = vadd.f32 %v4541, %v4546
        %s4549 = scalar_lea.vmem %s5, 40
        %v4550 = vld [vmem:[%s4549] sm:$0xff]
        %v4551 = vld [vmem:[%s4549 + $0x8] sm:$0xff]
        %v4552 = vld [vmem:[%s4549 + $0x10] sm:$0xff]
        %v4553 = vld [vmem:[%s4549 + $0x18] sm:$0xff]
        %v4554 = vld [vmem:[%s4549 + $0x20] sm:$0x1]
        %v4555 = vlaneseq
        %v4556 = vshrl.u32 %v4555, 7
        %v4557 = vsub.s32 0, %v4556
        %v4558 = vrot.slane %v4554, %v4557
        %v4560 = vsel %vm445, %v4548, 0
        %4562 = vmatprep.subr.mxu0 0.0
        %4563 = vmatpush1.msra.mxu0 0.0
        %4564 = vmatprep.subr.mxu0 0.0
        %4565 = vmatpush1.msra.mxu0 0.0
        %4566 = vmatprep.subr.mxu0 0.0
        %4567 = vmatpush1.msra.mxu0 0.0
        %4568 = vmatprep.subr.mxu0 0.0
        %4569 = vmatpush1.msra.mxu0 0.0
        %4570 = vmatprep.subr.mxu0 0.0
        %4571 = vmatpush1.msra.mxu0 0.0
        %4572 = vmatprep.subr.mxu0 0.0
        %4573 = vmatpush1.msra.mxu0 0.0
        %4574 = vmatprep.subr.mxu0 0.0
        %4575 = vmatpush1.msra.mxu0 0.0
        %4576 = vmatprep.subr.mxu0 0.0
        %4577 = vmatpush1.msra.mxu0 0.0
        %4578 = vmatprep.subr.mxu0 0.0
        %4579 = vmatpush1.msra.mxu0 0.0
        %4580 = vmatprep.subr.mxu0 0.0
        %4581 = vmatpush1.msra.mxu0 0.0
        %4582 = vmatprep.subr.mxu0 0.0
        %4583 = vmatpush1.msra.mxu0 0.0
        %4584 = vmatprep.subr.mxu0 0.0
        %4585 = vmatpush1.msra.mxu0 0.0
        %4586 = vmatprep.subr.mxu0 0.0
        %4587 = vmatpush1.msra.mxu0 %v4553
        %4588 = vmatprep.subr.mxu0 0.0
        %4589 = vmatpush1.msra.mxu0 %v4552
        %4590 = vmatprep.subr.mxu0 0.0
        %4591 = vmatpush1.msra.mxu0 %v4551
        %4592 = vmatprep.subr.mxu0 0.0
        %4593 = vmatpush1.msra.mxu0 %v4550
        %4594 = vmatprep.subr.mxu0 0.0
        %4595 = vmatpush2.msra.mxu0 0.0
        %4596 = vmatprep.subr.mxu0 0.0
        %4597 = vmatpush2.msra.mxu0 0.0
        %4598 = vmatprep.subr.mxu0 0.0
        %4599 = vmatpush2.msra.mxu0 0.0
        %4600 = vmatprep.subr.mxu0 0.0
        %4601 = vmatpush2.msra.mxu0 0.0
        %4602 = vmatprep.subr.mxu0 0.0
        %4603 = vmatpush2.msra.mxu0 0.0
        %4604 = vmatprep.subr.mxu0 0.0
        %4605 = vmatpush2.msra.mxu0 0.0
        %4606 = vmatprep.subr.mxu0 0.0
        %4607 = vmatpush2.msra.mxu0 0.0
        %4608 = vmatprep.subr.mxu0 0.0
        %4609 = vmatpush2.msra.mxu0 0.0
        %4610 = vmatprep.subr.mxu0 0.0
        %4611 = vmatpush2.msra.mxu0 0.0
        %4612 = vmatprep.subr.mxu0 0.0
        %4613 = vmatpush2.msra.mxu0 0.0
        %4614 = vmatprep.subr.mxu0 0.0
        %4615 = vmatpush2.msra.mxu0 0.0
        %4616 = vmatprep.subr.mxu0 0.0
        %4617 = vmatpush2.msra.mxu0 0.0
        %4618 = vmatprep.subr.mxu0 0.0
        %4619 = vmatpush2.msra.mxu0 0.0
        %4620 = vmatprep.subr.mxu0 0.0
        %4621 = vmatpush2.msra.mxu0 0.0
        %4622 = vmatprep.subr.mxu0 0.0
        %4623 = vmatpush2.msra.mxu0 0.0
        %4624 = vmatprep.subr.mxu0 0.0
        %4625 = vmatpush2.msra.mxu0 0.0
        %4626 = vmatprep.mubr.f32.mxu0 0.0
        %4627 = vmatmul.mubr.f32.gmra.mxu0 %v4560
        %v4628 = vpop.f32.mrf.mxu0
        %v4629 = vadd.f32 %v4558, %v4628
        %v4630 = vpop.f32.mrf.mxu0
        %4631 = vdwg.mxu0
        %v4632 = vmul.f32 %v4629, 0.5
        %v4633 = vmul.f32 %v4629, 0.70710677
        %v4634 = verf.f32.pop %v4633
        %v4635 = vadd.f32 %v4634, 1.0
        %v4636 = vmul.f32 %v4632, %v4635
        %s4637 = scalar_lea.vmem %s6, 72
        %v4638 = vld [vmem:[%s4637] sm:$0xff]
        %v4639 = vld [vmem:[%s4637 + $0x8] sm:$0xff]
        %v4640 = vld [vmem:[%s4637 + $0x10] sm:$0xff]
        %v4641 = vld [vmem:[%s4637 + $0x18] sm:$0xff]
        %v4642 = vld [vmem:[%s4637 + $0x20] sm:$0xff]
        %v4643 = vld [vmem:[%s4637 + $0x28] sm:$0xff]
        %v4644 = vld [vmem:[%s4637 + $0x30] sm:$0xff]
        %v4645 = vld [vmem:[%s4637 + $0x38] sm:$0xff]
        %v4647 = vsel %vm330, %v4636, 0
        %4649 = vmatprep.subr.mxu0 0.0
        %4650 = vmatpush1.msra.mxu0 0.0
        %4651 = vmatprep.subr.mxu0 0.0
        %4652 = vmatpush1.msra.mxu0 0.0
        %4653 = vmatprep.subr.mxu0 0.0
        %4654 = vmatpush1.msra.mxu0 0.0
        %4655 = vmatprep.subr.mxu0 0.0
        %4656 = vmatpush1.msra.mxu0 0.0
        %4657 = vmatprep.subr.mxu0 0.0
        %4658 = vmatpush1.msra.mxu0 0.0
        %4659 = vmatprep.subr.mxu0 0.0
        %4660 = vmatpush1.msra.mxu0 0.0
        %4661 = vmatprep.subr.mxu0 0.0
        %4662 = vmatpush1.msra.mxu0 0.0
        %4663 = vmatprep.subr.mxu0 0.0
        %4664 = vmatpush1.msra.mxu0 0.0
        %4665 = vmatprep.subr.mxu0 0.0
        %4666 = vmatpush1.msra.mxu0 %v4645
        %4667 = vmatprep.subr.mxu0 0.0
        %4668 = vmatpush1.msra.mxu0 %v4644
        %4669 = vmatprep.subr.mxu0 0.0
        %4670 = vmatpush1.msra.mxu0 %v4643
        %4671 = vmatprep.subr.mxu0 0.0
        %4672 = vmatpush1.msra.mxu0 %v4642
        %4673 = vmatprep.subr.mxu0 0.0
        %4674 = vmatpush1.msra.mxu0 %v4641
        %4675 = vmatprep.subr.mxu0 0.0
        %4676 = vmatpush1.msra.mxu0 %v4640
        %4677 = vmatprep.subr.mxu0 0.0
        %4678 = vmatpush1.msra.mxu0 %v4639
        %4679 = vmatprep.subr.mxu0 0.0
        %4680 = vmatpush1.msra.mxu0 %v4638
        %4681 = vmatprep.subr.mxu0 0.0
        %4682 = vmatpush2.msra.mxu0 0.0
        %4683 = vmatprep.subr.mxu0 0.0
        %4684 = vmatpush2.msra.mxu0 0.0
        %4685 = vmatprep.subr.mxu0 0.0
        %4686 = vmatpush2.msra.mxu0 0.0
        %4687 = vmatprep.subr.mxu0 0.0
        %4688 = vmatpush2.msra.mxu0 0.0
        %4689 = vmatprep.subr.mxu0 0.0
        %4690 = vmatpush2.msra.mxu0 0.0
        %4691 = vmatprep.subr.mxu0 0.0
        %4692 = vmatpush2.msra.mxu0 0.0
        %4693 = vmatprep.subr.mxu0 0.0
        %4694 = vmatpush2.msra.mxu0 0.0
        %4695 = vmatprep.subr.mxu0 0.0
        %4696 = vmatpush2.msra.mxu0 0.0
        %4697 = vmatprep.subr.mxu0 0.0
        %4698 = vmatpush2.msra.mxu0 0.0
        %4699 = vmatprep.subr.mxu0 0.0
        %4700 = vmatpush2.msra.mxu0 0.0
        %4701 = vmatprep.subr.mxu0 0.0
        %4702 = vmatpush2.msra.mxu0 0.0
        %4703 = vmatprep.subr.mxu0 0.0
        %4704 = vmatpush2.msra.mxu0 0.0
        %4705 = vmatprep.subr.mxu0 0.0
        %4706 = vmatpush2.msra.mxu0 0.0
        %4707 = vmatprep.subr.mxu0 0.0
        %4708 = vmatpush2.msra.mxu0 0.0
        %4709 = vmatprep.subr.mxu0 0.0
        %4710 = vmatpush2.msra.mxu0 0.0
        %4711 = vmatprep.subr.mxu0 0.0
        %4712 = vmatpush2.msra.mxu0 0.0
        %4713 = vmatprep.mubr.f32.mxu0 0.0
        %4714 = vmatmul.mubr.f32.gmra.mxu0 %v4647
        %v4715 = vpop.f32.mrf.mxu0
        %v4716 = vadd.f32 0.0, %v4715
        %v4717 = vpop.f32.mrf.mxu0
        %4718 = vdwg.mxu0
        %v4719 = vadd.f32 %v4517, %v4716
        %v4720 = vld [vmem:[%s4637 + $0x40] sm:$0x1]
        %v4721 = vlaneseq
        %v4722 = vshrl.u32 %v4721, 7
        %v4723 = vsub.s32 0, %v4722
        %v4724 = vrot.slane %v4720, %v4723
        %v4725 = vadd.f32 %v4719, %v4724
        %s4726 = scalar_lea.vmem %s4, 8
        %v4727 = vld [vmem:[%s4726] sm:$0x1]
        %s4728 = scalar_lea.vmem %s4, 9
        %v4729 = vld [vmem:[%s4728] sm:$0x1]
        %vm4730 = vcmask 253952
        %v4731 = vsel %vm4730, %v4725, 0.0
        %4732 = vadd.xlane.f32.xlu0 %v4731
        %v4733 = vpop.xlane.xlu0 %4732
        %v4734 = vmul.f32 %v4733, %v411
        %v4735 = vsub.f32 %v4725, %v4734
        %v4736 = vmul.f32 %v4735, %v4735
        %v4737 = vsel %vm4730, %v4736, 0.0
        %4738 = vadd.xlane.f32.xlu0 %v4737
        %v4739 = vpop.xlane.xlu0 %4738
        %v4740 = vmul.f32 %v4739, %v411
        %v4741 = vadd.f32 %v4740, 1e-06
        %v4742 = vrsqrt.pop %v4741
        %v4743 = vmul.f32 %v4735, %v4742
        %v4744 = vmul.f32 %v4743, %v4727
        %v4745 = vadd.f32 %v4744, %v4729
        %v4746 = vld [vmem:[%s7] sm:$0xff]
        %v4747 = vld [vmem:[%s7 + $0x8] sm:$0xff]
        %v4748 = vld [vmem:[%s7 + $0x10] sm:$0xff]
        %v4749 = vld [vmem:[%s7 + $0x18] sm:$0xff]
        %v4750 = vld [vmem:[%s7 + $0x20] sm:$0x1]
        %v4752 = vsel %vm445, %v4745, 0
        %4754 = vmatprep.subr.mxu0 0.0
        %4755 = vmatpush1.msra.mxu0 0.0
        %4756 = vmatprep.subr.mxu0 0.0
        %4757 = vmatpush1.msra.mxu0 0.0
        %4758 = vmatprep.subr.mxu0 0.0
        %4759 = vmatpush1.msra.mxu0 0.0
        %4760 = vmatprep.subr.mxu0 0.0
        %4761 = vmatpush1.msra.mxu0 0.0
        %4762 = vmatprep.subr.mxu0 0.0
        %4763 = vmatpush1.msra.mxu0 0.0
        %4764 = vmatprep.subr.mxu0 0.0
        %4765 = vmatpush1.msra.mxu0 0.0
        %4766 = vmatprep.subr.mxu0 0.0
        %4767 = vmatpush1.msra.mxu0 0.0
        %4768 = vmatprep.subr.mxu0 0.0
        %4769 = vmatpush1.msra.mxu0 0.0
        %4770 = vmatprep.subr.mxu0 0.0
        %4771 = vmatpush1.msra.mxu0 0.0
        %4772 = vmatprep.subr.mxu0 0.0
        %4773 = vmatpush1.msra.mxu0 0.0
        %4774 = vmatprep.subr.mxu0 0.0
        %4775 = vmatpush1.msra.mxu0 0.0
        %4776 = vmatprep.subr.mxu0 0.0
        %4777 = vmatpush1.msra.mxu0 0.0
        %4778 = vmatprep.subr.mxu0 0.0
        %4779 = vmatpush1.msra.mxu0 %v4749
        %4780 = vmatprep.subr.mxu0 0.0
        %4781 = vmatpush1.msra.mxu0 %v4748
        %4782 = vmatprep.subr.mxu0 0.0
        %4783 = vmatpush1.msra.mxu0 %v4747
        %4784 = vmatprep.subr.mxu0 0.0
        %4785 = vmatpush1.msra.mxu0 %v4746
        %4786 = vmatprep.subr.mxu0 0.0
        %4787 = vmatpush2.msra.mxu0 0.0
        %4788 = vmatprep.subr.mxu0 0.0
        %4789 = vmatpush2.msra.mxu0 0.0
        %4790 = vmatprep.subr.mxu0 0.0
        %4791 = vmatpush2.msra.mxu0 0.0
        %4792 = vmatprep.subr.mxu0 0.0
        %4793 = vmatpush2.msra.mxu0 0.0
        %4794 = vmatprep.subr.mxu0 0.0
        %4795 = vmatpush2.msra.mxu0 0.0
        %4796 = vmatprep.subr.mxu0 0.0
        %4797 = vmatpush2.msra.mxu0 0.0
        %4798 = vmatprep.subr.mxu0 0.0
        %4799 = vmatpush2.msra.mxu0 0.0
        %4800 = vmatprep.subr.mxu0 0.0
        %4801 = vmatpush2.msra.mxu0 0.0
        %4802 = vmatprep.subr.mxu0 0.0
        %4803 = vmatpush2.msra.mxu0 0.0
        %4804 = vmatprep.subr.mxu0 0.0
        %4805 = vmatpush2.msra.mxu0 0.0
        %4806 = vmatprep.subr.mxu0 0.0
        %4807 = vmatpush2.msra.mxu0 0.0
        %4808 = vmatprep.subr.mxu0 0.0
        %4809 = vmatpush2.msra.mxu0 0.0
        %4810 = vmatprep.subr.mxu0 0.0
        %4811 = vmatpush2.msra.mxu0 0.0
        %4812 = vmatprep.subr.mxu0 0.0
        %4813 = vmatpush2.msra.mxu0 0.0
        %4814 = vmatprep.subr.mxu0 0.0
        %4815 = vmatpush2.msra.mxu0 0.0
        %4816 = vmatprep.subr.mxu0 0.0
        %4817 = vmatpush2.msra.mxu0 0.0
        %4818 = vmatprep.mubr.f32.mxu0 0.0
        %4819 = vmatmul.mubr.f32.gmra.mxu0 %v4752
        %v4820 = vpop.f32.mrf.mxu0
        %v4821 = vadd.f32 %v4750, %v4820
        %v4822 = vpop.f32.mrf.mxu0
        %4823 = vdwg.mxu0
        %vm4824 = vcmask 24576
        %4825 = vst.msk [vmem:[%s297] sm:$0x1] %vm4824, %v4821
        %s4826 = sand.u32 %s203, 1
        %s4827 = scalar_lea.sflag [#allocation3], %s4826
        %s4828 = sand.u32 %s203, 1
        %s4829 = scalar_lea.vmem [#allocation2], %s4828
        // Predicated region
        $region53: #{tiny_vit_forward.1} parent=51 // pred_check
          %p4830 = pneg %p213
        $region54: #{tiny_vit_forward.1} parent=51 // pred_check_branch
          %4832 = sbr.rel (%p4830) target = $region56
        $region55: #{tiny_vit_forward.1} parent=51 // pred_region
          %s4834 = ssub.s32 16, 16
          %4835 = vsyncadd %s4827, %s4834
          %s4836 = smul.addr %s22, 16
          %s4837 = scalar_lea.hbm %s8, %s4836
          %s4839 = sshll.u32 %s4829, 4
          %s4840 = int_to_ptr.vmem [resolvable:$true] %s4839
          %4842 = dma.vmem_to_hbm [thread:$0]  %s4840, 16, %s4837, %s4827
        $region56: #{tiny_vit_forward.1} parent=51 // pred_fallthru
          _
      $region52: #{tiny_vit_forward.1} parent=5 // pred_fallthru
        _
      %p4843 = scmp.le.s32.totalorder 2, %s17
      // Predicated region
      $region57: #{tiny_vit_forward.1} parent=5 // pred_check
        %p4844 = pneg %p4843
      $region58: #{tiny_vit_forward.1} parent=5 // pred_check_branch
        %4846 = sbr.rel (%p4844) target = $region60
      $region59: #{tiny_vit_forward.1} parent=5 // pred_region
        %s4847 = ssub.s32 %s17, 2
        // Predicated region
        $region61: #{tiny_vit_forward.1} parent=59 // pred_check
          %p4848 = pneg %p219
        $region62: #{tiny_vit_forward.1} parent=59 // pred_check_branch
          %4850 = sbr.rel (%p4848) target = $region64
        $region63: #{tiny_vit_forward.1} parent=59 // pred_region
          %s4851 = sand.u32 %s204, 1
          %s4852 = scalar_lea.sflag [#allocation3], %s4851
          %s4853 = sand.u32 %s204, 1
          %s4854 = scalar_lea.vmem [#allocation2], %s4853
          %4855 = dma.done %s4852, 16
        $region64: #{tiny_vit_forward.1} parent=59 // pred_fallthru
          _
      $region60: #{tiny_vit_forward.1} parent=5 // pred_fallthru
        _
    $region6: #{tiny_vit_forward.1} parent=1 // loop_footer
      %s21 = sadd.s32 1, %s17
    $region7: #{tiny_vit_forward.1} parent=1 // loop_footer_branch
      %16 = sbr.rel target = $region3
    $region8: #{tiny_vit_forward.1} parent=1 // loop_exit
      _
    %4856 = vsyncpa [#allocation3], 1
    %s4857 = scalar_lea.sflag [#allocation3], 1
    %4858 = vsyncpa %s4857, 1

</llo_original>
